<compile_context>
chip_gen: v5e
topology: v5e:2x2
jax: 0.10.0
libtpu: 0.0.40
codegen_flags: <defaults>
</compile_context>

<pallas_src>
import jax
import jax.numpy as jnp
from jax import lax
from jax.experimental import pallas as pl
from jax.experimental.pallas import tpu as pltpu

# ----------------------------- model config ---------------------------------
IN_CHANNELS = 4
HIDDEN = 32
OUT_CHANNELS = 8
NUM_LAYERS = 2
HEADS = 4
HEAD_DIM = HIDDEN // HEADS
PE_DIM = 24          # 8 (LapPE) + 16 (RWPE)
BN_EPS = 1e-5

NODES_PER_GRAPH = 16
NUM_GRAPHS = 2
N = NODES_PER_GRAPH * NUM_GRAPHS

# fixed flattening order of the per-layer parameters passed to the fused kernel
LAYER_PARAM_ORDER = (
    "gin_w1", "gin_b1", "gin_w2", "gin_b2",
    "wq_h", "bq_h", "wk_h", "bk_h", "wv_h", "bv_h", "wo_h", "bo",
    "mlp_w1", "mlp_b1", "mlp_w2", "mlp_b2",
    "bn1_s", "bn1_b", "bn2_s", "bn2_b", "bn3_s", "bn3_b",
)


# ----------------------------- fused Pallas kernel ---------------------------
def fused_graph_gps_kernel(*refs):
    """Entire GraphGPS forward in one VMEM-resident invocation.

    refs = (xin, A, P, in_w, in_b,
            <22 per-layer params> * NUM_LAYERS,
            ro_w1, ro_b1, ro_w2, ro_b2, cls_w, cls_b,
            out)
    """
    out_ref = refs[-1]
    it = iter(refs[:-1])
    xin_ref = next(it)
    a_ref = next(it)
    p_ref = next(it)
    in_w_ref = next(it)
    in_b_ref = next(it)
    layer_refs = [{k: next(it) for k in LAYER_PARAM_ORDER} for _ in range(NUM_LAYERS)]
    ro_w1_ref = next(it); ro_b1_ref = next(it)
    ro_w2_ref = next(it); ro_b2_ref = next(it)
    cls_w_ref = next(it); cls_b_ref = next(it)

    f32 = jnp.float32
    A = a_ref[...]                                                  # [N, N]

    # -------- input projection: Linear(in + pe_dim, hidden) ------------------
    x = jnp.dot(xin_ref[...], in_w_ref[...], preferred_element_type=f32) + in_b_ref[...]

    # -------- GPSConv layers (unrolled) ---------------------------------------
    for lp in layer_refs:
        # ---- local GINConv branch (eps = 0) ----
        agg = jnp.dot(A, x, preferred_element_type=f32)             # sum_{j in N(i)} x_j
        m = x + agg                                                  # (1 + eps) * x + aggr
        h = jnp.maximum(
            jnp.dot(m, lp["gin_w1"][...], preferred_element_type=f32)
            + lp["gin_b1"][...], 0.0)
        h_local = (jnp.dot(h, lp["gin_w2"][...], preferred_element_type=f32)
                   + lp["gin_b2"][...])
        h_local = h_local + x                                        # residual
        h_local = h_local * lp["bn1_s"][...] + lp["bn1_b"][...]      # BatchNorm1d (eval, folded)

        # ---- global multi-head self-attention (per-head pre-split weights) ----
        # 1/sqrt(HEAD_DIM) is already folded into wq_h / bq_h.
        attn_acc = None
        for hd in range(HEADS):
            qh = jnp.dot(x, lp["wq_h"][hd], preferred_element_type=f32) + lp["bq_h"][hd]
            kh = jnp.dot(x, lp["wk_h"][hd], preferred_element_type=f32) + lp["bk_h"][hd]
            vh = jnp.dot(x, lp["wv_h"][hd], preferred_element_type=f32) + lp["bv_h"][hd]
            # scores[n, m] = <q_n, k_m>
            s = lax.dot_general(qh, kh, (((1,), (1,)), ((), ())),
                                preferred_element_type=f32)          # [N, N]
            s = s - jnp.max(s, axis=-1, keepdims=True)
            p = jnp.exp(s)
            p = p * pl.reciprocal(jnp.sum(p, axis=-1, keepdims=True), approx=True)
            ah = jnp.dot(p, vh, preferred_element_type=f32)          # [N, HEAD_DIM]
            contrib = jnp.dot(ah, lp["wo_h"][hd], preferred_element_type=f32)  # [N, H]
            attn_acc = contrib if attn_acc is None else attn_acc + contrib
        h_attn = attn_acc + lp["bo"][...] + x                        # out-proj bias + residual
        h_attn = h_attn * lp["bn2_s"][...] + lp["bn2_b"][...]        # BatchNorm1d (eval, folded)

        # ---- combine + FFN ----
        out = h_local + h_attn
        f = jnp.maximum(
            jnp.dot(out, lp["mlp_w1"][...], preferred_element_type=f32)
            + lp["mlp_b1"][...], 0.0)
        f = jnp.dot(f, lp["mlp_w2"][...], preferred_element_type=f32) + lp["mlp_b2"][...]
        out = out + f
        out = out * lp["bn3_s"][...] + lp["bn3_b"][...]              # BatchNorm1d (eval, folded)

        x = jnp.maximum(out, 0.0)                                    # outer F.relu

    # -------- global_add_pool + readout MLP + classifier ----------------------
    pooled = jnp.dot(p_ref[...], x, preferred_element_type=f32)      # [B, H]
    h = jnp.maximum(
        jnp.dot(pooled, ro_w1_ref[...], preferred_element_type=f32) + ro_b1_ref[...], 0.0)
    # TODO(synk): Dropout(0.5) is identity in eval mode (no training-mode RNG here).
    h = jnp.maximum(
        jnp.dot(h, ro_w2_ref[...], preferred_element_type=f32) + ro_b2_ref[...], 0.0)
    out_ref[...] = (
        jnp.dot(h, cls_w_ref[...], preferred_element_type=f32) + cls_b_ref[...])


# ----------------------------- parameter init --------------------------------
def init_params(key):
    ks = iter(jax.random.split(key, 96))

    def dense(shape, scale=0.1):
        return scale * jax.random.normal(next(ks), shape, jnp.float32)

    def bn_fold():
        gamma = 1.0 + 0.1 * jax.random.normal(next(ks), (HIDDEN,), jnp.float32)
        beta = 0.1 * jax.random.normal(next(ks), (HIDDEN,), jnp.float32)
        running_mean = jnp.zeros((HIDDEN,), jnp.float32)
        running_var = jnp.ones((HIDDEN,), jnp.float32)
        scale = gamma / jnp.sqrt(running_var + BN_EPS)
        shift = beta - running_mean * scale
        return scale[None, :], shift[None, :]                       # [1, H]

    params = {
        "in_w": dense((IN_CHANNELS + PE_DIM, HIDDEN)),
        "in_b": dense((1, HIDDEN)),
        "layers": [],
    }

    attn_scale = 1.0 / (HEAD_DIM ** 0.5)

    def split_heads_in(w, b, s=1.0):
        # w: [H, H] -> [HEADS, H, HEAD_DIM], b: [H] -> [HEADS, 1, HEAD_DIM]
        w_h = (w * s).reshape(HIDDEN, HEADS, HEAD_DIM).transpose(1, 0, 2)
        b_h = (b * s).reshape(HEADS, 1, HEAD_DIM)
        return w_h, b_h

    for _ in range(NUM_LAYERS):
        wq, wk, wv, wo = (dense((HIDDEN, HIDDEN)) for _ in range(4))
        bq, bk, bv, bo = (dense((HIDDEN,)) for _ in range(4))
        wq_h, bq_h = split_heads_in(wq, bq, attn_scale)              # scale folded into q-proj
        wk_h, bk_h = split_heads_in(wk, bk)
        wv_h, bv_h = split_heads_in(wv, bv)
        wo_h = wo.reshape(HEADS, HEAD_DIM, HIDDEN)                   # [HEADS, HEAD_DIM, H]

        bn1_s, bn1_b = bn_fold()
        bn2_s, bn2_b = bn_fold()
        bn3_s, bn3_b = bn_fold()

        params["layers"].append({
            "gin_w1": dense((HIDDEN, HIDDEN)), "gin_b1": dense((1, HIDDEN)),
            "gin_w2": dense((HIDDEN, HIDDEN)), "gin_b2": dense((1, HIDDEN)),
            "wq_h": wq_h, "bq_h": bq_h,
            "wk_h": wk_h, "bk_h": bk_h,
            "wv_h": wv_h, "bv_h": bv_h,
            "wo_h": wo_h, "bo": bo[None, :],
            "mlp_w1": dense((HIDDEN, 2 * HIDDEN)), "mlp_b1": dense((1, 2 * HIDDEN)),
            "mlp_w2": dense((2 * HIDDEN, HIDDEN)), "mlp_b2": dense((1, HIDDEN)),
            "bn1_s": bn1_s, "bn1_b": bn1_b,
            "bn2_s": bn2_s, "bn2_b": bn2_b,
            "bn3_s": bn3_s, "bn3_b": bn3_b,
        })

    # readout: Linear(H,H) ReLU Dropout Linear(H,H) ReLU ; classifier Linear(H, out)
    params["ro_w1"] = dense((HIDDEN, HIDDEN))
    params["ro_b1"] = dense((1, HIDDEN))
    params["ro_w2"] = dense((HIDDEN, HIDDEN))
    params["ro_b2"] = dense((1, HIDDEN))
    params["cls_w"] = dense((HIDDEN, OUT_CHANNELS))
    params["cls_b"] = dense((1, OUT_CHANNELS))
    return params


# ----------------------------- forward (glue) --------------------------------
def graph_gps_forward(params, x, edge_index, batch, lap_pe, rw_pe):
    n = x.shape[0]
    # dense adjacency: A[i, j] = #edges j -> i  (PyG flow source_to_target)
    src, dst = edge_index[0], edge_index[1]
    A = jnp.zeros((n, n), jnp.float32).at[dst, src].add(1.0)
    # pooling matrix for global_add_pool
    P = (jnp.arange(NUM_GRAPHS)[:, None] == batch[None, :]).astype(jnp.float32)

    pe = jnp.concatenate([lap_pe, rw_pe], axis=-1)                   # [N, 24]
    xin = jnp.concatenate([x, pe], axis=-1)                          # [N, in + pe_dim]

    args = [xin, A, P, params["in_w"], params["in_b"]]
    for lp in params["layers"]:
        args.extend(lp[k] for k in LAYER_PARAM_ORDER)
    args.extend([params["ro_w1"], params["ro_b1"],
                 params["ro_w2"], params["ro_b2"],
                 params["cls_w"], params["cls_b"]])

    vmem = pl.BlockSpec(memory_space=pltpu.MemorySpace.VMEM)
    return pl.pallas_call(
        fused_graph_gps_kernel,
        out_shape=jax.ShapeDtypeStruct((NUM_GRAPHS, OUT_CHANNELS), jnp.float32),
        in_specs=[vmem] * len(args),
        out_specs=vmem,
    )(*args)


# ----------------------------- main -------------------------------------------
if __name__ == "__main__":
    key = jax.random.PRNGKey(0)
    k_param, k_x, k_lap, k_rw = jax.random.split(key, 4)

    params = init_params(k_param)

    x = jax.random.normal(k_x, (N, IN_CHANNELS), jnp.float32)
    lap_pe = jax.random.normal(k_lap, (N, 8), jnp.float32)
    rw_pe = jax.random.normal(k_rw, (N, 16), jnp.float32)

    # two graphs, each a bidirectional ring of 16 nodes
    edges_src, edges_dst = [], []
    for g in range(NUM_GRAPHS):
        base = g * NODES_PER_GRAPH
        ring = jnp.arange(NODES_PER_GRAPH)
        s = base + ring
        d = base + (ring + 1) % NODES_PER_GRAPH
        edges_src.append(s); edges_dst.append(d)   # forward edges
        edges_src.append(d); edges_dst.append(s)   # reverse edges
    edge_index = jnp.stack([jnp.concatenate(edges_src),
                            jnp.concatenate(edges_dst)], axis=0).astype(jnp.int32)
    batch = jnp.repeat(jnp.arange(NUM_GRAPHS, dtype=jnp.int32), NODES_PER_GRAPH)

    fwd = jax.jit(graph_gps_forward)
    logits = fwd(params, x, edge_index, batch, lap_pe, rw_pe)
    jax.block_until_ready(logits)

    assert logits.shape == (NUM_GRAPHS, OUT_CHANNELS)
    assert bool(jnp.all(jnp.isfinite(logits)))
    print("KERNEL_OK")
</pallas_src>

<mosaic_0001>
module attributes {stable_mosaic.version = 11 : i64} {
  func.func @fused_graph_gps_kernel(%arg0: memref<32x28xf32, #tpu.memory_space<vmem>>, %arg1: memref<32x32xf32, #tpu.memory_space<vmem>>, %arg2: memref<2x32xf32, #tpu.memory_space<vmem>>, %arg3: memref<28x32xf32, #tpu.memory_space<vmem>>, %arg4: memref<1x32xf32, #tpu.memory_space<vmem>>, %arg5: memref<32x32xf32, #tpu.memory_space<vmem>>, %arg6: memref<1x32xf32, #tpu.memory_space<vmem>>, %arg7: memref<32x32xf32, #tpu.memory_space<vmem>>, %arg8: memref<1x32xf32, #tpu.memory_space<vmem>>, %arg9: memref<4x32x8xf32, #tpu.memory_space<vmem>>, %arg10: memref<4x1x8xf32, #tpu.memory_space<vmem>>, %arg11: memref<4x32x8xf32, #tpu.memory_space<vmem>>, %arg12: memref<4x1x8xf32, #tpu.memory_space<vmem>>, %arg13: memref<4x32x8xf32, #tpu.memory_space<vmem>>, %arg14: memref<4x1x8xf32, #tpu.memory_space<vmem>>, %arg15: memref<4x8x32xf32, #tpu.memory_space<vmem>>, %arg16: memref<1x32xf32, #tpu.memory_space<vmem>>, %arg17: memref<32x64xf32, #tpu.memory_space<vmem>>, %arg18: memref<1x64xf32, #tpu.memory_space<vmem>>, %arg19: memref<64x32xf32, #tpu.memory_space<vmem>>, %arg20: memref<1x32xf32, #tpu.memory_space<vmem>>, %arg21: memref<1x32xf32, #tpu.memory_space<vmem>>, %arg22: memref<1x32xf32, #tpu.memory_space<vmem>>, %arg23: memref<1x32xf32, #tpu.memory_space<vmem>>, %arg24: memref<1x32xf32, #tpu.memory_space<vmem>>, %arg25: memref<1x32xf32, #tpu.memory_space<vmem>>, %arg26: memref<1x32xf32, #tpu.memory_space<vmem>>, %arg27: memref<32x32xf32, #tpu.memory_space<vmem>>, %arg28: memref<1x32xf32, #tpu.memory_space<vmem>>, %arg29: memref<32x32xf32, #tpu.memory_space<vmem>>, %arg30: memref<1x32xf32, #tpu.memory_space<vmem>>, %arg31: memref<4x32x8xf32, #tpu.memory_space<vmem>>, %arg32: memref<4x1x8xf32, #tpu.memory_space<vmem>>, %arg33: memref<4x32x8xf32, #tpu.memory_space<vmem>>, %arg34: memref<4x1x8xf32, #tpu.memory_space<vmem>>, %arg35: memref<4x32x8xf32, #tpu.memory_space<vmem>>, %arg36: memref<4x1x8xf32, #tpu.memory_space<vmem>>, %arg37: memref<4x8x32xf32, #tpu.memory_space<vmem>>, %arg38: memref<1x32xf32, #tpu.memory_space<vmem>>, %arg39: memref<32x64xf32, #tpu.memory_space<vmem>>, %arg40: memref<1x64xf32, #tpu.memory_space<vmem>>, %arg41: memref<64x32xf32, #tpu.memory_space<vmem>>, %arg42: memref<1x32xf32, #tpu.memory_space<vmem>>, %arg43: memref<1x32xf32, #tpu.memory_space<vmem>>, %arg44: memref<1x32xf32, #tpu.memory_space<vmem>>, %arg45: memref<1x32xf32, #tpu.memory_space<vmem>>, %arg46: memref<1x32xf32, #tpu.memory_space<vmem>>, %arg47: memref<1x32xf32, #tpu.memory_space<vmem>>, %arg48: memref<1x32xf32, #tpu.memory_space<vmem>>, %arg49: memref<32x32xf32, #tpu.memory_space<vmem>>, %arg50: memref<1x32xf32, #tpu.memory_space<vmem>>, %arg51: memref<32x32xf32, #tpu.memory_space<vmem>>, %arg52: memref<1x32xf32, #tpu.memory_space<vmem>>, %arg53: memref<32x8xf32, #tpu.memory_space<vmem>>, %arg54: memref<1x8xf32, #tpu.memory_space<vmem>>, %arg55: memref<2x8xf32, #tpu.memory_space<vmem>>) attributes {dimension_semantics = [], scalar_prefetch = 0 : i64, scratch_operands = 0 : i64, tpu.core_type = #tpu.core_type<tc>} {
    %c0 = arith.constant 0 : index
    %c0_0 = arith.constant 0 : index
    %0 = vector.load %arg1[%c0, %c0_0] : memref<32x32xf32, #tpu.memory_space<vmem>>, vector<32x32xf32>
    %c0_1 = arith.constant 0 : index
    %c0_2 = arith.constant 0 : index
    %1 = vector.load %arg0[%c0_1, %c0_2] : memref<32x28xf32, #tpu.memory_space<vmem>>, vector<32x28xf32>
    %c0_3 = arith.constant 0 : index
    %c0_4 = arith.constant 0 : index
    %2 = vector.load %arg3[%c0_3, %c0_4] : memref<28x32xf32, #tpu.memory_space<vmem>>, vector<28x32xf32>
    %cst = arith.constant dense<0.000000e+00> : vector<32x32xf32>
    %3 = tpu.matmul %1, %2, %cst {dimension_numbers = #tpu.dot_dimension_numbers<[1], [0], [0], [1], [0, 0, 1, 1], [], []>} : vector<32x28xf32>, vector<28x32xf32>, vector<32x32xf32> -> vector<32x32xf32>
    %c0_5 = arith.constant 0 : index
    %c0_6 = arith.constant 0 : index
    %4 = vector.load %arg4[%c0_5, %c0_6] : memref<1x32xf32, #tpu.memory_space<vmem>>, vector<1x32xf32>
    %5 = vector.broadcast %4 : vector<1x32xf32> to vector<32x32xf32>
    %6 = arith.addf %3, %5 : vector<32x32xf32>
    %cst_7 = arith.constant dense<0.000000e+00> : vector<32x32xf32>
    %7 = tpu.matmul %0, %6, %cst_7 {dimension_numbers = #tpu.dot_dimension_numbers<[1], [0], [0], [1], [0, 0, 1, 1], [], []>} : vector<32x32xf32>, vector<32x32xf32>, vector<32x32xf32> -> vector<32x32xf32>
    %8 = arith.addf %6, %7 : vector<32x32xf32>
    %c0_8 = arith.constant 0 : index
    %c0_9 = arith.constant 0 : index
    %9 = vector.load %arg5[%c0_8, %c0_9] : memref<32x32xf32, #tpu.memory_space<vmem>>, vector<32x32xf32>
    %cst_10 = arith.constant dense<0.000000e+00> : vector<32x32xf32>
    %10 = tpu.matmul %8, %9, %cst_10 {dimension_numbers = #tpu.dot_dimension_numbers<[1], [0], [0], [1], [0, 0, 1, 1], [], []>} : vector<32x32xf32>, vector<32x32xf32>, vector<32x32xf32> -> vector<32x32xf32>
    %c0_11 = arith.constant 0 : index
    %c0_12 = arith.constant 0 : index
    %11 = vector.load %arg6[%c0_11, %c0_12] : memref<1x32xf32, #tpu.memory_space<vmem>>, vector<1x32xf32>
    %12 = vector.broadcast %11 : vector<1x32xf32> to vector<32x32xf32>
    %13 = arith.addf %10, %12 : vector<32x32xf32>
    %cst_13 = arith.constant 0.000000e+00 : f32
    %14 = vector.broadcast %cst_13 : f32 to vector<32x32xf32>
    %15 = arith.maximumf %13, %14 : vector<32x32xf32>
    %c0_14 = arith.constant 0 : index
    %c0_15 = arith.constant 0 : index
    %16 = vector.load %arg7[%c0_14, %c0_15] : memref<32x32xf32, #tpu.memory_space<vmem>>, vector<32x32xf32>
    %cst_16 = arith.constant dense<0.000000e+00> : vector<32x32xf32>
    %17 = tpu.matmul %15, %16, %cst_16 {dimension_numbers = #tpu.dot_dimension_numbers<[1], [0], [0], [1], [0, 0, 1, 1], [], []>} : vector<32x32xf32>, vector<32x32xf32>, vector<32x32xf32> -> vector<32x32xf32>
    %c0_17 = arith.constant 0 : index
    %c0_18 = arith.constant 0 : index
    %18 = vector.load %arg8[%c0_17, %c0_18] : memref<1x32xf32, #tpu.memory_space<vmem>>, vector<1x32xf32>
    %19 = vector.broadcast %18 : vector<1x32xf32> to vector<32x32xf32>
    %20 = arith.addf %17, %19 : vector<32x32xf32>
    %21 = arith.addf %20, %6 : vector<32x32xf32>
    %c0_19 = arith.constant 0 : index
    %c0_20 = arith.constant 0 : index
    %22 = vector.load %arg21[%c0_19, %c0_20] : memref<1x32xf32, #tpu.memory_space<vmem>>, vector<1x32xf32>
    %23 = vector.broadcast %22 : vector<1x32xf32> to vector<32x32xf32>
    %24 = arith.mulf %21, %23 : vector<32x32xf32>
    %c0_21 = arith.constant 0 : index
    %c0_22 = arith.constant 0 : index
    %25 = vector.load %arg22[%c0_21, %c0_22] : memref<1x32xf32, #tpu.memory_space<vmem>>, vector<1x32xf32>
    %26 = vector.broadcast %25 : vector<1x32xf32> to vector<32x32xf32>
    %27 = arith.addf %24, %26 : vector<32x32xf32>
    %c0_23 = arith.constant 0 : index
    %c0_24 = arith.constant 0 : index
    %c0_25 = arith.constant 0 : index
    %28 = vector.load %arg9[%c0_23, %c0_24, %c0_25] : memref<4x32x8xf32, #tpu.memory_space<vmem>>, vector<1x32x8xf32>
    %29 = vector.shape_cast %28 : vector<1x32x8xf32> to vector<32x8xf32>
    %cst_26 = arith.constant dense<0.000000e+00> : vector<32x8xf32>
    %30 = tpu.matmul %6, %29, %cst_26 {dimension_numbers = #tpu.dot_dimension_numbers<[1], [0], [0], [1], [0, 0, 1, 1], [], []>} : vector<32x32xf32>, vector<32x8xf32>, vector<32x8xf32> -> vector<32x8xf32>
    %c0_27 = arith.constant 0 : index
    %c0_28 = arith.constant 0 : index
    %c0_29 = arith.constant 0 : index
    %31 = vector.load %arg10[%c0_27, %c0_28, %c0_29] : memref<4x1x8xf32, #tpu.memory_space<vmem>>, vector<1x1x8xf32>
    %32 = vector.shape_cast %31 : vector<1x1x8xf32> to vector<1x8xf32>
    %33 = vector.broadcast %32 : vector<1x8xf32> to vector<32x8xf32>
    %34 = arith.addf %30, %33 : vector<32x8xf32>
    %c0_30 = arith.constant 0 : index
    %c0_31 = arith.constant 0 : index
    %c0_32 = arith.constant 0 : index
    %35 = vector.load %arg11[%c0_30, %c0_31, %c0_32] : memref<4x32x8xf32, #tpu.memory_space<vmem>>, vector<1x32x8xf32>
    %36 = vector.shape_cast %35 : vector<1x32x8xf32> to vector<32x8xf32>
    %cst_33 = arith.constant dense<0.000000e+00> : vector<32x8xf32>
    %37 = tpu.matmul %6, %36, %cst_33 {dimension_numbers = #tpu.dot_dimension_numbers<[1], [0], [0], [1], [0, 0, 1, 1], [], []>} : vector<32x32xf32>, vector<32x8xf32>, vector<32x8xf32> -> vector<32x8xf32>
    %c0_34 = arith.constant 0 : index
    %c0_35 = arith.constant 0 : index
    %c0_36 = arith.constant 0 : index
    %38 = vector.load %arg12[%c0_34, %c0_35, %c0_36] : memref<4x1x8xf32, #tpu.memory_space<vmem>>, vector<1x1x8xf32>
    %39 = vector.shape_cast %38 : vector<1x1x8xf32> to vector<1x8xf32>
    %40 = vector.broadcast %39 : vector<1x8xf32> to vector<32x8xf32>
    %41 = arith.addf %37, %40 : vector<32x8xf32>
    %c0_37 = arith.constant 0 : index
    %c0_38 = arith.constant 0 : index
    %c0_39 = arith.constant 0 : index
    %42 = vector.load %arg13[%c0_37, %c0_38, %c0_39] : memref<4x32x8xf32, #tpu.memory_space<vmem>>, vector<1x32x8xf32>
    %43 = vector.shape_cast %42 : vector<1x32x8xf32> to vector<32x8xf32>
    %cst_40 = arith.constant dense<0.000000e+00> : vector<32x8xf32>
    %44 = tpu.matmul %6, %43, %cst_40 {dimension_numbers = #tpu.dot_dimension_numbers<[1], [0], [0], [1], [0, 0, 1, 1], [], []>} : vector<32x32xf32>, vector<32x8xf32>, vector<32x8xf32> -> vector<32x8xf32>
    %c0_41 = arith.constant 0 : index
    %c0_42 = arith.constant 0 : index
    %c0_43 = arith.constant 0 : index
    %45 = vector.load %arg14[%c0_41, %c0_42, %c0_43] : memref<4x1x8xf32, #tpu.memory_space<vmem>>, vector<1x1x8xf32>
    %46 = vector.shape_cast %45 : vector<1x1x8xf32> to vector<1x8xf32>
    %47 = vector.broadcast %46 : vector<1x8xf32> to vector<32x8xf32>
    %48 = arith.addf %44, %47 : vector<32x8xf32>
    %cst_44 = arith.constant dense<0.000000e+00> : vector<32x32xf32>
    %49 = tpu.matmul %34, %41, %cst_44 {dimension_numbers = #tpu.dot_dimension_numbers<[1], [1], [0], [0], [0, 0, 1, 0], [], []>} : vector<32x8xf32>, vector<32x8xf32>, vector<32x32xf32> -> vector<32x32xf32>
    %cst_45 = arith.constant dense<0xFF800000> : vector<32xf32>
    %50 = vector.multi_reduction <maximumf>, %49, %cst_45 [1] : vector<32x32xf32> to vector<32xf32>
    %51 = vector.shape_cast %50 : vector<32xf32> to vector<32x1xf32>
    %52 = vector.broadcast %51 : vector<32x1xf32> to vector<32x32xf32>
    %53 = arith.subf %49, %52 : vector<32x32xf32>
    %54 = math.exp %53 : vector<32x32xf32>
    %cst_46 = arith.constant dense<0.000000e+00> : vector<32xf32>
    %55 = vector.multi_reduction <add>, %54, %cst_46 [1] : vector<32x32xf32> to vector<32xf32>
    %56 = vector.shape_cast %55 : vector<32xf32> to vector<32x1xf32>
    %57 = tpu.reciprocal %56 {approx = true} : vector<32x1xf32> -> vector<32x1xf32>
    %58 = vector.broadcast %57 : vector<32x1xf32> to vector<32x32xf32>
    %59 = arith.mulf %54, %58 : vector<32x32xf32>
    %cst_47 = arith.constant dense<0.000000e+00> : vector<32x8xf32>
    %60 = tpu.matmul %59, %48, %cst_47 {dimension_numbers = #tpu.dot_dimension_numbers<[1], [0], [0], [1], [0, 0, 1, 1], [], []>} : vector<32x32xf32>, vector<32x8xf32>, vector<32x8xf32> -> vector<32x8xf32>
    %c0_48 = arith.constant 0 : index
    %c0_49 = arith.constant 0 : index
    %c0_50 = arith.constant 0 : index
    %61 = vector.load %arg15[%c0_48, %c0_49, %c0_50] : memref<4x8x32xf32, #tpu.memory_space<vmem>>, vector<1x8x32xf32>
    %62 = vector.shape_cast %61 : vector<1x8x32xf32> to vector<8x32xf32>
    %cst_51 = arith.constant dense<0.000000e+00> : vector<32x32xf32>
    %63 = tpu.matmul %60, %62, %cst_51 {dimension_numbers = #tpu.dot_dimension_numbers<[1], [0], [0], [1], [0, 0, 1, 1], [], []>} : vector<32x8xf32>, vector<8x32xf32>, vector<32x32xf32> -> vector<32x32xf32>
    %c1 = arith.constant 1 : index
    %c0_52 = arith.constant 0 : index
    %c0_53 = arith.constant 0 : index
    %64 = vector.load %arg9[%c1, %c0_52, %c0_53] : memref<4x32x8xf32, #tpu.memory_space<vmem>>, vector<1x32x8xf32>
    %65 = vector.shape_cast %64 : vector<1x32x8xf32> to vector<32x8xf32>
    %cst_54 = arith.constant dense<0.000000e+00> : vector<32x8xf32>
    %66 = tpu.matmul %6, %65, %cst_54 {dimension_numbers = #tpu.dot_dimension_numbers<[1], [0], [0], [1], [0, 0, 1, 1], [], []>} : vector<32x32xf32>, vector<32x8xf32>, vector<32x8xf32> -> vector<32x8xf32>
    %c1_55 = arith.constant 1 : index
    %c0_56 = arith.constant 0 : index
    %c0_57 = arith.constant 0 : index
    %67 = vector.load %arg10[%c1_55, %c0_56, %c0_57] : memref<4x1x8xf32, #tpu.memory_space<vmem>>, vector<1x1x8xf32>
    %68 = vector.shape_cast %67 : vector<1x1x8xf32> to vector<1x8xf32>
    %69 = vector.broadcast %68 : vector<1x8xf32> to vector<32x8xf32>
    %70 = arith.addf %66, %69 : vector<32x8xf32>
    %c1_58 = arith.constant 1 : index
    %c0_59 = arith.constant 0 : index
    %c0_60 = arith.constant 0 : index
    %71 = vector.load %arg11[%c1_58, %c0_59, %c0_60] : memref<4x32x8xf32, #tpu.memory_space<vmem>>, vector<1x32x8xf32>
    %72 = vector.shape_cast %71 : vector<1x32x8xf32> to vector<32x8xf32>
    %cst_61 = arith.constant dense<0.000000e+00> : vector<32x8xf32>
    %73 = tpu.matmul %6, %72, %cst_61 {dimension_numbers = #tpu.dot_dimension_numbers<[1], [0], [0], [1], [0, 0, 1, 1], [], []>} : vector<32x32xf32>, vector<32x8xf32>, vector<32x8xf32> -> vector<32x8xf32>
    %c1_62 = arith.constant 1 : index
    %c0_63 = arith.constant 0 : index
    %c0_64 = arith.constant 0 : index
    %74 = vector.load %arg12[%c1_62, %c0_63, %c0_64] : memref<4x1x8xf32, #tpu.memory_space<vmem>>, vector<1x1x8xf32>
    %75 = vector.shape_cast %74 : vector<1x1x8xf32> to vector<1x8xf32>
    %76 = vector.broadcast %75 : vector<1x8xf32> to vector<32x8xf32>
    %77 = arith.addf %73, %76 : vector<32x8xf32>
    %c1_65 = arith.constant 1 : index
    %c0_66 = arith.constant 0 : index
    %c0_67 = arith.constant 0 : index
    %78 = vector.load %arg13[%c1_65, %c0_66, %c0_67] : memref<4x32x8xf32, #tpu.memory_space<vmem>>, vector<1x32x8xf32>
    %79 = vector.shape_cast %78 : vector<1x32x8xf32> to vector<32x8xf32>
    %cst_68 = arith.constant dense<0.000000e+00> : vector<32x8xf32>
    %80 = tpu.matmul %6, %79, %cst_68 {dimension_numbers = #tpu.dot_dimension_numbers<[1], [0], [0], [1], [0, 0, 1, 1], [], []>} : vector<32x32xf32>, vector<32x8xf32>, vector<32x8xf32> -> vector<32x8xf32>
    %c1_69 = arith.constant 1 : index
    %c0_70 = arith.constant 0 : index
    %c0_71 = arith.constant 0 : index
    %81 = vector.load %arg14[%c1_69, %c0_70, %c0_71] : memref<4x1x8xf32, #tpu.memory_space<vmem>>, vector<1x1x8xf32>
    %82 = vector.shape_cast %81 : vector<1x1x8xf32> to vector<1x8xf32>
    %83 = vector.broadcast %82 : vector<1x8xf32> to vector<32x8xf32>
    %84 = arith.addf %80, %83 : vector<32x8xf32>
    %cst_72 = arith.constant dense<0.000000e+00> : vector<32x32xf32>
    %85 = tpu.matmul %70, %77, %cst_72 {dimension_numbers = #tpu.dot_dimension_numbers<[1], [1], [0], [0], [0, 0, 1, 0], [], []>} : vector<32x8xf32>, vector<32x8xf32>, vector<32x32xf32> -> vector<32x32xf32>
    %cst_73 = arith.constant dense<0xFF800000> : vector<32xf32>
    %86 = vector.multi_reduction <maximumf>, %85, %cst_73 [1] : vector<32x32xf32> to vector<32xf32>
    %87 = vector.shape_cast %86 : vector<32xf32> to vector<32x1xf32>
    %88 = vector.broadcast %87 : vector<32x1xf32> to vector<32x32xf32>
    %89 = arith.subf %85, %88 : vector<32x32xf32>
    %90 = math.exp %89 : vector<32x32xf32>
    %cst_74 = arith.constant dense<0.000000e+00> : vector<32xf32>
    %91 = vector.multi_reduction <add>, %90, %cst_74 [1] : vector<32x32xf32> to vector<32xf32>
    %92 = vector.shape_cast %91 : vector<32xf32> to vector<32x1xf32>
    %93 = tpu.reciprocal %92 {approx = true} : vector<32x1xf32> -> vector<32x1xf32>
    %94 = vector.broadcast %93 : vector<32x1xf32> to vector<32x32xf32>
    %95 = arith.mulf %90, %94 : vector<32x32xf32>
    %cst_75 = arith.constant dense<0.000000e+00> : vector<32x8xf32>
    %96 = tpu.matmul %95, %84, %cst_75 {dimension_numbers = #tpu.dot_dimension_numbers<[1], [0], [0], [1], [0, 0, 1, 1], [], []>} : vector<32x32xf32>, vector<32x8xf32>, vector<32x8xf32> -> vector<32x8xf32>
    %c1_76 = arith.constant 1 : index
    %c0_77 = arith.constant 0 : index
    %c0_78 = arith.constant 0 : index
    %97 = vector.load %arg15[%c1_76, %c0_77, %c0_78] : memref<4x8x32xf32, #tpu.memory_space<vmem>>, vector<1x8x32xf32>
    %98 = vector.shape_cast %97 : vector<1x8x32xf32> to vector<8x32xf32>
    %cst_79 = arith.constant dense<0.000000e+00> : vector<32x32xf32>
    %99 = tpu.matmul %96, %98, %cst_79 {dimension_numbers = #tpu.dot_dimension_numbers<[1], [0], [0], [1], [0, 0, 1, 1], [], []>} : vector<32x8xf32>, vector<8x32xf32>, vector<32x32xf32> -> vector<32x32xf32>
    %100 = arith.addf %63, %99 : vector<32x32xf32>
    %c2 = arith.constant 2 : index
    %c0_80 = arith.constant 0 : index
    %c0_81 = arith.constant 0 : index
    %101 = vector.load %arg9[%c2, %c0_80, %c0_81] : memref<4x32x8xf32, #tpu.memory_space<vmem>>, vector<1x32x8xf32>
    %102 = vector.shape_cast %101 : vector<1x32x8xf32> to vector<32x8xf32>
    %cst_82 = arith.constant dense<0.000000e+00> : vector<32x8xf32>
    %103 = tpu.matmul %6, %102, %cst_82 {dimension_numbers = #tpu.dot_dimension_numbers<[1], [0], [0], [1], [0, 0, 1, 1], [], []>} : vector<32x32xf32>, vector<32x8xf32>, vector<32x8xf32> -> vector<32x8xf32>
    %c2_83 = arith.constant 2 : index
    %c0_84 = arith.constant 0 : index
    %c0_85 = arith.constant 0 : index
    %104 = vector.load %arg10[%c2_83, %c0_84, %c0_85] : memref<4x1x8xf32, #tpu.memory_space<vmem>>, vector<1x1x8xf32>
    %105 = vector.shape_cast %104 : vector<1x1x8xf32> to vector<1x8xf32>
    %106 = vector.broadcast %105 : vector<1x8xf32> to vector<32x8xf32>
    %107 = arith.addf %103, %106 : vector<32x8xf32>
    %c2_86 = arith.constant 2 : index
    %c0_87 = arith.constant 0 : index
    %c0_88 = arith.constant 0 : index
    %108 = vector.load %arg11[%c2_86, %c0_87, %c0_88] : memref<4x32x8xf32, #tpu.memory_space<vmem>>, vector<1x32x8xf32>
    %109 = vector.shape_cast %108 : vector<1x32x8xf32> to vector<32x8xf32>
    %cst_89 = arith.constant dense<0.000000e+00> : vector<32x8xf32>
    %110 = tpu.matmul %6, %109, %cst_89 {dimension_numbers = #tpu.dot_dimension_numbers<[1], [0], [0], [1], [0, 0, 1, 1], [], []>} : vector<32x32xf32>, vector<32x8xf32>, vector<32x8xf32> -> vector<32x8xf32>
    %c2_90 = arith.constant 2 : index
    %c0_91 = arith.constant 0 : index
    %c0_92 = arith.constant 0 : index
    %111 = vector.load %arg12[%c2_90, %c0_91, %c0_92] : memref<4x1x8xf32, #tpu.memory_space<vmem>>, vector<1x1x8xf32>
    %112 = vector.shape_cast %111 : vector<1x1x8xf32> to vector<1x8xf32>
    %113 = vector.broadcast %112 : vector<1x8xf32> to vector<32x8xf32>
    %114 = arith.addf %110, %113 : vector<32x8xf32>
    %c2_93 = arith.constant 2 : index
    %c0_94 = arith.constant 0 : index
    %c0_95 = arith.constant 0 : index
    %115 = vector.load %arg13[%c2_93, %c0_94, %c0_95] : memref<4x32x8xf32, #tpu.memory_space<vmem>>, vector<1x32x8xf32>
    %116 = vector.shape_cast %115 : vector<1x32x8xf32> to vector<32x8xf32>
    %cst_96 = arith.constant dense<0.000000e+00> : vector<32x8xf32>
    %117 = tpu.matmul %6, %116, %cst_96 {dimension_numbers = #tpu.dot_dimension_numbers<[1], [0], [0], [1], [0, 0, 1, 1], [], []>} : vector<32x32xf32>, vector<32x8xf32>, vector<32x8xf32> -> vector<32x8xf32>
    %c2_97 = arith.constant 2 : index
    %c0_98 = arith.constant 0 : index
    %c0_99 = arith.constant 0 : index
    %118 = vector.load %arg14[%c2_97, %c0_98, %c0_99] : memref<4x1x8xf32, #tpu.memory_space<vmem>>, vector<1x1x8xf32>
    %119 = vector.shape_cast %118 : vector<1x1x8xf32> to vector<1x8xf32>
    %120 = vector.broadcast %119 : vector<1x8xf32> to vector<32x8xf32>
    %121 = arith.addf %117, %120 : vector<32x8xf32>
    %cst_100 = arith.constant dense<0.000000e+00> : vector<32x32xf32>
    %122 = tpu.matmul %107, %114, %cst_100 {dimension_numbers = #tpu.dot_dimension_numbers<[1], [1], [0], [0], [0, 0, 1, 0], [], []>} : vector<32x8xf32>, vector<32x8xf32>, vector<32x32xf32> -> vector<32x32xf32>
    %cst_101 = arith.constant dense<0xFF800000> : vector<32xf32>
    %123 = vector.multi_reduction <maximumf>, %122, %cst_101 [1] : vector<32x32xf32> to vector<32xf32>
    %124 = vector.shape_cast %123 : vector<32xf32> to vector<32x1xf32>
    %125 = vector.broadcast %124 : vector<32x1xf32> to vector<32x32xf32>
    %126 = arith.subf %122, %125 : vector<32x32xf32>
    %127 = math.exp %126 : vector<32x32xf32>
    %cst_102 = arith.constant dense<0.000000e+00> : vector<32xf32>
    %128 = vector.multi_reduction <add>, %127, %cst_102 [1] : vector<32x32xf32> to vector<32xf32>
    %129 = vector.shape_cast %128 : vector<32xf32> to vector<32x1xf32>
    %130 = tpu.reciprocal %129 {approx = true} : vector<32x1xf32> -> vector<32x1xf32>
    %131 = vector.broadcast %130 : vector<32x1xf32> to vector<32x32xf32>
    %132 = arith.mulf %127, %131 : vector<32x32xf32>
    %cst_103 = arith.constant dense<0.000000e+00> : vector<32x8xf32>
    %133 = tpu.matmul %132, %121, %cst_103 {dimension_numbers = #tpu.dot_dimension_numbers<[1], [0], [0], [1], [0, 0, 1, 1], [], []>} : vector<32x32xf32>, vector<32x8xf32>, vector<32x8xf32> -> vector<32x8xf32>
    %c2_104 = arith.constant 2 : index
    %c0_105 = arith.constant 0 : index
    %c0_106 = arith.constant 0 : index
    %134 = vector.load %arg15[%c2_104, %c0_105, %c0_106] : memref<4x8x32xf32, #tpu.memory_space<vmem>>, vector<1x8x32xf32>
    %135 = vector.shape_cast %134 : vector<1x8x32xf32> to vector<8x32xf32>
    %cst_107 = arith.constant dense<0.000000e+00> : vector<32x32xf32>
    %136 = tpu.matmul %133, %135, %cst_107 {dimension_numbers = #tpu.dot_dimension_numbers<[1], [0], [0], [1], [0, 0, 1, 1], [], []>} : vector<32x8xf32>, vector<8x32xf32>, vector<32x32xf32> -> vector<32x32xf32>
    %137 = arith.addf %100, %136 : vector<32x32xf32>
    %c3 = arith.constant 3 : index
    %c0_108 = arith.constant 0 : index
    %c0_109 = arith.constant 0 : index
    %138 = vector.load %arg9[%c3, %c0_108, %c0_109] : memref<4x32x8xf32, #tpu.memory_space<vmem>>, vector<1x32x8xf32>
    %139 = vector.shape_cast %138 : vector<1x32x8xf32> to vector<32x8xf32>
    %cst_110 = arith.constant dense<0.000000e+00> : vector<32x8xf32>
    %140 = tpu.matmul %6, %139, %cst_110 {dimension_numbers = #tpu.dot_dimension_numbers<[1], [0], [0], [1], [0, 0, 1, 1], [], []>} : vector<32x32xf32>, vector<32x8xf32>, vector<32x8xf32> -> vector<32x8xf32>
    %c3_111 = arith.constant 3 : index
    %c0_112 = arith.constant 0 : index
    %c0_113 = arith.constant 0 : index
    %141 = vector.load %arg10[%c3_111, %c0_112, %c0_113] : memref<4x1x8xf32, #tpu.memory_space<vmem>>, vector<1x1x8xf32>
    %142 = vector.shape_cast %141 : vector<1x1x8xf32> to vector<1x8xf32>
    %143 = vector.broadcast %142 : vector<1x8xf32> to vector<32x8xf32>
    %144 = arith.addf %140, %143 : vector<32x8xf32>
    %c3_114 = arith.constant 3 : index
    %c0_115 = arith.constant 0 : index
    %c0_116 = arith.constant 0 : index
    %145 = vector.load %arg11[%c3_114, %c0_115, %c0_116] : memref<4x32x8xf32, #tpu.memory_space<vmem>>, vector<1x32x8xf32>
    %146 = vector.shape_cast %145 : vector<1x32x8xf32> to vector<32x8xf32>
    %cst_117 = arith.constant dense<0.000000e+00> : vector<32x8xf32>
    %147 = tpu.matmul %6, %146, %cst_117 {dimension_numbers = #tpu.dot_dimension_numbers<[1], [0], [0], [1], [0, 0, 1, 1], [], []>} : vector<32x32xf32>, vector<32x8xf32>, vector<32x8xf32> -> vector<32x8xf32>
    %c3_118 = arith.constant 3 : index
    %c0_119 = arith.constant 0 : index
    %c0_120 = arith.constant 0 : index
    %148 = vector.load %arg12[%c3_118, %c0_119, %c0_120] : memref<4x1x8xf32, #tpu.memory_space<vmem>>, vector<1x1x8xf32>
    %149 = vector.shape_cast %148 : vector<1x1x8xf32> to vector<1x8xf32>
    %150 = vector.broadcast %149 : vector<1x8xf32> to vector<32x8xf32>
    %151 = arith.addf %147, %150 : vector<32x8xf32>
    %c3_121 = arith.constant 3 : index
    %c0_122 = arith.constant 0 : index
    %c0_123 = arith.constant 0 : index
    %152 = vector.load %arg13[%c3_121, %c0_122, %c0_123] : memref<4x32x8xf32, #tpu.memory_space<vmem>>, vector<1x32x8xf32>
    %153 = vector.shape_cast %152 : vector<1x32x8xf32> to vector<32x8xf32>
    %cst_124 = arith.constant dense<0.000000e+00> : vector<32x8xf32>
    %154 = tpu.matmul %6, %153, %cst_124 {dimension_numbers = #tpu.dot_dimension_numbers<[1], [0], [0], [1], [0, 0, 1, 1], [], []>} : vector<32x32xf32>, vector<32x8xf32>, vector<32x8xf32> -> vector<32x8xf32>
    %c3_125 = arith.constant 3 : index
    %c0_126 = arith.constant 0 : index
    %c0_127 = arith.constant 0 : index
    %155 = vector.load %arg14[%c3_125, %c0_126, %c0_127] : memref<4x1x8xf32, #tpu.memory_space<vmem>>, vector<1x1x8xf32>
    %156 = vector.shape_cast %155 : vector<1x1x8xf32> to vector<1x8xf32>
    %157 = vector.broadcast %156 : vector<1x8xf32> to vector<32x8xf32>
    %158 = arith.addf %154, %157 : vector<32x8xf32>
    %cst_128 = arith.constant dense<0.000000e+00> : vector<32x32xf32>
    %159 = tpu.matmul %144, %151, %cst_128 {dimension_numbers = #tpu.dot_dimension_numbers<[1], [1], [0], [0], [0, 0, 1, 0], [], []>} : vector<32x8xf32>, vector<32x8xf32>, vector<32x32xf32> -> vector<32x32xf32>
    %cst_129 = arith.constant dense<0xFF800000> : vector<32xf32>
    %160 = vector.multi_reduction <maximumf>, %159, %cst_129 [1] : vector<32x32xf32> to vector<32xf32>
    %161 = vector.shape_cast %160 : vector<32xf32> to vector<32x1xf32>
    %162 = vector.broadcast %161 : vector<32x1xf32> to vector<32x32xf32>
    %163 = arith.subf %159, %162 : vector<32x32xf32>
    %164 = math.exp %163 : vector<32x32xf32>
    %cst_130 = arith.constant dense<0.000000e+00> : vector<32xf32>
    %165 = vector.multi_reduction <add>, %164, %cst_130 [1] : vector<32x32xf32> to vector<32xf32>
    %166 = vector.shape_cast %165 : vector<32xf32> to vector<32x1xf32>
    %167 = tpu.reciprocal %166 {approx = true} : vector<32x1xf32> -> vector<32x1xf32>
    %168 = vector.broadcast %167 : vector<32x1xf32> to vector<32x32xf32>
    %169 = arith.mulf %164, %168 : vector<32x32xf32>
    %cst_131 = arith.constant dense<0.000000e+00> : vector<32x8xf32>
    %170 = tpu.matmul %169, %158, %cst_131 {dimension_numbers = #tpu.dot_dimension_numbers<[1], [0], [0], [1], [0, 0, 1, 1], [], []>} : vector<32x32xf32>, vector<32x8xf32>, vector<32x8xf32> -> vector<32x8xf32>
    %c3_132 = arith.constant 3 : index
    %c0_133 = arith.constant 0 : index
    %c0_134 = arith.constant 0 : index
    %171 = vector.load %arg15[%c3_132, %c0_133, %c0_134] : memref<4x8x32xf32, #tpu.memory_space<vmem>>, vector<1x8x32xf32>
    %172 = vector.shape_cast %171 : vector<1x8x32xf32> to vector<8x32xf32>
    %cst_135 = arith.constant dense<0.000000e+00> : vector<32x32xf32>
    %173 = tpu.matmul %170, %172, %cst_135 {dimension_numbers = #tpu.dot_dimension_numbers<[1], [0], [0], [1], [0, 0, 1, 1], [], []>} : vector<32x8xf32>, vector<8x32xf32>, vector<32x32xf32> -> vector<32x32xf32>
    %174 = arith.addf %137, %173 : vector<32x32xf32>
    %c0_136 = arith.constant 0 : index
    %c0_137 = arith.constant 0 : index
    %175 = vector.load %arg16[%c0_136, %c0_137] : memref<1x32xf32, #tpu.memory_space<vmem>>, vector<1x32xf32>
    %176 = vector.broadcast %175 : vector<1x32xf32> to vector<32x32xf32>
    %177 = arith.addf %174, %176 : vector<32x32xf32>
    %178 = arith.addf %177, %6 : vector<32x32xf32>
    %c0_138 = arith.constant 0 : index
    %c0_139 = arith.constant 0 : index
    %179 = vector.load %arg23[%c0_138, %c0_139] : memref<1x32xf32, #tpu.memory_space<vmem>>, vector<1x32xf32>
    %180 = vector.broadcast %179 : vector<1x32xf32> to vector<32x32xf32>
    %181 = arith.mulf %178, %180 : vector<32x32xf32>
    %c0_140 = arith.constant 0 : index
    %c0_141 = arith.constant 0 : index
    %182 = vector.load %arg24[%c0_140, %c0_141] : memref<1x32xf32, #tpu.memory_space<vmem>>, vector<1x32xf32>
    %183 = vector.broadcast %182 : vector<1x32xf32> to vector<32x32xf32>
    %184 = arith.addf %181, %183 : vector<32x32xf32>
    %185 = arith.addf %27, %184 : vector<32x32xf32>
    %c0_142 = arith.constant 0 : index
    %c0_143 = arith.constant 0 : index
    %186 = vector.load %arg17[%c0_142, %c0_143] : memref<32x64xf32, #tpu.memory_space<vmem>>, vector<32x64xf32>
    %cst_144 = arith.constant dense<0.000000e+00> : vector<32x64xf32>
    %187 = tpu.matmul %185, %186, %cst_144 {dimension_numbers = #tpu.dot_dimension_numbers<[1], [0], [0], [1], [0, 0, 1, 1], [], []>} : vector<32x32xf32>, vector<32x64xf32>, vector<32x64xf32> -> vector<32x64xf32>
    %c0_145 = arith.constant 0 : index
    %c0_146 = arith.constant 0 : index
    %188 = vector.load %arg18[%c0_145, %c0_146] : memref<1x64xf32, #tpu.memory_space<vmem>>, vector<1x64xf32>
    %189 = vector.broadcast %188 : vector<1x64xf32> to vector<32x64xf32>
    %190 = arith.addf %187, %189 : vector<32x64xf32>
    %cst_147 = arith.constant 0.000000e+00 : f32
    %191 = vector.broadcast %cst_147 : f32 to vector<32x64xf32>
    %192 = arith.maximumf %190, %191 : vector<32x64xf32>
    %c0_148 = arith.constant 0 : index
    %c0_149 = arith.constant 0 : index
    %193 = vector.load %arg19[%c0_148, %c0_149] : memref<64x32xf32, #tpu.memory_space<vmem>>, vector<64x32xf32>
    %cst_150 = arith.constant dense<0.000000e+00> : vector<32x32xf32>
    %194 = tpu.matmul %192, %193, %cst_150 {dimension_numbers = #tpu.dot_dimension_numbers<[1], [0], [0], [1], [0, 0, 1, 1], [], []>} : vector<32x64xf32>, vector<64x32xf32>, vector<32x32xf32> -> vector<32x32xf32>
    %c0_151 = arith.constant 0 : index
    %c0_152 = arith.constant 0 : index
    %195 = vector.load %arg20[%c0_151, %c0_152] : memref<1x32xf32, #tpu.memory_space<vmem>>, vector<1x32xf32>
    %196 = vector.broadcast %195 : vector<1x32xf32> to vector<32x32xf32>
    %197 = arith.addf %194, %196 : vector<32x32xf32>
    %198 = arith.addf %185, %197 : vector<32x32xf32>
    %c0_153 = arith.constant 0 : index
    %c0_154 = arith.constant 0 : index
    %199 = vector.load %arg25[%c0_153, %c0_154] : memref<1x32xf32, #tpu.memory_space<vmem>>, vector<1x32xf32>
    %200 = vector.broadcast %199 : vector<1x32xf32> to vector<32x32xf32>
    %201 = arith.mulf %198, %200 : vector<32x32xf32>
    %c0_155 = arith.constant 0 : index
    %c0_156 = arith.constant 0 : index
    %202 = vector.load %arg26[%c0_155, %c0_156] : memref<1x32xf32, #tpu.memory_space<vmem>>, vector<1x32xf32>
    %203 = vector.broadcast %202 : vector<1x32xf32> to vector<32x32xf32>
    %204 = arith.addf %201, %203 : vector<32x32xf32>
    %cst_157 = arith.constant 0.000000e+00 : f32
    %205 = vector.broadcast %cst_157 : f32 to vector<32x32xf32>
    %206 = arith.maximumf %204, %205 : vector<32x32xf32>
    %cst_158 = arith.constant dense<0.000000e+00> : vector<32x32xf32>
    %207 = tpu.matmul %0, %206, %cst_158 {dimension_numbers = #tpu.dot_dimension_numbers<[1], [0], [0], [1], [0, 0, 1, 1], [], []>} : vector<32x32xf32>, vector<32x32xf32>, vector<32x32xf32> -> vector<32x32xf32>
    %208 = arith.addf %206, %207 : vector<32x32xf32>
    %c0_159 = arith.constant 0 : index
    %c0_160 = arith.constant 0 : index
    %209 = vector.load %arg27[%c0_159, %c0_160] : memref<32x32xf32, #tpu.memory_space<vmem>>, vector<32x32xf32>
    %cst_161 = arith.constant dense<0.000000e+00> : vector<32x32xf32>
    %210 = tpu.matmul %208, %209, %cst_161 {dimension_numbers = #tpu.dot_dimension_numbers<[1], [0], [0], [1], [0, 0, 1, 1], [], []>} : vector<32x32xf32>, vector<32x32xf32>, vector<32x32xf32> -> vector<32x32xf32>
    %c0_162 = arith.constant 0 : index
    %c0_163 = arith.constant 0 : index
    %211 = vector.load %arg28[%c0_162, %c0_163] : memref<1x32xf32, #tpu.memory_space<vmem>>, vector<1x32xf32>
    %212 = vector.broadcast %211 : vector<1x32xf32> to vector<32x32xf32>
    %213 = arith.addf %210, %212 : vector<32x32xf32>
    %cst_164 = arith.constant 0.000000e+00 : f32
    %214 = vector.broadcast %cst_164 : f32 to vector<32x32xf32>
    %215 = arith.maximumf %213, %214 : vector<32x32xf32>
    %c0_165 = arith.constant 0 : index
    %c0_166 = arith.constant 0 : index
    %216 = vector.load %arg29[%c0_165, %c0_166] : memref<32x32xf32, #tpu.memory_space<vmem>>, vector<32x32xf32>
    %cst_167 = arith.constant dense<0.000000e+00> : vector<32x32xf32>
    %217 = tpu.matmul %215, %216, %cst_167 {dimension_numbers = #tpu.dot_dimension_numbers<[1], [0], [0], [1], [0, 0, 1, 1], [], []>} : vector<32x32xf32>, vector<32x32xf32>, vector<32x32xf32> -> vector<32x32xf32>
    %c0_168 = arith.constant 0 : index
    %c0_169 = arith.constant 0 : index
    %218 = vector.load %arg30[%c0_168, %c0_169] : memref<1x32xf32, #tpu.memory_space<vmem>>, vector<1x32xf32>
    %219 = vector.broadcast %218 : vector<1x32xf32> to vector<32x32xf32>
    %220 = arith.addf %217, %219 : vector<32x32xf32>
    %221 = arith.addf %220, %206 : vector<32x32xf32>
    %c0_170 = arith.constant 0 : index
    %c0_171 = arith.constant 0 : index
    %222 = vector.load %arg43[%c0_170, %c0_171] : memref<1x32xf32, #tpu.memory_space<vmem>>, vector<1x32xf32>
    %223 = vector.broadcast %222 : vector<1x32xf32> to vector<32x32xf32>
    %224 = arith.mulf %221, %223 : vector<32x32xf32>
    %c0_172 = arith.constant 0 : index
    %c0_173 = arith.constant 0 : index
    %225 = vector.load %arg44[%c0_172, %c0_173] : memref<1x32xf32, #tpu.memory_space<vmem>>, vector<1x32xf32>
    %226 = vector.broadcast %225 : vector<1x32xf32> to vector<32x32xf32>
    %227 = arith.addf %224, %226 : vector<32x32xf32>
    %c0_174 = arith.constant 0 : index
    %c0_175 = arith.constant 0 : index
    %c0_176 = arith.constant 0 : index
    %228 = vector.load %arg31[%c0_174, %c0_175, %c0_176] : memref<4x32x8xf32, #tpu.memory_space<vmem>>, vector<1x32x8xf32>
    %229 = vector.shape_cast %228 : vector<1x32x8xf32> to vector<32x8xf32>
    %cst_177 = arith.constant dense<0.000000e+00> : vector<32x8xf32>
    %230 = tpu.matmul %206, %229, %cst_177 {dimension_numbers = #tpu.dot_dimension_numbers<[1], [0], [0], [1], [0, 0, 1, 1], [], []>} : vector<32x32xf32>, vector<32x8xf32>, vector<32x8xf32> -> vector<32x8xf32>
    %c0_178 = arith.constant 0 : index
    %c0_179 = arith.constant 0 : index
    %c0_180 = arith.constant 0 : index
    %231 = vector.load %arg32[%c0_178, %c0_179, %c0_180] : memref<4x1x8xf32, #tpu.memory_space<vmem>>, vector<1x1x8xf32>
    %232 = vector.shape_cast %231 : vector<1x1x8xf32> to vector<1x8xf32>
    %233 = vector.broadcast %232 : vector<1x8xf32> to vector<32x8xf32>
    %234 = arith.addf %230, %233 : vector<32x8xf32>
    %c0_181 = arith.constant 0 : index
    %c0_182 = arith.constant 0 : index
    %c0_183 = arith.constant 0 : index
    %235 = vector.load %arg33[%c0_181, %c0_182, %c0_183] : memref<4x32x8xf32, #tpu.memory_space<vmem>>, vector<1x32x8xf32>
    %236 = vector.shape_cast %235 : vector<1x32x8xf32> to vector<32x8xf32>
    %cst_184 = arith.constant dense<0.000000e+00> : vector<32x8xf32>
    %237 = tpu.matmul %206, %236, %cst_184 {dimension_numbers = #tpu.dot_dimension_numbers<[1], [0], [0], [1], [0, 0, 1, 1], [], []>} : vector<32x32xf32>, vector<32x8xf32>, vector<32x8xf32> -> vector<32x8xf32>
    %c0_185 = arith.constant 0 : index
    %c0_186 = arith.constant 0 : index
    %c0_187 = arith.constant 0 : index
    %238 = vector.load %arg34[%c0_185, %c0_186, %c0_187] : memref<4x1x8xf32, #tpu.memory_space<vmem>>, vector<1x1x8xf32>
    %239 = vector.shape_cast %238 : vector<1x1x8xf32> to vector<1x8xf32>
    %240 = vector.broadcast %239 : vector<1x8xf32> to vector<32x8xf32>
    %241 = arith.addf %237, %240 : vector<32x8xf32>
    %c0_188 = arith.constant 0 : index
    %c0_189 = arith.constant 0 : index
    %c0_190 = arith.constant 0 : index
    %242 = vector.load %arg35[%c0_188, %c0_189, %c0_190] : memref<4x32x8xf32, #tpu.memory_space<vmem>>, vector<1x32x8xf32>
    %243 = vector.shape_cast %242 : vector<1x32x8xf32> to vector<32x8xf32>
    %cst_191 = arith.constant dense<0.000000e+00> : vector<32x8xf32>
    %244 = tpu.matmul %206, %243, %cst_191 {dimension_numbers = #tpu.dot_dimension_numbers<[1], [0], [0], [1], [0, 0, 1, 1], [], []>} : vector<32x32xf32>, vector<32x8xf32>, vector<32x8xf32> -> vector<32x8xf32>
    %c0_192 = arith.constant 0 : index
    %c0_193 = arith.constant 0 : index
    %c0_194 = arith.constant 0 : index
    %245 = vector.load %arg36[%c0_192, %c0_193, %c0_194] : memref<4x1x8xf32, #tpu.memory_space<vmem>>, vector<1x1x8xf32>
    %246 = vector.shape_cast %245 : vector<1x1x8xf32> to vector<1x8xf32>
    %247 = vector.broadcast %246 : vector<1x8xf32> to vector<32x8xf32>
    %248 = arith.addf %244, %247 : vector<32x8xf32>
    %cst_195 = arith.constant dense<0.000000e+00> : vector<32x32xf32>
    %249 = tpu.matmul %234, %241, %cst_195 {dimension_numbers = #tpu.dot_dimension_numbers<[1], [1], [0], [0], [0, 0, 1, 0], [], []>} : vector<32x8xf32>, vector<32x8xf32>, vector<32x32xf32> -> vector<32x32xf32>
    %cst_196 = arith.constant dense<0xFF800000> : vector<32xf32>
    %250 = vector.multi_reduction <maximumf>, %249, %cst_196 [1] : vector<32x32xf32> to vector<32xf32>
    %251 = vector.shape_cast %250 : vector<32xf32> to vector<32x1xf32>
    %252 = vector.broadcast %251 : vector<32x1xf32> to vector<32x32xf32>
    %253 = arith.subf %249, %252 : vector<32x32xf32>
    %254 = math.exp %253 : vector<32x32xf32>
    %cst_197 = arith.constant dense<0.000000e+00> : vector<32xf32>
    %255 = vector.multi_reduction <add>, %254, %cst_197 [1] : vector<32x32xf32> to vector<32xf32>
    %256 = vector.shape_cast %255 : vector<32xf32> to vector<32x1xf32>
    %257 = tpu.reciprocal %256 {approx = true} : vector<32x1xf32> -> vector<32x1xf32>
    %258 = vector.broadcast %257 : vector<32x1xf32> to vector<32x32xf32>
    %259 = arith.mulf %254, %258 : vector<32x32xf32>
    %cst_198 = arith.constant dense<0.000000e+00> : vector<32x8xf32>
    %260 = tpu.matmul %259, %248, %cst_198 {dimension_numbers = #tpu.dot_dimension_numbers<[1], [0], [0], [1], [0, 0, 1, 1], [], []>} : vector<32x32xf32>, vector<32x8xf32>, vector<32x8xf32> -> vector<32x8xf32>
    %c0_199 = arith.constant 0 : index
    %c0_200 = arith.constant 0 : index
    %c0_201 = arith.constant 0 : index
    %261 = vector.load %arg37[%c0_199, %c0_200, %c0_201] : memref<4x8x32xf32, #tpu.memory_space<vmem>>, vector<1x8x32xf32>
    %262 = vector.shape_cast %261 : vector<1x8x32xf32> to vector<8x32xf32>
    %cst_202 = arith.constant dense<0.000000e+00> : vector<32x32xf32>
    %263 = tpu.matmul %260, %262, %cst_202 {dimension_numbers = #tpu.dot_dimension_numbers<[1], [0], [0], [1], [0, 0, 1, 1], [], []>} : vector<32x8xf32>, vector<8x32xf32>, vector<32x32xf32> -> vector<32x32xf32>
    %c1_203 = arith.constant 1 : index
    %c0_204 = arith.constant 0 : index
    %c0_205 = arith.constant 0 : index
    %264 = vector.load %arg31[%c1_203, %c0_204, %c0_205] : memref<4x32x8xf32, #tpu.memory_space<vmem>>, vector<1x32x8xf32>
    %265 = vector.shape_cast %264 : vector<1x32x8xf32> to vector<32x8xf32>
    %cst_206 = arith.constant dense<0.000000e+00> : vector<32x8xf32>
    %266 = tpu.matmul %206, %265, %cst_206 {dimension_numbers = #tpu.dot_dimension_numbers<[1], [0], [0], [1], [0, 0, 1, 1], [], []>} : vector<32x32xf32>, vector<32x8xf32>, vector<32x8xf32> -> vector<32x8xf32>
    %c1_207 = arith.constant 1 : index
    %c0_208 = arith.constant 0 : index
    %c0_209 = arith.constant 0 : index
    %267 = vector.load %arg32[%c1_207, %c0_208, %c0_209] : memref<4x1x8xf32, #tpu.memory_space<vmem>>, vector<1x1x8xf32>
    %268 = vector.shape_cast %267 : vector<1x1x8xf32> to vector<1x8xf32>
    %269 = vector.broadcast %268 : vector<1x8xf32> to vector<32x8xf32>
    %270 = arith.addf %266, %269 : vector<32x8xf32>
    %c1_210 = arith.constant 1 : index
    %c0_211 = arith.constant 0 : index
    %c0_212 = arith.constant 0 : index
    %271 = vector.load %arg33[%c1_210, %c0_211, %c0_212] : memref<4x32x8xf32, #tpu.memory_space<vmem>>, vector<1x32x8xf32>
    %272 = vector.shape_cast %271 : vector<1x32x8xf32> to vector<32x8xf32>
    %cst_213 = arith.constant dense<0.000000e+00> : vector<32x8xf32>
    %273 = tpu.matmul %206, %272, %cst_213 {dimension_numbers = #tpu.dot_dimension_numbers<[1], [0], [0], [1], [0, 0, 1, 1], [], []>} : vector<32x32xf32>, vector<32x8xf32>, vector<32x8xf32> -> vector<32x8xf32>
    %c1_214 = arith.constant 1 : index
    %c0_215 = arith.constant 0 : index
    %c0_216 = arith.constant 0 : index
    %274 = vector.load %arg34[%c1_214, %c0_215, %c0_216] : memref<4x1x8xf32, #tpu.memory_space<vmem>>, vector<1x1x8xf32>
    %275 = vector.shape_cast %274 : vector<1x1x8xf32> to vector<1x8xf32>
    %276 = vector.broadcast %275 : vector<1x8xf32> to vector<32x8xf32>
    %277 = arith.addf %273, %276 : vector<32x8xf32>
    %c1_217 = arith.constant 1 : index
    %c0_218 = arith.constant 0 : index
    %c0_219 = arith.constant 0 : index
    %278 = vector.load %arg35[%c1_217, %c0_218, %c0_219] : memref<4x32x8xf32, #tpu.memory_space<vmem>>, vector<1x32x8xf32>
    %279 = vector.shape_cast %278 : vector<1x32x8xf32> to vector<32x8xf32>
    %cst_220 = arith.constant dense<0.000000e+00> : vector<32x8xf32>
    %280 = tpu.matmul %206, %279, %cst_220 {dimension_numbers = #tpu.dot_dimension_numbers<[1], [0], [0], [1], [0, 0, 1, 1], [], []>} : vector<32x32xf32>, vector<32x8xf32>, vector<32x8xf32> -> vector<32x8xf32>
    %c1_221 = arith.constant 1 : index
    %c0_222 = arith.constant 0 : index
    %c0_223 = arith.constant 0 : index
    %281 = vector.load %arg36[%c1_221, %c0_222, %c0_223] : memref<4x1x8xf32, #tpu.memory_space<vmem>>, vector<1x1x8xf32>
    %282 = vector.shape_cast %281 : vector<1x1x8xf32> to vector<1x8xf32>
    %283 = vector.broadcast %282 : vector<1x8xf32> to vector<32x8xf32>
    %284 = arith.addf %280, %283 : vector<32x8xf32>
    %cst_224 = arith.constant dense<0.000000e+00> : vector<32x32xf32>
    %285 = tpu.matmul %270, %277, %cst_224 {dimension_numbers = #tpu.dot_dimension_numbers<[1], [1], [0], [0], [0, 0, 1, 0], [], []>} : vector<32x8xf32>, vector<32x8xf32>, vector<32x32xf32> -> vector<32x32xf32>
    %cst_225 = arith.constant dense<0xFF800000> : vector<32xf32>
    %286 = vector.multi_reduction <maximumf>, %285, %cst_225 [1] : vector<32x32xf32> to vector<32xf32>
    %287 = vector.shape_cast %286 : vector<32xf32> to vector<32x1xf32>
    %288 = vector.broadcast %287 : vector<32x1xf32> to vector<32x32xf32>
    %289 = arith.subf %285, %288 : vector<32x32xf32>
    %290 = math.exp %289 : vector<32x32xf32>
    %cst_226 = arith.constant dense<0.000000e+00> : vector<32xf32>
    %291 = vector.multi_reduction <add>, %290, %cst_226 [1] : vector<32x32xf32> to vector<32xf32>
    %292 = vector.shape_cast %291 : vector<32xf32> to vector<32x1xf32>
    %293 = tpu.reciprocal %292 {approx = true} : vector<32x1xf32> -> vector<32x1xf32>
    %294 = vector.broadcast %293 : vector<32x1xf32> to vector<32x32xf32>
    %295 = arith.mulf %290, %294 : vector<32x32xf32>
    %cst_227 = arith.constant dense<0.000000e+00> : vector<32x8xf32>
    %296 = tpu.matmul %295, %284, %cst_227 {dimension_numbers = #tpu.dot_dimension_numbers<[1], [0], [0], [1], [0, 0, 1, 1], [], []>} : vector<32x32xf32>, vector<32x8xf32>, vector<32x8xf32> -> vector<32x8xf32>
    %c1_228 = arith.constant 1 : index
    %c0_229 = arith.constant 0 : index
    %c0_230 = arith.constant 0 : index
    %297 = vector.load %arg37[%c1_228, %c0_229, %c0_230] : memref<4x8x32xf32, #tpu.memory_space<vmem>>, vector<1x8x32xf32>
    %298 = vector.shape_cast %297 : vector<1x8x32xf32> to vector<8x32xf32>
    %cst_231 = arith.constant dense<0.000000e+00> : vector<32x32xf32>
    %299 = tpu.matmul %296, %298, %cst_231 {dimension_numbers = #tpu.dot_dimension_numbers<[1], [0], [0], [1], [0, 0, 1, 1], [], []>} : vector<32x8xf32>, vector<8x32xf32>, vector<32x32xf32> -> vector<32x32xf32>
    %300 = arith.addf %263, %299 : vector<32x32xf32>
    %c2_232 = arith.constant 2 : index
    %c0_233 = arith.constant 0 : index
    %c0_234 = arith.constant 0 : index
    %301 = vector.load %arg31[%c2_232, %c0_233, %c0_234] : memref<4x32x8xf32, #tpu.memory_space<vmem>>, vector<1x32x8xf32>
    %302 = vector.shape_cast %301 : vector<1x32x8xf32> to vector<32x8xf32>
    %cst_235 = arith.constant dense<0.000000e+00> : vector<32x8xf32>
    %303 = tpu.matmul %206, %302, %cst_235 {dimension_numbers = #tpu.dot_dimension_numbers<[1], [0], [0], [1], [0, 0, 1, 1], [], []>} : vector<32x32xf32>, vector<32x8xf32>, vector<32x8xf32> -> vector<32x8xf32>
    %c2_236 = arith.constant 2 : index
    %c0_237 = arith.constant 0 : index
    %c0_238 = arith.constant 0 : index
    %304 = vector.load %arg32[%c2_236, %c0_237, %c0_238] : memref<4x1x8xf32, #tpu.memory_space<vmem>>, vector<1x1x8xf32>
    %305 = vector.shape_cast %304 : vector<1x1x8xf32> to vector<1x8xf32>
    %306 = vector.broadcast %305 : vector<1x8xf32> to vector<32x8xf32>
    %307 = arith.addf %303, %306 : vector<32x8xf32>
    %c2_239 = arith.constant 2 : index
    %c0_240 = arith.constant 0 : index
    %c0_241 = arith.constant 0 : index
    %308 = vector.load %arg33[%c2_239, %c0_240, %c0_241] : memref<4x32x8xf32, #tpu.memory_space<vmem>>, vector<1x32x8xf32>
    %309 = vector.shape_cast %308 : vector<1x32x8xf32> to vector<32x8xf32>
    %cst_242 = arith.constant dense<0.000000e+00> : vector<32x8xf32>
    %310 = tpu.matmul %206, %309, %cst_242 {dimension_numbers = #tpu.dot_dimension_numbers<[1], [0], [0], [1], [0, 0, 1, 1], [], []>} : vector<32x32xf32>, vector<32x8xf32>, vector<32x8xf32> -> vector<32x8xf32>
    %c2_243 = arith.constant 2 : index
    %c0_244 = arith.constant 0 : index
    %c0_245 = arith.constant 0 : index
    %311 = vector.load %arg34[%c2_243, %c0_244, %c0_245] : memref<4x1x8xf32, #tpu.memory_space<vmem>>, vector<1x1x8xf32>
    %312 = vector.shape_cast %311 : vector<1x1x8xf32> to vector<1x8xf32>
    %313 = vector.broadcast %312 : vector<1x8xf32> to vector<32x8xf32>
    %314 = arith.addf %310, %313 : vector<32x8xf32>
    %c2_246 = arith.constant 2 : index
    %c0_247 = arith.constant 0 : index
    %c0_248 = arith.constant 0 : index
    %315 = vector.load %arg35[%c2_246, %c0_247, %c0_248] : memref<4x32x8xf32, #tpu.memory_space<vmem>>, vector<1x32x8xf32>
    %316 = vector.shape_cast %315 : vector<1x32x8xf32> to vector<32x8xf32>
    %cst_249 = arith.constant dense<0.000000e+00> : vector<32x8xf32>
    %317 = tpu.matmul %206, %316, %cst_249 {dimension_numbers = #tpu.dot_dimension_numbers<[1], [0], [0], [1], [0, 0, 1, 1], [], []>} : vector<32x32xf32>, vector<32x8xf32>, vector<32x8xf32> -> vector<32x8xf32>
    %c2_250 = arith.constant 2 : index
    %c0_251 = arith.constant 0 : index
    %c0_252 = arith.constant 0 : index
    %318 = vector.load %arg36[%c2_250, %c0_251, %c0_252] : memref<4x1x8xf32, #tpu.memory_space<vmem>>, vector<1x1x8xf32>
    %319 = vector.shape_cast %318 : vector<1x1x8xf32> to vector<1x8xf32>
    %320 = vector.broadcast %319 : vector<1x8xf32> to vector<32x8xf32>
    %321 = arith.addf %317, %320 : vector<32x8xf32>
    %cst_253 = arith.constant dense<0.000000e+00> : vector<32x32xf32>
    %322 = tpu.matmul %307, %314, %cst_253 {dimension_numbers = #tpu.dot_dimension_numbers<[1], [1], [0], [0], [0, 0, 1, 0], [], []>} : vector<32x8xf32>, vector<32x8xf32>, vector<32x32xf32> -> vector<32x32xf32>
    %cst_254 = arith.constant dense<0xFF800000> : vector<32xf32>
    %323 = vector.multi_reduction <maximumf>, %322, %cst_254 [1] : vector<32x32xf32> to vector<32xf32>
    %324 = vector.shape_cast %323 : vector<32xf32> to vector<32x1xf32>
    %325 = vector.broadcast %324 : vector<32x1xf32> to vector<32x32xf32>
    %326 = arith.subf %322, %325 : vector<32x32xf32>
    %327 = math.exp %326 : vector<32x32xf32>
    %cst_255 = arith.constant dense<0.000000e+00> : vector<32xf32>
    %328 = vector.multi_reduction <add>, %327, %cst_255 [1] : vector<32x32xf32> to vector<32xf32>
    %329 = vector.shape_cast %328 : vector<32xf32> to vector<32x1xf32>
    %330 = tpu.reciprocal %329 {approx = true} : vector<32x1xf32> -> vector<32x1xf32>
    %331 = vector.broadcast %330 : vector<32x1xf32> to vector<32x32xf32>
    %332 = arith.mulf %327, %331 : vector<32x32xf32>
    %cst_256 = arith.constant dense<0.000000e+00> : vector<32x8xf32>
    %333 = tpu.matmul %332, %321, %cst_256 {dimension_numbers = #tpu.dot_dimension_numbers<[1], [0], [0], [1], [0, 0, 1, 1], [], []>} : vector<32x32xf32>, vector<32x8xf32>, vector<32x8xf32> -> vector<32x8xf32>
    %c2_257 = arith.constant 2 : index
    %c0_258 = arith.constant 0 : index
    %c0_259 = arith.constant 0 : index
    %334 = vector.load %arg37[%c2_257, %c0_258, %c0_259] : memref<4x8x32xf32, #tpu.memory_space<vmem>>, vector<1x8x32xf32>
    %335 = vector.shape_cast %334 : vector<1x8x32xf32> to vector<8x32xf32>
    %cst_260 = arith.constant dense<0.000000e+00> : vector<32x32xf32>
    %336 = tpu.matmul %333, %335, %cst_260 {dimension_numbers = #tpu.dot_dimension_numbers<[1], [0], [0], [1], [0, 0, 1, 1], [], []>} : vector<32x8xf32>, vector<8x32xf32>, vector<32x32xf32> -> vector<32x32xf32>
    %337 = arith.addf %300, %336 : vector<32x32xf32>
    %c3_261 = arith.constant 3 : index
    %c0_262 = arith.constant 0 : index
    %c0_263 = arith.constant 0 : index
    %338 = vector.load %arg31[%c3_261, %c0_262, %c0_263] : memref<4x32x8xf32, #tpu.memory_space<vmem>>, vector<1x32x8xf32>
    %339 = vector.shape_cast %338 : vector<1x32x8xf32> to vector<32x8xf32>
    %cst_264 = arith.constant dense<0.000000e+00> : vector<32x8xf32>
    %340 = tpu.matmul %206, %339, %cst_264 {dimension_numbers = #tpu.dot_dimension_numbers<[1], [0], [0], [1], [0, 0, 1, 1], [], []>} : vector<32x32xf32>, vector<32x8xf32>, vector<32x8xf32> -> vector<32x8xf32>
    %c3_265 = arith.constant 3 : index
    %c0_266 = arith.constant 0 : index
    %c0_267 = arith.constant 0 : index
    %341 = vector.load %arg32[%c3_265, %c0_266, %c0_267] : memref<4x1x8xf32, #tpu.memory_space<vmem>>, vector<1x1x8xf32>
    %342 = vector.shape_cast %341 : vector<1x1x8xf32> to vector<1x8xf32>
    %343 = vector.broadcast %342 : vector<1x8xf32> to vector<32x8xf32>
    %344 = arith.addf %340, %343 : vector<32x8xf32>
    %c3_268 = arith.constant 3 : index
    %c0_269 = arith.constant 0 : index
    %c0_270 = arith.constant 0 : index
    %345 = vector.load %arg33[%c3_268, %c0_269, %c0_270] : memref<4x32x8xf32, #tpu.memory_space<vmem>>, vector<1x32x8xf32>
    %346 = vector.shape_cast %345 : vector<1x32x8xf32> to vector<32x8xf32>
    %cst_271 = arith.constant dense<0.000000e+00> : vector<32x8xf32>
    %347 = tpu.matmul %206, %346, %cst_271 {dimension_numbers = #tpu.dot_dimension_numbers<[1], [0], [0], [1], [0, 0, 1, 1], [], []>} : vector<32x32xf32>, vector<32x8xf32>, vector<32x8xf32> -> vector<32x8xf32>
    %c3_272 = arith.constant 3 : index
    %c0_273 = arith.constant 0 : index
    %c0_274 = arith.constant 0 : index
    %348 = vector.load %arg34[%c3_272, %c0_273, %c0_274] : memref<4x1x8xf32, #tpu.memory_space<vmem>>, vector<1x1x8xf32>
    %349 = vector.shape_cast %348 : vector<1x1x8xf32> to vector<1x8xf32>
    %350 = vector.broadcast %349 : vector<1x8xf32> to vector<32x8xf32>
    %351 = arith.addf %347, %350 : vector<32x8xf32>
    %c3_275 = arith.constant 3 : index
    %c0_276 = arith.constant 0 : index
    %c0_277 = arith.constant 0 : index
    %352 = vector.load %arg35[%c3_275, %c0_276, %c0_277] : memref<4x32x8xf32, #tpu.memory_space<vmem>>, vector<1x32x8xf32>
    %353 = vector.shape_cast %352 : vector<1x32x8xf32> to vector<32x8xf32>
    %cst_278 = arith.constant dense<0.000000e+00> : vector<32x8xf32>
    %354 = tpu.matmul %206, %353, %cst_278 {dimension_numbers = #tpu.dot_dimension_numbers<[1], [0], [0], [1], [0, 0, 1, 1], [], []>} : vector<32x32xf32>, vector<32x8xf32>, vector<32x8xf32> -> vector<32x8xf32>
    %c3_279 = arith.constant 3 : index
    %c0_280 = arith.constant 0 : index
    %c0_281 = arith.constant 0 : index
    %355 = vector.load %arg36[%c3_279, %c0_280, %c0_281] : memref<4x1x8xf32, #tpu.memory_space<vmem>>, vector<1x1x8xf32>
    %356 = vector.shape_cast %355 : vector<1x1x8xf32> to vector<1x8xf32>
    %357 = vector.broadcast %356 : vector<1x8xf32> to vector<32x8xf32>
    %358 = arith.addf %354, %357 : vector<32x8xf32>
    %cst_282 = arith.constant dense<0.000000e+00> : vector<32x32xf32>
    %359 = tpu.matmul %344, %351, %cst_282 {dimension_numbers = #tpu.dot_dimension_numbers<[1], [1], [0], [0], [0, 0, 1, 0], [], []>} : vector<32x8xf32>, vector<32x8xf32>, vector<32x32xf32> -> vector<32x32xf32>
    %cst_283 = arith.constant dense<0xFF800000> : vector<32xf32>
    %360 = vector.multi_reduction <maximumf>, %359, %cst_283 [1] : vector<32x32xf32> to vector<32xf32>
    %361 = vector.shape_cast %360 : vector<32xf32> to vector<32x1xf32>
    %362 = vector.broadcast %361 : vector<32x1xf32> to vector<32x32xf32>
    %363 = arith.subf %359, %362 : vector<32x32xf32>
    %364 = math.exp %363 : vector<32x32xf32>
    %cst_284 = arith.constant dense<0.000000e+00> : vector<32xf32>
    %365 = vector.multi_reduction <add>, %364, %cst_284 [1] : vector<32x32xf32> to vector<32xf32>
    %366 = vector.shape_cast %365 : vector<32xf32> to vector<32x1xf32>
    %367 = tpu.reciprocal %366 {approx = true} : vector<32x1xf32> -> vector<32x1xf32>
    %368 = vector.broadcast %367 : vector<32x1xf32> to vector<32x32xf32>
    %369 = arith.mulf %364, %368 : vector<32x32xf32>
    %cst_285 = arith.constant dense<0.000000e+00> : vector<32x8xf32>
    %370 = tpu.matmul %369, %358, %cst_285 {dimension_numbers = #tpu.dot_dimension_numbers<[1], [0], [0], [1], [0, 0, 1, 1], [], []>} : vector<32x32xf32>, vector<32x8xf32>, vector<32x8xf32> -> vector<32x8xf32>
    %c3_286 = arith.constant 3 : index
    %c0_287 = arith.constant 0 : index
    %c0_288 = arith.constant 0 : index
    %371 = vector.load %arg37[%c3_286, %c0_287, %c0_288] : memref<4x8x32xf32, #tpu.memory_space<vmem>>, vector<1x8x32xf32>
    %372 = vector.shape_cast %371 : vector<1x8x32xf32> to vector<8x32xf32>
    %cst_289 = arith.constant dense<0.000000e+00> : vector<32x32xf32>
    %373 = tpu.matmul %370, %372, %cst_289 {dimension_numbers = #tpu.dot_dimension_numbers<[1], [0], [0], [1], [0, 0, 1, 1], [], []>} : vector<32x8xf32>, vector<8x32xf32>, vector<32x32xf32> -> vector<32x32xf32>
    %374 = arith.addf %337, %373 : vector<32x32xf32>
    %c0_290 = arith.constant 0 : index
    %c0_291 = arith.constant 0 : index
    %375 = vector.load %arg38[%c0_290, %c0_291] : memref<1x32xf32, #tpu.memory_space<vmem>>, vector<1x32xf32>
    %376 = vector.broadcast %375 : vector<1x32xf32> to vector<32x32xf32>
    %377 = arith.addf %374, %376 : vector<32x32xf32>
    %378 = arith.addf %377, %206 : vector<32x32xf32>
    %c0_292 = arith.constant 0 : index
    %c0_293 = arith.constant 0 : index
    %379 = vector.load %arg45[%c0_292, %c0_293] : memref<1x32xf32, #tpu.memory_space<vmem>>, vector<1x32xf32>
    %380 = vector.broadcast %379 : vector<1x32xf32> to vector<32x32xf32>
    %381 = arith.mulf %378, %380 : vector<32x32xf32>
    %c0_294 = arith.constant 0 : index
    %c0_295 = arith.constant 0 : index
    %382 = vector.load %arg46[%c0_294, %c0_295] : memref<1x32xf32, #tpu.memory_space<vmem>>, vector<1x32xf32>
    %383 = vector.broadcast %382 : vector<1x32xf32> to vector<32x32xf32>
    %384 = arith.addf %381, %383 : vector<32x32xf32>
    %385 = arith.addf %227, %384 : vector<32x32xf32>
    %c0_296 = arith.constant 0 : index
    %c0_297 = arith.constant 0 : index
    %386 = vector.load %arg39[%c0_296, %c0_297] : memref<32x64xf32, #tpu.memory_space<vmem>>, vector<32x64xf32>
    %cst_298 = arith.constant dense<0.000000e+00> : vector<32x64xf32>
    %387 = tpu.matmul %385, %386, %cst_298 {dimension_numbers = #tpu.dot_dimension_numbers<[1], [0], [0], [1], [0, 0, 1, 1], [], []>} : vector<32x32xf32>, vector<32x64xf32>, vector<32x64xf32> -> vector<32x64xf32>
    %c0_299 = arith.constant 0 : index
    %c0_300 = arith.constant 0 : index
    %388 = vector.load %arg40[%c0_299, %c0_300] : memref<1x64xf32, #tpu.memory_space<vmem>>, vector<1x64xf32>
    %389 = vector.broadcast %388 : vector<1x64xf32> to vector<32x64xf32>
    %390 = arith.addf %387, %389 : vector<32x64xf32>
    %cst_301 = arith.constant 0.000000e+00 : f32
    %391 = vector.broadcast %cst_301 : f32 to vector<32x64xf32>
    %392 = arith.maximumf %390, %391 : vector<32x64xf32>
    %c0_302 = arith.constant 0 : index
    %c0_303 = arith.constant 0 : index
    %393 = vector.load %arg41[%c0_302, %c0_303] : memref<64x32xf32, #tpu.memory_space<vmem>>, vector<64x32xf32>
    %cst_304 = arith.constant dense<0.000000e+00> : vector<32x32xf32>
    %394 = tpu.matmul %392, %393, %cst_304 {dimension_numbers = #tpu.dot_dimension_numbers<[1], [0], [0], [1], [0, 0, 1, 1], [], []>} : vector<32x64xf32>, vector<64x32xf32>, vector<32x32xf32> -> vector<32x32xf32>
    %c0_305 = arith.constant 0 : index
    %c0_306 = arith.constant 0 : index
    %395 = vector.load %arg42[%c0_305, %c0_306] : memref<1x32xf32, #tpu.memory_space<vmem>>, vector<1x32xf32>
    %396 = vector.broadcast %395 : vector<1x32xf32> to vector<32x32xf32>
    %397 = arith.addf %394, %396 : vector<32x32xf32>
    %398 = arith.addf %385, %397 : vector<32x32xf32>
    %c0_307 = arith.constant 0 : index
    %c0_308 = arith.constant 0 : index
    %399 = vector.load %arg47[%c0_307, %c0_308] : memref<1x32xf32, #tpu.memory_space<vmem>>, vector<1x32xf32>
    %400 = vector.broadcast %399 : vector<1x32xf32> to vector<32x32xf32>
    %401 = arith.mulf %398, %400 : vector<32x32xf32>
    %c0_309 = arith.constant 0 : index
    %c0_310 = arith.constant 0 : index
    %402 = vector.load %arg48[%c0_309, %c0_310] : memref<1x32xf32, #tpu.memory_space<vmem>>, vector<1x32xf32>
    %403 = vector.broadcast %402 : vector<1x32xf32> to vector<32x32xf32>
    %404 = arith.addf %401, %403 : vector<32x32xf32>
    %cst_311 = arith.constant 0.000000e+00 : f32
    %405 = vector.broadcast %cst_311 : f32 to vector<32x32xf32>
    %406 = arith.maximumf %404, %405 : vector<32x32xf32>
    %c0_312 = arith.constant 0 : index
    %c0_313 = arith.constant 0 : index
    %407 = vector.load %arg2[%c0_312, %c0_313] : memref<2x32xf32, #tpu.memory_space<vmem>>, vector<2x32xf32>
    %cst_314 = arith.constant dense<0.000000e+00> : vector<2x32xf32>
    %408 = tpu.matmul %407, %406, %cst_314 {dimension_numbers = #tpu.dot_dimension_numbers<[1], [0], [0], [1], [0, 0, 1, 1], [], []>} : vector<2x32xf32>, vector<32x32xf32>, vector<2x32xf32> -> vector<2x32xf32>
    %c0_315 = arith.constant 0 : index
    %c0_316 = arith.constant 0 : index
    %409 = vector.load %arg49[%c0_315, %c0_316] : memref<32x32xf32, #tpu.memory_space<vmem>>, vector<32x32xf32>
    %cst_317 = arith.constant dense<0.000000e+00> : vector<2x32xf32>
    %410 = tpu.matmul %408, %409, %cst_317 {dimension_numbers = #tpu.dot_dimension_numbers<[1], [0], [0], [1], [0, 0, 1, 1], [], []>} : vector<2x32xf32>, vector<32x32xf32>, vector<2x32xf32> -> vector<2x32xf32>
    %c0_318 = arith.constant 0 : index
    %c0_319 = arith.constant 0 : index
    %411 = vector.load %arg50[%c0_318, %c0_319] : memref<1x32xf32, #tpu.memory_space<vmem>>, vector<1x32xf32>
    %412 = vector.broadcast %411 : vector<1x32xf32> to vector<2x32xf32>
    %413 = arith.addf %410, %412 : vector<2x32xf32>
    %cst_320 = arith.constant 0.000000e+00 : f32
    %414 = vector.broadcast %cst_320 : f32 to vector<2x32xf32>
    %415 = arith.maximumf %413, %414 : vector<2x32xf32>
    %c0_321 = arith.constant 0 : index
    %c0_322 = arith.constant 0 : index
    %416 = vector.load %arg51[%c0_321, %c0_322] : memref<32x32xf32, #tpu.memory_space<vmem>>, vector<32x32xf32>
    %cst_323 = arith.constant dense<0.000000e+00> : vector<2x32xf32>
    %417 = tpu.matmul %415, %416, %cst_323 {dimension_numbers = #tpu.dot_dimension_numbers<[1], [0], [0], [1], [0, 0, 1, 1], [], []>} : vector<2x32xf32>, vector<32x32xf32>, vector<2x32xf32> -> vector<2x32xf32>
    %c0_324 = arith.constant 0 : index
    %c0_325 = arith.constant 0 : index
    %418 = vector.load %arg52[%c0_324, %c0_325] : memref<1x32xf32, #tpu.memory_space<vmem>>, vector<1x32xf32>
    %419 = vector.broadcast %418 : vector<1x32xf32> to vector<2x32xf32>
    %420 = arith.addf %417, %419 : vector<2x32xf32>
    %cst_326 = arith.constant 0.000000e+00 : f32
    %421 = vector.broadcast %cst_326 : f32 to vector<2x32xf32>
    %422 = arith.maximumf %420, %421 : vector<2x32xf32>
    %c0_327 = arith.constant 0 : index
    %c0_328 = arith.constant 0 : index
    %423 = vector.load %arg53[%c0_327, %c0_328] : memref<32x8xf32, #tpu.memory_space<vmem>>, vector<32x8xf32>
    %cst_329 = arith.constant dense<0.000000e+00> : vector<2x8xf32>
    %424 = tpu.matmul %422, %423, %cst_329 {dimension_numbers = #tpu.dot_dimension_numbers<[1], [0], [0], [1], [0, 0, 1, 1], [], []>} : vector<2x32xf32>, vector<32x8xf32>, vector<2x8xf32> -> vector<2x8xf32>
    %c0_330 = arith.constant 0 : index
    %c0_331 = arith.constant 0 : index
    %425 = vector.load %arg54[%c0_330, %c0_331] : memref<1x8xf32, #tpu.memory_space<vmem>>, vector<1x8xf32>
    %426 = vector.broadcast %425 : vector<1x8xf32> to vector<2x8xf32>
    %427 = arith.addf %424, %426 : vector<2x8xf32>
    %c0_332 = arith.constant 0 : index
    %c0_333 = arith.constant 0 : index
    %428 = vector.load %arg55[%c0_332, %c0_333] : memref<2x8xf32, #tpu.memory_space<vmem>>, vector<2x8xf32>
    tpu.vector_store %arg55[%c0_332, %c0_333], %427 {strides = array<i32>} : memref<2x8xf32, #tpu.memory_space<vmem>>, vector<2x8xf32>,
    return
  }
}

</mosaic_0001>

<llo_original>
// kernel: graph_gps_forward.1
$region0: #{graph_gps_forward.1}
  #allocation0 [shape = 'u32[]', space=smem, size = 0x4, offset = 0x4, fixed_abs, tag = 'smem constant byte address 0x4 - core index']
  #allocation1 [shape = 'u32[72,128]{1,0:T(1,128)}', space=vmem, size = 0x9000, scoped, tag = 'internal scratch']
  %s0 = inlined_call_operand.smem [shape: u32[56], index: -1, kind: input, shape index: {}]
  %s1 = sld [smem:[%s0]]
  %s2 = scalar_lea.smem %s0, 1
  %s3 = sld [smem:[%s2]]
  %s4 = scalar_lea.smem %s0, 2
  %s5 = sld [smem:[%s4]]
  %s6 = scalar_lea.smem %s0, 3
  %s7 = sld [smem:[%s6]]
  %s8 = scalar_lea.smem %s0, 4
  %s9 = sld [smem:[%s8]]
  %s10 = scalar_lea.smem %s0, 5
  %s11 = sld [smem:[%s10]]
  %s12 = scalar_lea.smem %s0, 6
  %s13 = sld [smem:[%s12]]
  %s14 = scalar_lea.smem %s0, 7
  %s15 = sld [smem:[%s14]]
  %s16 = scalar_lea.smem %s0, 8
  %s17 = sld [smem:[%s16]]
  %s18 = scalar_lea.smem %s0, 9
  %s19 = sld [smem:[%s18]]
  %s20 = scalar_lea.smem %s0, 10
  %s21 = sld [smem:[%s20]]
  %s22 = scalar_lea.smem %s0, 11
  %s23 = sld [smem:[%s22]]
  %s24 = scalar_lea.smem %s0, 12
  %s25 = sld [smem:[%s24]]
  %s26 = scalar_lea.smem %s0, 13
  %s27 = sld [smem:[%s26]]
  %s28 = scalar_lea.smem %s0, 14
  %s29 = sld [smem:[%s28]]
  %s30 = scalar_lea.smem %s0, 15
  %s31 = sld [smem:[%s30]]
  %s32 = scalar_lea.smem %s0, 16
  %s33 = sld [smem:[%s32]]
  %s34 = scalar_lea.smem %s0, 17
  %s35 = sld [smem:[%s34]]
  %s36 = scalar_lea.smem %s0, 18
  %s37 = sld [smem:[%s36]]
  %s38 = scalar_lea.smem %s0, 19
  %s39 = sld [smem:[%s38]]
  %s40 = scalar_lea.smem %s0, 20
  %s41 = sld [smem:[%s40]]
  %s42 = scalar_lea.smem %s0, 21
  %s43 = sld [smem:[%s42]]
  %s44 = scalar_lea.smem %s0, 22
  %s45 = sld [smem:[%s44]]
  %s46 = scalar_lea.smem %s0, 23
  %s47 = sld [smem:[%s46]]
  %s48 = scalar_lea.smem %s0, 24
  %s49 = sld [smem:[%s48]]
  %s50 = scalar_lea.smem %s0, 25
  %s51 = sld [smem:[%s50]]
  %s52 = scalar_lea.smem %s0, 26
  %s53 = sld [smem:[%s52]]
  %s54 = scalar_lea.smem %s0, 27
  %s55 = sld [smem:[%s54]]
  %s56 = scalar_lea.smem %s0, 28
  %s57 = sld [smem:[%s56]]
  %s58 = scalar_lea.smem %s0, 29
  %s59 = sld [smem:[%s58]]
  %s60 = scalar_lea.smem %s0, 30
  %s61 = sld [smem:[%s60]]
  %s62 = scalar_lea.smem %s0, 31
  %s63 = sld [smem:[%s62]]
  %s64 = scalar_lea.smem %s0, 32
  %s65 = sld [smem:[%s64]]
  %s66 = scalar_lea.smem %s0, 33
  %s67 = sld [smem:[%s66]]
  %s68 = scalar_lea.smem %s0, 34
  %s69 = sld [smem:[%s68]]
  %s70 = scalar_lea.smem %s0, 35
  %s71 = sld [smem:[%s70]]
  %s72 = scalar_lea.smem %s0, 36
  %s73 = sld [smem:[%s72]]
  %s74 = scalar_lea.smem %s0, 37
  %s75 = sld [smem:[%s74]]
  %s76 = scalar_lea.smem %s0, 38
  %s77 = sld [smem:[%s76]]
  %s78 = scalar_lea.smem %s0, 39
  %s79 = sld [smem:[%s78]]
  %s80 = scalar_lea.smem %s0, 40
  %s81 = sld [smem:[%s80]]
  %s82 = scalar_lea.smem %s0, 41
  %s83 = sld [smem:[%s82]]
  %s84 = scalar_lea.smem %s0, 42
  %s85 = sld [smem:[%s84]]
  %s86 = scalar_lea.smem %s0, 43
  %s87 = sld [smem:[%s86]]
  %s88 = scalar_lea.smem %s0, 44
  %s89 = sld [smem:[%s88]]
  %s90 = scalar_lea.smem %s0, 45
  %s91 = sld [smem:[%s90]]
  %s92 = scalar_lea.smem %s0, 46
  %s93 = sld [smem:[%s92]]
  %s94 = scalar_lea.smem %s0, 47
  %s95 = sld [smem:[%s94]]
  %s96 = scalar_lea.smem %s0, 48
  %s97 = sld [smem:[%s96]]
  %s98 = scalar_lea.smem %s0, 49
  %s99 = sld [smem:[%s98]]
  %s100 = scalar_lea.smem %s0, 50
  %s101 = sld [smem:[%s100]]
  %s102 = scalar_lea.smem %s0, 51
  %s103 = sld [smem:[%s102]]
  %s104 = scalar_lea.smem %s0, 52
  %s105 = sld [smem:[%s104]]
  %s106 = scalar_lea.smem %s0, 53
  %s107 = sld [smem:[%s106]]
  %s108 = scalar_lea.smem %s0, 54
  %s109 = sld [smem:[%s108]]
  %s110 = scalar_lea.smem %s0, 55
  %s111 = sld [smem:[%s110]]
  %s112 = sld [smem:[#allocation0]]
  $region258: #{graph_gps_forward.1} parent=0
    _
  %s114 = ssub.s32 1, %s112
  %s115 = scalar_select 0, %s114, %s112
  $region1: #{graph_gps_forward.1} parent=0
    #allocation2 [shape = 'u8[512]{0}', space=vmem, size = 0x400, scoped, tag = 'input window, operand 45, single buffered']
    #allocation3 [shape = 's32[1]{0}', space=sflag, size = 0x4, scoped, tag = 'scoped memory for graph_gps_forward.1']
    #allocation4 [shape = 's32[1]{0}', space=sflag, size = 0x4, scoped, tag = 'scoped memory for graph_gps_forward.1']
    #allocation5 [shape = 'u8[512]{0}', space=vmem, size = 0x400, scoped, tag = 'input window, operand 46, single buffered']
    #allocation6 [shape = 's32[1]{0}', space=sflag, size = 0x4, scoped, tag = 'scoped memory for graph_gps_forward.1']
    #allocation7 [shape = 'u8[512]{0}', space=vmem, size = 0x400, scoped, tag = 'input window, operand 47, single buffered']
    #allocation8 [shape = 'u8[512]{0}', space=vmem, size = 0x400, scoped, tag = 'input window, operand 48, single buffered']
    #allocation9 [shape = 's32[1]{0}', space=sflag, size = 0x4, scoped, tag = 'scoped memory for graph_gps_forward.1']
    #allocation10 [shape = 'u8[512]{0}', space=vmem, size = 0x400, scoped, tag = 'input window, operand 50, single buffered']
    #allocation11 [shape = 'u8[512]{0}', space=vmem, size = 0x400, scoped, tag = 'input window, operand 52, single buffered']
    #allocation12 [shape = 's32[1]{0}', space=sflag, size = 0x4, scoped, tag = 'scoped memory for graph_gps_forward.1']
    #allocation13 [shape = 'u8[512]{0}', space=vmem, size = 0x400, scoped, tag = 'input window, operand 54, single buffered']
    #allocation14 [shape = 'u8[1024]{0}', space=vmem, size = 0x400, scoped, tag = 'output window, operand 0, single buffered']
    %116 = vsyncpa [#allocation3], 0
    %117 = vsyncpa [#allocation6], 0
    %118 = vsyncpa [#allocation9], 0
    %119 = vsyncpa [#allocation12], 0
    %120 = vsyncpa [#allocation4], 0
    // Predicated region
    $region2: #{graph_gps_forward.1} parent=1 // pred_check
      _
    $region3: #{graph_gps_forward.1} parent=1 // pred_check_branch
      %122 = sbr.rel (0) target = $region5
    $region4: #{graph_gps_forward.1} parent=1 // pred_region
      _
    $region5: #{graph_gps_forward.1} parent=1 // pred_fallthru
      _
    // Predicated region
    $region6: #{graph_gps_forward.1} parent=1 // pred_check
      _
    $region7: #{graph_gps_forward.1} parent=1 // pred_check_branch
      %124 = sbr.rel (0) target = $region9
    $region8: #{graph_gps_forward.1} parent=1 // pred_region
      _
    $region9: #{graph_gps_forward.1} parent=1 // pred_fallthru
      _
    // Predicated region
    $region10: #{graph_gps_forward.1} parent=1 // pred_check
      _
    $region11: #{graph_gps_forward.1} parent=1 // pred_check_branch
      %126 = sbr.rel (0) target = $region13
    $region12: #{graph_gps_forward.1} parent=1 // pred_region
      _
    $region13: #{graph_gps_forward.1} parent=1 // pred_fallthru
      _
    // Predicated region
    $region14: #{graph_gps_forward.1} parent=1 // pred_check
      _
    $region15: #{graph_gps_forward.1} parent=1 // pred_check_branch
      %128 = sbr.rel (0) target = $region17
    $region16: #{graph_gps_forward.1} parent=1 // pred_region
      _
    $region17: #{graph_gps_forward.1} parent=1 // pred_fallthru
      _
    // Predicated region
    $region18: #{graph_gps_forward.1} parent=1 // pred_check
      _
    $region19: #{graph_gps_forward.1} parent=1 // pred_check_branch
      %130 = sbr.rel (0) target = $region21
    $region20: #{graph_gps_forward.1} parent=1 // pred_region
      _
    $region21: #{graph_gps_forward.1} parent=1 // pred_fallthru
      _
    // Predicated region
    $region22: #{graph_gps_forward.1} parent=1 // pred_check
      _
    $region23: #{graph_gps_forward.1} parent=1 // pred_check_branch
      %132 = sbr.rel (0) target = $region25
    $region24: #{graph_gps_forward.1} parent=1 // pred_region
      _
    $region25: #{graph_gps_forward.1} parent=1 // pred_fallthru
      _
    // Predicated region
    $region26: #{graph_gps_forward.1} parent=1 // pred_check
      _
    $region27: #{graph_gps_forward.1} parent=1 // pred_check_branch
      %134 = sbr.rel (0) target = $region29
    $region28: #{graph_gps_forward.1} parent=1 // pred_region
      _
    $region29: #{graph_gps_forward.1} parent=1 // pred_fallthru
      _
    // Predicated region
    $region30: #{graph_gps_forward.1} parent=1 // pred_check
      _
    $region31: #{graph_gps_forward.1} parent=1 // pred_check_branch
      %136 = sbr.rel (0) target = $region33
    $region32: #{graph_gps_forward.1} parent=1 // pred_region
      _
    $region33: #{graph_gps_forward.1} parent=1 // pred_fallthru
      _
    // Predicated region
    $region34: #{graph_gps_forward.1} parent=1 // pred_check
      _
    $region35: #{graph_gps_forward.1} parent=1 // pred_check_branch
      %138 = sbr.rel (0) target = $region37
    $region36: #{graph_gps_forward.1} parent=1 // pred_region
      _
    $region37: #{graph_gps_forward.1} parent=1 // pred_fallthru
      _
    // Predicated region
    $region38: #{graph_gps_forward.1} parent=1 // pred_check
      _
    $region39: #{graph_gps_forward.1} parent=1 // pred_check_branch
      %140 = sbr.rel (0) target = $region41
    $region40: #{graph_gps_forward.1} parent=1 // pred_region
      _
    $region41: #{graph_gps_forward.1} parent=1 // pred_fallthru
      _
    // Predicated region
    $region42: #{graph_gps_forward.1} parent=1 // pred_check
      _
    $region43: #{graph_gps_forward.1} parent=1 // pred_check_branch
      %142 = sbr.rel (0) target = $region45
    $region44: #{graph_gps_forward.1} parent=1 // pred_region
      _
    $region45: #{graph_gps_forward.1} parent=1 // pred_fallthru
      _
    // Predicated region
    $region46: #{graph_gps_forward.1} parent=1 // pred_check
      _
    $region47: #{graph_gps_forward.1} parent=1 // pred_check_branch
      %144 = sbr.rel (0) target = $region49
    $region48: #{graph_gps_forward.1} parent=1 // pred_region
      _
    $region49: #{graph_gps_forward.1} parent=1 // pred_fallthru
      _
    // Predicated region
    $region50: #{graph_gps_forward.1} parent=1 // pred_check
      _
    $region51: #{graph_gps_forward.1} parent=1 // pred_check_branch
      %146 = sbr.rel (0) target = $region53
    $region52: #{graph_gps_forward.1} parent=1 // pred_region
      _
    $region53: #{graph_gps_forward.1} parent=1 // pred_fallthru
      _
    // Predicated region
    $region54: #{graph_gps_forward.1} parent=1 // pred_check
      _
    $region55: #{graph_gps_forward.1} parent=1 // pred_check_branch
      %148 = sbr.rel (0) target = $region57
    $region56: #{graph_gps_forward.1} parent=1 // pred_region
      _
    $region57: #{graph_gps_forward.1} parent=1 // pred_fallthru
      _
    // Predicated region
    $region58: #{graph_gps_forward.1} parent=1 // pred_check
      _
    $region59: #{graph_gps_forward.1} parent=1 // pred_check_branch
      %150 = sbr.rel (0) target = $region61
    $region60: #{graph_gps_forward.1} parent=1 // pred_region
      _
    $region61: #{graph_gps_forward.1} parent=1 // pred_fallthru
      _
    // Predicated region
    $region62: #{graph_gps_forward.1} parent=1 // pred_check
      _
    $region63: #{graph_gps_forward.1} parent=1 // pred_check_branch
      %152 = sbr.rel (0) target = $region65
    $region64: #{graph_gps_forward.1} parent=1 // pred_region
      _
    $region65: #{graph_gps_forward.1} parent=1 // pred_fallthru
      _
    // Predicated region
    $region66: #{graph_gps_forward.1} parent=1 // pred_check
      _
    $region67: #{graph_gps_forward.1} parent=1 // pred_check_branch
      %154 = sbr.rel (0) target = $region69
    $region68: #{graph_gps_forward.1} parent=1 // pred_region
      _
    $region69: #{graph_gps_forward.1} parent=1 // pred_fallthru
      _
    // Predicated region
    $region70: #{graph_gps_forward.1} parent=1 // pred_check
      _
    $region71: #{graph_gps_forward.1} parent=1 // pred_check_branch
      %156 = sbr.rel (0) target = $region73
    $region72: #{graph_gps_forward.1} parent=1 // pred_region
      _
    $region73: #{graph_gps_forward.1} parent=1 // pred_fallthru
      _
    // Predicated region
    $region74: #{graph_gps_forward.1} parent=1 // pred_check
      _
    $region75: #{graph_gps_forward.1} parent=1 // pred_check_branch
      %158 = sbr.rel (0) target = $region77
    $region76: #{graph_gps_forward.1} parent=1 // pred_region
      _
    $region77: #{graph_gps_forward.1} parent=1 // pred_fallthru
      _
    // Predicated region
    $region78: #{graph_gps_forward.1} parent=1 // pred_check
      _
    $region79: #{graph_gps_forward.1} parent=1 // pred_check_branch
      %160 = sbr.rel (0) target = $region81
    $region80: #{graph_gps_forward.1} parent=1 // pred_region
      _
    $region81: #{graph_gps_forward.1} parent=1 // pred_fallthru
      _
    // Predicated region
    $region82: #{graph_gps_forward.1} parent=1 // pred_check
      _
    $region83: #{graph_gps_forward.1} parent=1 // pred_check_branch
      %162 = sbr.rel (0) target = $region85
    $region84: #{graph_gps_forward.1} parent=1 // pred_region
      _
    $region85: #{graph_gps_forward.1} parent=1 // pred_fallthru
      _
    // Predicated region
    $region86: #{graph_gps_forward.1} parent=1 // pred_check
      _
    $region87: #{graph_gps_forward.1} parent=1 // pred_check_branch
      %164 = sbr.rel (0) target = $region89
    $region88: #{graph_gps_forward.1} parent=1 // pred_region
      _
    $region89: #{graph_gps_forward.1} parent=1 // pred_fallthru
      _
    // Predicated region
    $region90: #{graph_gps_forward.1} parent=1 // pred_check
      _
    $region91: #{graph_gps_forward.1} parent=1 // pred_check_branch
      %166 = sbr.rel (0) target = $region93
    $region92: #{graph_gps_forward.1} parent=1 // pred_region
      _
    $region93: #{graph_gps_forward.1} parent=1 // pred_fallthru
      _
    // Predicated region
    $region94: #{graph_gps_forward.1} parent=1 // pred_check
      _
    $region95: #{graph_gps_forward.1} parent=1 // pred_check_branch
      %168 = sbr.rel (0) target = $region97
    $region96: #{graph_gps_forward.1} parent=1 // pred_region
      _
    $region97: #{graph_gps_forward.1} parent=1 // pred_fallthru
      _
    // Predicated region
    $region98: #{graph_gps_forward.1} parent=1 // pred_check
      _
    $region99: #{graph_gps_forward.1} parent=1 // pred_check_branch
      %170 = sbr.rel (0) target = $region101
    $region100: #{graph_gps_forward.1} parent=1 // pred_region
      _
    $region101: #{graph_gps_forward.1} parent=1 // pred_fallthru
      _
    // Predicated region
    $region102: #{graph_gps_forward.1} parent=1 // pred_check
      _
    $region103: #{graph_gps_forward.1} parent=1 // pred_check_branch
      %172 = sbr.rel (0) target = $region105
    $region104: #{graph_gps_forward.1} parent=1 // pred_region
      _
    $region105: #{graph_gps_forward.1} parent=1 // pred_fallthru
      _
    // Predicated region
    $region106: #{graph_gps_forward.1} parent=1 // pred_check
      _
    $region107: #{graph_gps_forward.1} parent=1 // pred_check_branch
      %174 = sbr.rel (0) target = $region109
    $region108: #{graph_gps_forward.1} parent=1 // pred_region
      _
    $region109: #{graph_gps_forward.1} parent=1 // pred_fallthru
      _
    // Predicated region
    $region110: #{graph_gps_forward.1} parent=1 // pred_check
      _
    $region111: #{graph_gps_forward.1} parent=1 // pred_check_branch
      %176 = sbr.rel (0) target = $region113
    $region112: #{graph_gps_forward.1} parent=1 // pred_region
      _
    $region113: #{graph_gps_forward.1} parent=1 // pred_fallthru
      _
    // Predicated region
    $region114: #{graph_gps_forward.1} parent=1 // pred_check
      _
    $region115: #{graph_gps_forward.1} parent=1 // pred_check_branch
      %178 = sbr.rel (0) target = $region117
    $region116: #{graph_gps_forward.1} parent=1 // pred_region
      _
    $region117: #{graph_gps_forward.1} parent=1 // pred_fallthru
      _
    // Predicated region
    $region118: #{graph_gps_forward.1} parent=1 // pred_check
      _
    $region119: #{graph_gps_forward.1} parent=1 // pred_check_branch
      %180 = sbr.rel (0) target = $region121
    $region120: #{graph_gps_forward.1} parent=1 // pred_region
      _
    $region121: #{graph_gps_forward.1} parent=1 // pred_fallthru
      _
    // Predicated region
    $region122: #{graph_gps_forward.1} parent=1 // pred_check
      _
    $region123: #{graph_gps_forward.1} parent=1 // pred_check_branch
      %182 = sbr.rel (0) target = $region125
    $region124: #{graph_gps_forward.1} parent=1 // pred_region
      _
    $region125: #{graph_gps_forward.1} parent=1 // pred_fallthru
      _
    // Predicated region
    $region126: #{graph_gps_forward.1} parent=1 // pred_check
      _
    $region127: #{graph_gps_forward.1} parent=1 // pred_check_branch
      %184 = sbr.rel (0) target = $region129
    $region128: #{graph_gps_forward.1} parent=1 // pred_region
      _
    $region129: #{graph_gps_forward.1} parent=1 // pred_fallthru
      _
    // Predicated region
    $region130: #{graph_gps_forward.1} parent=1 // pred_check
      _
    $region131: #{graph_gps_forward.1} parent=1 // pred_check_branch
      %186 = sbr.rel (0) target = $region133
    $region132: #{graph_gps_forward.1} parent=1 // pred_region
      _
    $region133: #{graph_gps_forward.1} parent=1 // pred_fallthru
      _
    // Predicated region
    $region134: #{graph_gps_forward.1} parent=1 // pred_check
      _
    $region135: #{graph_gps_forward.1} parent=1 // pred_check_branch
      %188 = sbr.rel (0) target = $region137
    $region136: #{graph_gps_forward.1} parent=1 // pred_region
      _
    $region137: #{graph_gps_forward.1} parent=1 // pred_fallthru
      _
    // Predicated region
    $region138: #{graph_gps_forward.1} parent=1 // pred_check
      _
    $region139: #{graph_gps_forward.1} parent=1 // pred_check_branch
      %190 = sbr.rel (0) target = $region141
    $region140: #{graph_gps_forward.1} parent=1 // pred_region
      _
    $region141: #{graph_gps_forward.1} parent=1 // pred_fallthru
      _
    // Predicated region
    $region142: #{graph_gps_forward.1} parent=1 // pred_check
      _
    $region143: #{graph_gps_forward.1} parent=1 // pred_check_branch
      %192 = sbr.rel (0) target = $region145
    $region144: #{graph_gps_forward.1} parent=1 // pred_region
      _
    $region145: #{graph_gps_forward.1} parent=1 // pred_fallthru
      _
    // Predicated region
    $region146: #{graph_gps_forward.1} parent=1 // pred_check
      _
    $region147: #{graph_gps_forward.1} parent=1 // pred_check_branch
      %194 = sbr.rel (0) target = $region149
    $region148: #{graph_gps_forward.1} parent=1 // pred_region
      _
    $region149: #{graph_gps_forward.1} parent=1 // pred_fallthru
      _
    // Predicated region
    $region150: #{graph_gps_forward.1} parent=1 // pred_check
      _
    $region151: #{graph_gps_forward.1} parent=1 // pred_check_branch
      %196 = sbr.rel (0) target = $region153
    $region152: #{graph_gps_forward.1} parent=1 // pred_region
      _
    $region153: #{graph_gps_forward.1} parent=1 // pred_fallthru
      _
    // Predicated region
    $region154: #{graph_gps_forward.1} parent=1 // pred_check
      _
    $region155: #{graph_gps_forward.1} parent=1 // pred_check_branch
      %198 = sbr.rel (0) target = $region157
    $region156: #{graph_gps_forward.1} parent=1 // pred_region
      _
    $region157: #{graph_gps_forward.1} parent=1 // pred_fallthru
      _
    // Predicated region
    $region158: #{graph_gps_forward.1} parent=1 // pred_check
      _
    $region159: #{graph_gps_forward.1} parent=1 // pred_check_branch
      %200 = sbr.rel (0) target = $region161
    $region160: #{graph_gps_forward.1} parent=1 // pred_region
      _
    $region161: #{graph_gps_forward.1} parent=1 // pred_fallthru
      _
    // Predicated region
    $region162: #{graph_gps_forward.1} parent=1 // pred_check
      _
    $region163: #{graph_gps_forward.1} parent=1 // pred_check_branch
      %202 = sbr.rel (0) target = $region165
    $region164: #{graph_gps_forward.1} parent=1 // pred_region
      _
    $region165: #{graph_gps_forward.1} parent=1 // pred_fallthru
      _
    // Predicated region
    $region166: #{graph_gps_forward.1} parent=1 // pred_check
      _
    $region167: #{graph_gps_forward.1} parent=1 // pred_check_branch
      %204 = sbr.rel (0) target = $region169
    $region168: #{graph_gps_forward.1} parent=1 // pred_region
      _
    $region169: #{graph_gps_forward.1} parent=1 // pred_fallthru
      _
    // Predicated region
    $region170: #{graph_gps_forward.1} parent=1 // pred_check
      _
    $region171: #{graph_gps_forward.1} parent=1 // pred_check_branch
      %206 = sbr.rel (0) target = $region173
    $region172: #{graph_gps_forward.1} parent=1 // pred_region
      _
    $region173: #{graph_gps_forward.1} parent=1 // pred_fallthru
      _
    // Predicated region
    $region174: #{graph_gps_forward.1} parent=1 // pred_check
      _
    $region175: #{graph_gps_forward.1} parent=1 // pred_check_branch
      %208 = sbr.rel (0) target = $region177
    $region176: #{graph_gps_forward.1} parent=1 // pred_region
      _
    $region177: #{graph_gps_forward.1} parent=1 // pred_fallthru
      _
    // Predicated region
    $region178: #{graph_gps_forward.1} parent=1 // pred_check
      _
    $region179: #{graph_gps_forward.1} parent=1 // pred_check_branch
      %210 = sbr.rel (0) target = $region181
    $region180: #{graph_gps_forward.1} parent=1 // pred_region
      _
    $region181: #{graph_gps_forward.1} parent=1 // pred_fallthru
      _
    // Predicated region
    $region182: #{graph_gps_forward.1} parent=1 // pred_check
      _
    $region183: #{graph_gps_forward.1} parent=1 // pred_check_branch
      %212 = sbr.rel (0) target = $region185
    $region184: #{graph_gps_forward.1} parent=1 // pred_region
      %214 = vsyncadd [#allocation3], 0
      %s216 = sshll.u32 %s91, 4
      %s217 = int_to_ptr.hbm [resolvable:$true] %s216
      %s218 = sshll.u32 [#allocation2], 4
      %s219 = int_to_ptr.vmem [resolvable:$true] %s218
      %221 = dma.hbm_to_vmem [thread:$0]  %s217, 16, %s219, [#allocation3]
    $region185: #{graph_gps_forward.1} parent=1 // pred_fallthru
      _
    // Predicated region
    $region186: #{graph_gps_forward.1} parent=1 // pred_check
      _
    $region187: #{graph_gps_forward.1} parent=1 // pred_check_branch
      %223 = sbr.rel (0) target = $region189
    $region188: #{graph_gps_forward.1} parent=1 // pred_region
      %225 = vsyncadd [#allocation6], 0
      %s227 = sshll.u32 %s93, 4
      %s228 = int_to_ptr.hbm [resolvable:$true] %s227
      %s229 = sshll.u32 [#allocation5], 4
      %s230 = int_to_ptr.vmem [resolvable:$true] %s229
      %232 = dma.hbm_to_vmem [thread:$0]  %s228, 16, %s230, [#allocation6]
    $region189: #{graph_gps_forward.1} parent=1 // pred_fallthru
      _
    // Predicated region
    $region190: #{graph_gps_forward.1} parent=1 // pred_check
      _
    $region191: #{graph_gps_forward.1} parent=1 // pred_check_branch
      %234 = sbr.rel (0) target = $region193
    $region192: #{graph_gps_forward.1} parent=1 // pred_region
      %236 = vsyncadd [#allocation6], 0
      %s238 = sshll.u32 %s95, 4
      %s239 = int_to_ptr.hbm [resolvable:$true] %s238
      %s240 = sshll.u32 [#allocation7], 4
      %s241 = int_to_ptr.vmem [resolvable:$true] %s240
      %243 = dma.hbm_to_vmem [thread:$0]  %s239, 16, %s241, [#allocation6]
    $region193: #{graph_gps_forward.1} parent=1 // pred_fallthru
      _
    // Predicated region
    $region194: #{graph_gps_forward.1} parent=1 // pred_check
      _
    $region195: #{graph_gps_forward.1} parent=1 // pred_check_branch
      %245 = sbr.rel (0) target = $region197
    $region196: #{graph_gps_forward.1} parent=1 // pred_region
      %247 = vsyncadd [#allocation9], 0
      %s249 = sshll.u32 %s97, 4
      %s250 = int_to_ptr.hbm [resolvable:$true] %s249
      %s251 = sshll.u32 [#allocation8], 4
      %s252 = int_to_ptr.vmem [resolvable:$true] %s251
      %254 = dma.hbm_to_vmem [thread:$0]  %s250, 16, %s252, [#allocation9]
    $region197: #{graph_gps_forward.1} parent=1 // pred_fallthru
      _
    // Predicated region
    $region198: #{graph_gps_forward.1} parent=1 // pred_check
      _
    $region199: #{graph_gps_forward.1} parent=1 // pred_check_branch
      %256 = sbr.rel (0) target = $region201
    $region200: #{graph_gps_forward.1} parent=1 // pred_region
      _
    $region201: #{graph_gps_forward.1} parent=1 // pred_fallthru
      _
    // Predicated region
    $region202: #{graph_gps_forward.1} parent=1 // pred_check
      _
    $region203: #{graph_gps_forward.1} parent=1 // pred_check_branch
      %258 = sbr.rel (0) target = $region205
    $region204: #{graph_gps_forward.1} parent=1 // pred_region
      %260 = vsyncadd [#allocation9], 0
      %s262 = sshll.u32 %s101, 4
      %s263 = int_to_ptr.hbm [resolvable:$true] %s262
      %s264 = sshll.u32 [#allocation10], 4
      %s265 = int_to_ptr.vmem [resolvable:$true] %s264
      %267 = dma.hbm_to_vmem [thread:$0]  %s263, 16, %s265, [#allocation9]
    $region205: #{graph_gps_forward.1} parent=1 // pred_fallthru
      _
    // Predicated region
    $region206: #{graph_gps_forward.1} parent=1 // pred_check
      _
    $region207: #{graph_gps_forward.1} parent=1 // pred_check_branch
      %269 = sbr.rel (0) target = $region209
    $region208: #{graph_gps_forward.1} parent=1 // pred_region
      _
    $region209: #{graph_gps_forward.1} parent=1 // pred_fallthru
      _
    // Predicated region
    $region210: #{graph_gps_forward.1} parent=1 // pred_check
      _
    $region211: #{graph_gps_forward.1} parent=1 // pred_check_branch
      %271 = sbr.rel (0) target = $region213
    $region212: #{graph_gps_forward.1} parent=1 // pred_region
      %273 = vsyncadd [#allocation12], 0
      %s275 = sshll.u32 %s105, 4
      %s276 = int_to_ptr.hbm [resolvable:$true] %s275
      %s277 = sshll.u32 [#allocation11], 4
      %s278 = int_to_ptr.vmem [resolvable:$true] %s277
      %280 = dma.hbm_to_vmem [thread:$0]  %s276, 16, %s278, [#allocation12]
    $region213: #{graph_gps_forward.1} parent=1 // pred_fallthru
      _
    // Predicated region
    $region214: #{graph_gps_forward.1} parent=1 // pred_check
      _
    $region215: #{graph_gps_forward.1} parent=1 // pred_check_branch
      %282 = sbr.rel (0) target = $region217
    $region216: #{graph_gps_forward.1} parent=1 // pred_region
      _
    $region217: #{graph_gps_forward.1} parent=1 // pred_fallthru
      _
    // Predicated region
    $region218: #{graph_gps_forward.1} parent=1 // pred_check
      _
    $region219: #{graph_gps_forward.1} parent=1 // pred_check_branch
      %284 = sbr.rel (0) target = $region221
    $region220: #{graph_gps_forward.1} parent=1 // pred_region
      %286 = vsyncadd [#allocation12], 0
      %s288 = sshll.u32 %s109, 4
      %s289 = int_to_ptr.hbm [resolvable:$true] %s288
      %s290 = sshll.u32 [#allocation13], 4
      %s291 = int_to_ptr.vmem [resolvable:$true] %s290
      %293 = dma.hbm_to_vmem [thread:$0]  %s289, 16, %s291, [#allocation12]
    $region221: #{graph_gps_forward.1} parent=1 // pred_fallthru
      _
    // Predicated region
    $region222: #{graph_gps_forward.1} parent=1 // pred_check
      _
    $region223: #{graph_gps_forward.1} parent=1 // pred_check_branch
      %295 = sbr.rel (0) target = $region225
    $region224: #{graph_gps_forward.1} parent=1 // pred_region
      %297 = dma.done [#allocation3], 16
    $region225: #{graph_gps_forward.1} parent=1 // pred_fallthru
      _
    // Predicated region
    $region226: #{graph_gps_forward.1} parent=1 // pred_check
      _
    $region227: #{graph_gps_forward.1} parent=1 // pred_check_branch
      %299 = sbr.rel (0) target = $region229
    $region228: #{graph_gps_forward.1} parent=1 // pred_region
      %301 = dma.done [#allocation6], 16
    $region229: #{graph_gps_forward.1} parent=1 // pred_fallthru
      _
    // Predicated region
    $region230: #{graph_gps_forward.1} parent=1 // pred_check
      _
    $region231: #{graph_gps_forward.1} parent=1 // pred_check_branch
      %303 = sbr.rel (0) target = $region233
    $region232: #{graph_gps_forward.1} parent=1 // pred_region
      %305 = dma.done [#allocation6], 16
    $region233: #{graph_gps_forward.1} parent=1 // pred_fallthru
      _
    // Predicated region
    $region234: #{graph_gps_forward.1} parent=1 // pred_check
      _
    $region235: #{graph_gps_forward.1} parent=1 // pred_check_branch
      %307 = sbr.rel (0) target = $region237
    $region236: #{graph_gps_forward.1} parent=1 // pred_region
      %309 = dma.done [#allocation9], 16
    $region237: #{graph_gps_forward.1} parent=1 // pred_fallthru
      _
    // Predicated region
    $region238: #{graph_gps_forward.1} parent=1 // pred_check
      _
    $region239: #{graph_gps_forward.1} parent=1 // pred_check_branch
      %311 = sbr.rel (0) target = $region241
    $region240: #{graph_gps_forward.1} parent=1 // pred_region
      %313 = dma.done [#allocation9], 16
    $region241: #{graph_gps_forward.1} parent=1 // pred_fallthru
      _
    // Predicated region
    $region242: #{graph_gps_forward.1} parent=1 // pred_check
      _
    $region243: #{graph_gps_forward.1} parent=1 // pred_check_branch
      %315 = sbr.rel (0) target = $region245
    $region244: #{graph_gps_forward.1} parent=1 // pred_region
      %317 = dma.done [#allocation12], 16
    $region245: #{graph_gps_forward.1} parent=1 // pred_fallthru
      _
    // Predicated region
    $region246: #{graph_gps_forward.1} parent=1 // pred_check
      _
    $region247: #{graph_gps_forward.1} parent=1 // pred_check_branch
      %319 = sbr.rel (0) target = $region249
    $region248: #{graph_gps_forward.1} parent=1 // pred_region
      %321 = dma.done [#allocation12], 16
    $region249: #{graph_gps_forward.1} parent=1 // pred_fallthru
      _
    %v322 = vld [vmem:[%s3] sm:$0xff]
    %v323 = vld [vmem:[%s3 + $0x8] sm:$0xff]
    %v324 = vld [vmem:[%s3 + $0x10] sm:$0xff]
    %v325 = vld [vmem:[%s3 + $0x18] sm:$0xff]
    %v326 = vld [vmem:[%s1] sm:$0xff]
    %v327 = vld [vmem:[%s1 + $0x8] sm:$0xff]
    %v328 = vld [vmem:[%s1 + $0x10] sm:$0xff]
    %v329 = vld [vmem:[%s1 + $0x18] sm:$0xff]
    %v330 = vld [vmem:[%s7] sm:$0xff]
    %v331 = vld [vmem:[%s7 + $0x8] sm:$0xff]
    %v332 = vld [vmem:[%s7 + $0x10] sm:$0xff]
    %v333 = vld [vmem:[%s7 + $0x18] sm:$0xf]
    %v334 = vld [vmem:[%s9] sm:$0x1]
    %v336 = vperm.slane %v334, 0
    %vm338 = vcmask 228352
    %v340 = vsel %vm338, %v326, 0
    %v343 = vsel %vm338, %v327, 0
    %v346 = vsel %vm338, %v328, 0
    %v349 = vsel %vm338, %v329, 0
    %vm351 = vcmask 1043456
    %v353 = vsel %vm351, %v333, 0
    %355 = vmatpush.msra.mxu0 0.0
    %356 = vmatpush.msra.mxu0 0.0
    %357 = vmatpush.msra.mxu0 0.0
    %358 = vmatpush.msra.mxu0 0.0
    %359 = vmatpush.msra.mxu0 0.0
    %360 = vmatpush.msra.mxu0 0.0
    %361 = vmatpush.msra.mxu0 0.0
    %362 = vmatpush.msra.mxu0 0.0
    %363 = vmatpush.msra.mxu0 0.0
    %364 = vmatpush.msra.mxu0 0.0
    %365 = vmatpush.msra.mxu0 0.0
    %366 = vmatpush.msra.mxu0 0.0
    %367 = vmatpush.msra.mxu0 %v353
    %368 = vmatpush.msra.mxu0 %v332
    %369 = vmatpush.msra.mxu0 %v331
    %370 = vmatpush.msra.mxu0 %v330
    %371 = vmatmul.f32.gmra.mxu0 %v340
    %v372 = vpop.f32.mrf.mxu0
    %v373 = vadd.f32 %v336, %v372
    %374 = vmatmul.f32.gmra.mxu0 %v343
    %v375 = vpop.f32.mrf.mxu0
    %v376 = vadd.f32 %v336, %v375
    %377 = vmatmul.f32.gmra.mxu0 %v346
    %v378 = vpop.f32.mrf.mxu0
    %v379 = vadd.f32 %v336, %v378
    %380 = vmatmul.f32.gmra.mxu0 %v349
    %v381 = vpop.f32.mrf.mxu0
    %v382 = vadd.f32 %v336, %v381
    %383 = vdwg.mxu0
    %vm384 = vcmask 261120
    %v386 = vsel %vm384, %v322, 0
    %v389 = vsel %vm384, %v323, 0
    %v392 = vsel %vm384, %v324, 0
    %v395 = vsel %vm384, %v325, 0
    %397 = vmatpush.msra.mxu0 0.0
    %398 = vmatpush.msra.mxu0 0.0
    %399 = vmatpush.msra.mxu0 0.0
    %400 = vmatpush.msra.mxu0 0.0
    %401 = vmatpush.msra.mxu0 0.0
    %402 = vmatpush.msra.mxu0 0.0
    %403 = vmatpush.msra.mxu0 0.0
    %404 = vmatpush.msra.mxu0 0.0
    %405 = vmatpush.msra.mxu0 0.0
    %406 = vmatpush.msra.mxu0 0.0
    %407 = vmatpush.msra.mxu0 0.0
    %408 = vmatpush.msra.mxu0 0.0
    %409 = vmatpush.msra.mxu0 %v382
    %410 = vmatpush.msra.mxu0 %v379
    %411 = vmatpush.msra.mxu0 %v376
    %412 = vmatpush.msra.mxu0 %v373
    %413 = vmatmul.f32.gmra.mxu0 %v386
    %v414 = vpop.f32.mrf.mxu0
    %v415 = vadd.f32 0.0, %v414
    %416 = vmatmul.f32.gmra.mxu0 %v389
    %v417 = vpop.f32.mrf.mxu0
    %v418 = vadd.f32 0.0, %v417
    %419 = vmatmul.f32.gmra.mxu0 %v392
    %v420 = vpop.f32.mrf.mxu0
    %v421 = vadd.f32 0.0, %v420
    %422 = vmatmul.f32.gmra.mxu0 %v395
    %v423 = vpop.f32.mrf.mxu0
    %v424 = vadd.f32 0.0, %v423
    %425 = vdwg.mxu0
    %v426 = vadd.f32 %v373, %v415
    %v427 = vadd.f32 %v376, %v418
    %v428 = vadd.f32 %v379, %v421
    %v429 = vadd.f32 %v382, %v424
    %v430 = vld [vmem:[%s11] sm:$0xff]
    %v431 = vld [vmem:[%s11 + $0x8] sm:$0xff]
    %v432 = vld [vmem:[%s11 + $0x10] sm:$0xff]
    %v433 = vld [vmem:[%s11 + $0x18] sm:$0xff]
    %v434 = vld [vmem:[%s13] sm:$0x1]
    %v436 = vperm.slane %v434, 0
    %v439 = vsel %vm384, %v426, 0
    %v442 = vsel %vm384, %v427, 0
    %v445 = vsel %vm384, %v428, 0
    %v448 = vsel %vm384, %v429, 0
    %450 = vmatpush.msra.mxu0 0.0
    %451 = vmatpush.msra.mxu0 0.0
    %452 = vmatpush.msra.mxu0 0.0
    %453 = vmatpush.msra.mxu0 0.0
    %454 = vmatpush.msra.mxu0 0.0
    %455 = vmatpush.msra.mxu0 0.0
    %456 = vmatpush.msra.mxu0 0.0
    %457 = vmatpush.msra.mxu0 0.0
    %458 = vmatpush.msra.mxu0 0.0
    %459 = vmatpush.msra.mxu0 0.0
    %460 = vmatpush.msra.mxu0 0.0
    %461 = vmatpush.msra.mxu0 0.0
    %462 = vmatpush.msra.mxu0 %v433
    %463 = vmatpush.msra.mxu0 %v432
    %464 = vmatpush.msra.mxu0 %v431
    %465 = vmatpush.msra.mxu0 %v430
    %466 = vmatmul.f32.gmra.mxu0 %v439
    %v467 = vpop.f32.mrf.mxu0
    %v468 = vadd.f32 %v436, %v467
    %469 = vmatmul.f32.gmra.mxu0 %v442
    %v470 = vpop.f32.mrf.mxu0
    %v471 = vadd.f32 %v436, %v470
    %472 = vmatmul.f32.gmra.mxu0 %v445
    %v473 = vpop.f32.mrf.mxu0
    %v474 = vadd.f32 %v436, %v473
    %475 = vmatmul.f32.gmra.mxu0 %v448
    %v476 = vpop.f32.mrf.mxu0
    %v477 = vadd.f32 %v436, %v476
    %478 = vdwg.mxu0
    %v479 = vmax.f32 %v468, 0.0
    %v480 = vmax.f32 %v471, 0.0
    %v481 = vmax.f32 %v474, 0.0
    %v482 = vmax.f32 %v477, 0.0
    %v483 = vld [vmem:[%s15] sm:$0xff]
    %v484 = vld [vmem:[%s15 + $0x8] sm:$0xff]
    %v485 = vld [vmem:[%s15 + $0x10] sm:$0xff]
    %v486 = vld [vmem:[%s15 + $0x18] sm:$0xff]
    %v487 = vld [vmem:[%s17] sm:$0x1]
    %v489 = vperm.slane %v487, 0
    %v492 = vsel %vm384, %v479, 0
    %v495 = vsel %vm384, %v480, 0
    %v498 = vsel %vm384, %v481, 0
    %v501 = vsel %vm384, %v482, 0
    %503 = vmatpush.msra.mxu0 0.0
    %504 = vmatpush.msra.mxu0 0.0
    %505 = vmatpush.msra.mxu0 0.0
    %506 = vmatpush.msra.mxu0 0.0
    %507 = vmatpush.msra.mxu0 0.0
    %508 = vmatpush.msra.mxu0 0.0
    %509 = vmatpush.msra.mxu0 0.0
    %510 = vmatpush.msra.mxu0 0.0
    %511 = vmatpush.msra.mxu0 0.0
    %512 = vmatpush.msra.mxu0 0.0
    %513 = vmatpush.msra.mxu0 0.0
    %514 = vmatpush.msra.mxu0 0.0
    %515 = vmatpush.msra.mxu0 %v486
    %516 = vmatpush.msra.mxu0 %v485
    %517 = vmatpush.msra.mxu0 %v484
    %518 = vmatpush.msra.mxu0 %v483
    %519 = vmatmul.f32.gmra.mxu0 %v492
    %v520 = vpop.f32.mrf.mxu0
    %v521 = vadd.f32 %v489, %v520
    %522 = vmatmul.f32.gmra.mxu0 %v495
    %v523 = vpop.f32.mrf.mxu0
    %v524 = vadd.f32 %v489, %v523
    %525 = vmatmul.f32.gmra.mxu0 %v498
    %v526 = vpop.f32.mrf.mxu0
    %v527 = vadd.f32 %v489, %v526
    %528 = vmatmul.f32.gmra.mxu0 %v501
    %v529 = vpop.f32.mrf.mxu0
    %v530 = vadd.f32 %v489, %v529
    %531 = vdwg.mxu0
    %v532 = vadd.f32 %v521, %v373
    %v533 = vadd.f32 %v524, %v376
    %v534 = vadd.f32 %v527, %v379
    %v535 = vadd.f32 %v530, %v382
    %v536 = vld [vmem:[%s43] sm:$0x1]
    %v538 = vperm.slane %v536, 0
    %v540 = vmul.f32 %v532, %v538
    %v541 = vmul.f32 %v533, %v538
    %v542 = vmul.f32 %v534, %v538
    %v543 = vmul.f32 %v535, %v538
    %v544 = vld [vmem:[%s45] sm:$0x1]
    %v546 = vperm.slane %v544, 0
    %v548 = vadd.f32 %v540, %v546
    %v549 = vadd.f32 %v541, %v546
    %v550 = vadd.f32 %v542, %v546
    %v551 = vadd.f32 %v543, %v546
    %v552 = vld [vmem:[%s19] sm:$0xff]
    %v553 = vld [vmem:[%s19 + $0x8] sm:$0xff]
    %v554 = vld [vmem:[%s19 + $0x10] sm:$0xff]
    %v555 = vld [vmem:[%s19 + $0x18] sm:$0xff]
    %v556 = vld [vmem:[%s21] sm:$0x1]
    %v558 = vperm.slane %v556, 0
    %v561 = vsel %vm384, %v373, 0
    %v564 = vsel %vm384, %v376, 0
    %v567 = vsel %vm384, %v379, 0
    %v570 = vsel %vm384, %v382, 0
    %572 = vmatpush.msra.mxu0 0.0
    %573 = vmatpush.msra.mxu0 0.0
    %574 = vmatpush.msra.mxu0 0.0
    %575 = vmatpush.msra.mxu0 0.0
    %576 = vmatpush.msra.mxu0 0.0
    %577 = vmatpush.msra.mxu0 0.0
    %578 = vmatpush.msra.mxu0 0.0
    %579 = vmatpush.msra.mxu0 0.0
    %580 = vmatpush.msra.mxu0 0.0
    %581 = vmatpush.msra.mxu0 0.0
    %582 = vmatpush.msra.mxu0 0.0
    %583 = vmatpush.msra.mxu0 0.0
    %584 = vmatpush.msra.mxu0 %v555
    %585 = vmatpush.msra.mxu0 %v554
    %586 = vmatpush.msra.mxu0 %v553
    %587 = vmatpush.msra.mxu0 %v552
    %588 = vmatmul.f32.gmra.mxu0 %v561
    %v589 = vpop.f32.mrf.mxu0
    %v590 = vadd.f32 %v558, %v589
    %591 = vmatmul.f32.gmra.mxu0 %v564
    %v592 = vpop.f32.mrf.mxu0
    %v593 = vadd.f32 %v558, %v592
    %594 = vmatmul.f32.gmra.mxu0 %v567
    %v595 = vpop.f32.mrf.mxu0
    %v596 = vadd.f32 %v558, %v595
    %597 = vmatmul.f32.gmra.mxu0 %v570
    %v598 = vpop.f32.mrf.mxu0
    %v599 = vadd.f32 %v558, %v598
    %600 = vdwg.mxu0
    %v601 = vld [vmem:[%s23] sm:$0xff]
    %v602 = vld [vmem:[%s23 + $0x8] sm:$0xff]
    %v603 = vld [vmem:[%s23 + $0x10] sm:$0xff]
    %v604 = vld [vmem:[%s23 + $0x18] sm:$0xff]
    %v605 = vld [vmem:[%s25] sm:$0x1]
    %v607 = vperm.slane %v605, 0
    %609 = vmatpush.msra.mxu0 0.0
    %610 = vmatpush.msra.mxu0 0.0
    %611 = vmatpush.msra.mxu0 0.0
    %612 = vmatpush.msra.mxu0 0.0
    %613 = vmatpush.msra.mxu0 0.0
    %614 = vmatpush.msra.mxu0 0.0
    %615 = vmatpush.msra.mxu0 0.0
    %616 = vmatpush.msra.mxu0 0.0
    %617 = vmatpush.msra.mxu0 0.0
    %618 = vmatpush.msra.mxu0 0.0
    %619 = vmatpush.msra.mxu0 0.0
    %620 = vmatpush.msra.mxu0 0.0
    %621 = vmatpush.msra.mxu0 %v604
    %622 = vmatpush.msra.mxu0 %v603
    %623 = vmatpush.msra.mxu0 %v602
    %624 = vmatpush.msra.mxu0 %v601
    %625 = vmatmul.f32.gmra.mxu0 %v561
    %v626 = vpop.f32.mrf.mxu0
    %v627 = vadd.f32 %v607, %v626
    %628 = vmatmul.f32.gmra.mxu0 %v564
    %v629 = vpop.f32.mrf.mxu0
    %v630 = vadd.f32 %v607, %v629
    %631 = vmatmul.f32.gmra.mxu0 %v567
    %v632 = vpop.f32.mrf.mxu0
    %v633 = vadd.f32 %v607, %v632
    %634 = vmatmul.f32.gmra.mxu0 %v570
    %v635 = vpop.f32.mrf.mxu0
    %v636 = vadd.f32 %v607, %v635
    %637 = vdwg.mxu0
    %v638 = vld [vmem:[%s27] sm:$0xff]
    %v639 = vld [vmem:[%s27 + $0x8] sm:$0xff]
    %v640 = vld [vmem:[%s27 + $0x10] sm:$0xff]
    %v641 = vld [vmem:[%s27 + $0x18] sm:$0xff]
    %v642 = vld [vmem:[%s29] sm:$0x1]
    %v644 = vperm.slane %v642, 0
    %646 = vmatpush.msra.mxu0 0.0
    %647 = vmatpush.msra.mxu0 0.0
    %648 = vmatpush.msra.mxu0 0.0
    %649 = vmatpush.msra.mxu0 0.0
    %650 = vmatpush.msra.mxu0 0.0
    %651 = vmatpush.msra.mxu0 0.0
    %652 = vmatpush.msra.mxu0 0.0
    %653 = vmatpush.msra.mxu0 0.0
    %654 = vmatpush.msra.mxu0 0.0
    %655 = vmatpush.msra.mxu0 0.0
    %656 = vmatpush.msra.mxu0 0.0
    %657 = vmatpush.msra.mxu0 0.0
    %658 = vmatpush.msra.mxu0 %v641
    %659 = vmatpush.msra.mxu0 %v640
    %660 = vmatpush.msra.mxu0 %v639
    %661 = vmatpush.msra.mxu0 %v638
    %662 = vmatmul.f32.gmra.mxu0 %v561
    %v663 = vpop.f32.mrf.mxu0
    %v664 = vadd.f32 %v644, %v663
    %665 = vmatmul.f32.gmra.mxu0 %v564
    %v666 = vpop.f32.mrf.mxu0
    %v667 = vadd.f32 %v644, %v666
    %668 = vmatmul.f32.gmra.mxu0 %v567
    %v669 = vpop.f32.mrf.mxu0
    %v670 = vadd.f32 %v644, %v669
    %671 = vmatmul.f32.gmra.mxu0 %v570
    %v672 = vpop.f32.mrf.mxu0
    %v673 = vadd.f32 %v644, %v672
    %674 = vdwg.mxu0
    %vm675 = vcmask 64512
    %v677 = vsel %vm675, %v590, 0
    %v680 = vsel %vm675, %v593, 0
    %v683 = vsel %vm675, %v596, 0
    %v686 = vsel %vm675, %v599, 0
    %v689 = vsel %vm675, %v627, 0
    %v692 = vsel %vm675, %v630, 0
    %v695 = vsel %vm675, %v633, 0
    %v698 = vsel %vm675, %v636, 0
    %700 = vmatpush.xpose.msra.mxu0 0.0
    %701 = vmatpush.xpose.msra.mxu0 0.0
    %702 = vmatpush.xpose.msra.mxu0 0.0
    %703 = vmatpush.xpose.msra.mxu0 0.0
    %704 = vmatpush.xpose.msra.mxu0 0.0
    %705 = vmatpush.xpose.msra.mxu0 0.0
    %706 = vmatpush.xpose.msra.mxu0 0.0
    %707 = vmatpush.xpose.msra.mxu0 0.0
    %708 = vmatpush.xpose.msra.mxu0 0.0
    %709 = vmatpush.xpose.msra.mxu0 0.0
    %710 = vmatpush.xpose.msra.mxu0 0.0
    %711 = vmatpush.xpose.msra.mxu0 0.0
    %712 = vmatpush.xpose.msra.mxu0 %v698
    %713 = vmatpush.xpose.msra.mxu0 %v695
    %714 = vmatpush.xpose.msra.mxu0 %v692
    %715 = vmatpush.xpose.msra.mxu0 %v689
    %716 = vmatmul.f32.gmra.mxu0 %v677
    %v717 = vpop.f32.mrf.mxu0
    %v718 = vadd.f32 0.0, %v717
    %719 = vmatmul.f32.gmra.mxu0 %v680
    %v720 = vpop.f32.mrf.mxu0
    %v721 = vadd.f32 0.0, %v720
    %722 = vmatmul.f32.gmra.mxu0 %v683
    %v723 = vpop.f32.mrf.mxu0
    %v724 = vadd.f32 0.0, %v723
    %725 = vmatmul.f32.gmra.mxu0 %v686
    %v726 = vpop.f32.mrf.mxu0
    %v727 = vadd.f32 0.0, %v726
    %728 = vdwg.mxu0
    %v729 = vsel %vm384, %v718, -inf
    %730 = vmax.xlane.f32.xlu0 %v729
    %v731 = vpop.xlane.xlu0 %730
    %v732 = vsel %vm384, %v721, -inf
    %733 = vmax.xlane.f32.xlu0 %v732
    %v734 = vpop.xlane.xlu0 %733
    %v735 = vsel %vm384, %v724, -inf
    %736 = vmax.xlane.f32.xlu0 %v735
    %v737 = vpop.xlane.xlu0 %736
    %v738 = vsel %vm384, %v727, -inf
    %739 = vmax.xlane.f32.xlu0 %v738
    %v740 = vpop.xlane.xlu0 %739
    %v741 = vsub.f32 %v718, %v731
    %v742 = vsub.f32 %v721, %v734
    %v743 = vsub.f32 %v724, %v737
    %v744 = vsub.f32 %v727, %v740
    %v745 = vmul.f32 %v741, 1.442695
    %v746 = vpow.pop %v745
    %v747 = vmul.f32 %v742, 1.442695
    %v748 = vpow.pop %v747
    %v749 = vmul.f32 %v743, 1.442695
    %v750 = vpow.pop %v749
    %v751 = vmul.f32 %v744, 1.442695
    %v752 = vpow.pop %v751
    %v753 = vsel %vm384, %v746, 0.0
    %754 = vadd.xlane.f32.xlu0 %v753
    %v755 = vpop.xlane.xlu0 %754
    %v756 = vsel %vm384, %v748, 0.0
    %757 = vadd.xlane.f32.xlu0 %v756
    %v758 = vpop.xlane.xlu0 %757
    %v759 = vsel %vm384, %v750, 0.0
    %760 = vadd.xlane.f32.xlu0 %v759
    %v761 = vpop.xlane.xlu0 %760
    %v762 = vsel %vm384, %v752, 0.0
    %763 = vadd.xlane.f32.xlu0 %v762
    %v764 = vpop.xlane.xlu0 %763
    %v765 = vrcp.pop %v755
    %v766 = vrcp.pop %v758
    %v767 = vrcp.pop %v761
    %v768 = vrcp.pop %v764
    %v769 = vmul.f32 %v746, %v765
    %v770 = vmul.f32 %v748, %v766
    %v771 = vmul.f32 %v750, %v767
    %v772 = vmul.f32 %v752, %v768
    %v774 = vsel %vm384, %v769, 0
    %v777 = vsel %vm384, %v770, 0
    %v780 = vsel %vm384, %v771, 0
    %v783 = vsel %vm384, %v772, 0
    %785 = vmatpush.msra.mxu0 0.0
    %786 = vmatpush.msra.mxu0 0.0
    %787 = vmatpush.msra.mxu0 0.0
    %788 = vmatpush.msra.mxu0 0.0
    %789 = vmatpush.msra.mxu0 0.0
    %790 = vmatpush.msra.mxu0 0.0
    %791 = vmatpush.msra.mxu0 0.0
    %792 = vmatpush.msra.mxu0 0.0
    %793 = vmatpush.msra.mxu0 0.0
    %794 = vmatpush.msra.mxu0 0.0
    %795 = vmatpush.msra.mxu0 0.0
    %796 = vmatpush.msra.mxu0 0.0
    %797 = vmatpush.msra.mxu0 %v673
    %798 = vmatpush.msra.mxu0 %v670
    %799 = vmatpush.msra.mxu0 %v667
    %800 = vmatpush.msra.mxu0 %v664
    %801 = vmatmul.f32.gmra.mxu0 %v774
    %v802 = vpop.f32.mrf.mxu0
    %v803 = vadd.f32 0.0, %v802
    %804 = vmatmul.f32.gmra.mxu0 %v777
    %v805 = vpop.f32.mrf.mxu0
    %v806 = vadd.f32 0.0, %v805
    %807 = vmatmul.f32.gmra.mxu0 %v780
    %v808 = vpop.f32.mrf.mxu0
    %v809 = vadd.f32 0.0, %v808
    %810 = vmatmul.f32.gmra.mxu0 %v783
    %v811 = vpop.f32.mrf.mxu0
    %v812 = vadd.f32 0.0, %v811
    %813 = vdwg.mxu0
    %v814 = vld [vmem:[%s31] sm:$0xff]
    %s815 = scalar_lea.vmem %s19, 32
    %v816 = vld [vmem:[%s815] sm:$0xff]
    %v817 = vld [vmem:[%s815 + $0x8] sm:$0xff]
    %v818 = vld [vmem:[%s815 + $0x10] sm:$0xff]
    %v819 = vld [vmem:[%s815 + $0x18] sm:$0xff]
    %s820 = scalar_lea.vmem %s21, 1
    %v821 = vld [vmem:[%s820] sm:$0x1]
    %v823 = vperm.slane %v821, 0
    %825 = vmatpush.msra.mxu0 0.0
    %826 = vmatpush.msra.mxu0 0.0
    %827 = vmatpush.msra.mxu0 0.0
    %828 = vmatpush.msra.mxu0 0.0
    %829 = vmatpush.msra.mxu0 0.0
    %830 = vmatpush.msra.mxu0 0.0
    %831 = vmatpush.msra.mxu0 0.0
    %832 = vmatpush.msra.mxu0 0.0
    %833 = vmatpush.msra.mxu0 0.0
    %834 = vmatpush.msra.mxu0 0.0
    %835 = vmatpush.msra.mxu0 0.0
    %836 = vmatpush.msra.mxu0 0.0
    %837 = vmatpush.msra.mxu0 %v819
    %838 = vmatpush.msra.mxu0 %v818
    %839 = vmatpush.msra.mxu0 %v817
    %840 = vmatpush.msra.mxu0 %v816
    %841 = vmatmul.f32.gmra.mxu0 %v561
    %v842 = vpop.f32.mrf.mxu0
    %v843 = vadd.f32 %v823, %v842
    %844 = vmatmul.f32.gmra.mxu0 %v564
    %v845 = vpop.f32.mrf.mxu0
    %v846 = vadd.f32 %v823, %v845
    %847 = vmatmul.f32.gmra.mxu0 %v567
    %v848 = vpop.f32.mrf.mxu0
    %v849 = vadd.f32 %v823, %v848
    %850 = vmatmul.f32.gmra.mxu0 %v570
    %v851 = vpop.f32.mrf.mxu0
    %v852 = vadd.f32 %v823, %v851
    %853 = vdwg.mxu0
    %s854 = scalar_lea.vmem %s23, 32
    %v855 = vld [vmem:[%s854] sm:$0xff]
    %v856 = vld [vmem:[%s854 + $0x8] sm:$0xff]
    %v857 = vld [vmem:[%s854 + $0x10] sm:$0xff]
    %v858 = vld [vmem:[%s854 + $0x18] sm:$0xff]
    %s859 = scalar_lea.vmem %s25, 1
    %v860 = vld [vmem:[%s859] sm:$0x1]
    %v862 = vperm.slane %v860, 0
    %864 = vmatpush.msra.mxu0 0.0
    %865 = vmatpush.msra.mxu0 0.0
    %866 = vmatpush.msra.mxu0 0.0
    %867 = vmatpush.msra.mxu0 0.0
    %868 = vmatpush.msra.mxu0 0.0
    %869 = vmatpush.msra.mxu0 0.0
    %870 = vmatpush.msra.mxu0 0.0
    %871 = vmatpush.msra.mxu0 0.0
    %872 = vmatpush.msra.mxu0 0.0
    %873 = vmatpush.msra.mxu0 0.0
    %874 = vmatpush.msra.mxu0 0.0
    %875 = vmatpush.msra.mxu0 0.0
    %876 = vmatpush.msra.mxu0 %v858
    %877 = vmatpush.msra.mxu0 %v857
    %878 = vmatpush.msra.mxu0 %v856
    %879 = vmatpush.msra.mxu0 %v855
    %880 = vmatmul.f32.gmra.mxu0 %v561
    %v881 = vpop.f32.mrf.mxu0
    %v882 = vadd.f32 %v862, %v881
    %883 = vmatmul.f32.gmra.mxu0 %v564
    %v884 = vpop.f32.mrf.mxu0
    %v885 = vadd.f32 %v862, %v884
    %886 = vmatmul.f32.gmra.mxu0 %v567
    %v887 = vpop.f32.mrf.mxu0
    %v888 = vadd.f32 %v862, %v887
    %889 = vmatmul.f32.gmra.mxu0 %v570
    %v890 = vpop.f32.mrf.mxu0
    %v891 = vadd.f32 %v862, %v890
    %892 = vdwg.mxu0
    %s893 = scalar_lea.vmem %s27, 32
    %v894 = vld [vmem:[%s893] sm:$0xff]
    %v895 = vld [vmem:[%s893 + $0x8] sm:$0xff]
    %v896 = vld [vmem:[%s893 + $0x10] sm:$0xff]
    %v897 = vld [vmem:[%s893 + $0x18] sm:$0xff]
    %s898 = scalar_lea.vmem %s29, 1
    %v899 = vld [vmem:[%s898] sm:$0x1]
    %v901 = vperm.slane %v899, 0
    %903 = vmatpush.msra.mxu0 0.0
    %904 = vmatpush.msra.mxu0 0.0
    %905 = vmatpush.msra.mxu0 0.0
    %906 = vmatpush.msra.mxu0 0.0
    %907 = vmatpush.msra.mxu0 0.0
    %908 = vmatpush.msra.mxu0 0.0
    %909 = vmatpush.msra.mxu0 0.0
    %910 = vmatpush.msra.mxu0 0.0
    %911 = vmatpush.msra.mxu0 0.0
    %912 = vmatpush.msra.mxu0 0.0
    %913 = vmatpush.msra.mxu0 0.0
    %914 = vmatpush.msra.mxu0 0.0
    %915 = vmatpush.msra.mxu0 %v897
    %916 = vmatpush.msra.mxu0 %v896
    %917 = vmatpush.msra.mxu0 %v895
    %918 = vmatpush.msra.mxu0 %v894
    %919 = vmatmul.f32.gmra.mxu0 %v561
    %v920 = vpop.f32.mrf.mxu0
    %v921 = vadd.f32 %v901, %v920
    %922 = vmatmul.f32.gmra.mxu0 %v564
    %v923 = vpop.f32.mrf.mxu0
    %v924 = vadd.f32 %v901, %v923
    %925 = vmatmul.f32.gmra.mxu0 %v567
    %v926 = vpop.f32.mrf.mxu0
    %v927 = vadd.f32 %v901, %v926
    %928 = vmatmul.f32.gmra.mxu0 %v570
    %v929 = vpop.f32.mrf.mxu0
    %v930 = vadd.f32 %v901, %v929
    %931 = vdwg.mxu0
    %v933 = vsel %vm675, %v843, 0
    %v936 = vsel %vm675, %v846, 0
    %v939 = vsel %vm675, %v849, 0
    %v942 = vsel %vm675, %v852, 0
    %v945 = vsel %vm675, %v882, 0
    %v948 = vsel %vm675, %v885, 0
    %v951 = vsel %vm675, %v888, 0
    %v954 = vsel %vm675, %v891, 0
    %956 = vmatpush.xpose.msra.mxu0 0.0
    %957 = vmatpush.xpose.msra.mxu0 0.0
    %958 = vmatpush.xpose.msra.mxu0 0.0
    %959 = vmatpush.xpose.msra.mxu0 0.0
    %960 = vmatpush.xpose.msra.mxu0 0.0
    %961 = vmatpush.xpose.msra.mxu0 0.0
    %962 = vmatpush.xpose.msra.mxu0 0.0
    %963 = vmatpush.xpose.msra.mxu0 0.0
    %964 = vmatpush.xpose.msra.mxu0 0.0
    %965 = vmatpush.xpose.msra.mxu0 0.0
    %966 = vmatpush.xpose.msra.mxu0 0.0
    %967 = vmatpush.xpose.msra.mxu0 0.0
    %968 = vmatpush.xpose.msra.mxu0 %v954
    %969 = vmatpush.xpose.msra.mxu0 %v951
    %970 = vmatpush.xpose.msra.mxu0 %v948
    %971 = vmatpush.xpose.msra.mxu0 %v945
    %972 = vmatmul.f32.gmra.mxu0 %v933
    %v973 = vpop.f32.mrf.mxu0
    %v974 = vadd.f32 0.0, %v973
    %975 = vmatmul.f32.gmra.mxu0 %v936
    %v976 = vpop.f32.mrf.mxu0
    %v977 = vadd.f32 0.0, %v976
    %978 = vmatmul.f32.gmra.mxu0 %v939
    %v979 = vpop.f32.mrf.mxu0
    %v980 = vadd.f32 0.0, %v979
    %981 = vmatmul.f32.gmra.mxu0 %v942
    %v982 = vpop.f32.mrf.mxu0
    %v983 = vadd.f32 0.0, %v982
    %984 = vdwg.mxu0
    %v985 = vsel %vm384, %v974, -inf
    %986 = vmax.xlane.f32.xlu0 %v985
    %v987 = vpop.xlane.xlu0 %986
    %v988 = vsel %vm384, %v977, -inf
    %989 = vmax.xlane.f32.xlu0 %v988
    %v990 = vpop.xlane.xlu0 %989
    %v991 = vsel %vm384, %v980, -inf
    %992 = vmax.xlane.f32.xlu0 %v991
    %v993 = vpop.xlane.xlu0 %992
    %v994 = vsel %vm384, %v983, -inf
    %995 = vmax.xlane.f32.xlu0 %v994
    %v996 = vpop.xlane.xlu0 %995
    %v997 = vsub.f32 %v974, %v987
    %v998 = vsub.f32 %v977, %v990
    %v999 = vsub.f32 %v980, %v993
    %v1000 = vsub.f32 %v983, %v996
    %v1001 = vmul.f32 %v997, 1.442695
    %v1002 = vpow.pop %v1001
    %v1003 = vmul.f32 %v998, 1.442695
    %v1004 = vpow.pop %v1003
    %v1005 = vmul.f32 %v999, 1.442695
    %v1006 = vpow.pop %v1005
    %v1007 = vmul.f32 %v1000, 1.442695
    %v1008 = vpow.pop %v1007
    %v1009 = vsel %vm384, %v1002, 0.0
    %1010 = vadd.xlane.f32.xlu0 %v1009
    %v1011 = vpop.xlane.xlu0 %1010
    %v1012 = vsel %vm384, %v1004, 0.0
    %1013 = vadd.xlane.f32.xlu0 %v1012
    %v1014 = vpop.xlane.xlu0 %1013
    %v1015 = vsel %vm384, %v1006, 0.0
    %1016 = vadd.xlane.f32.xlu0 %v1015
    %v1017 = vpop.xlane.xlu0 %1016
    %v1018 = vsel %vm384, %v1008, 0.0
    %1019 = vadd.xlane.f32.xlu0 %v1018
    %v1020 = vpop.xlane.xlu0 %1019
    %v1021 = vrcp.pop %v1011
    %v1022 = vrcp.pop %v1014
    %v1023 = vrcp.pop %v1017
    %v1024 = vrcp.pop %v1020
    %v1025 = vmul.f32 %v1002, %v1021
    %v1026 = vmul.f32 %v1004, %v1022
    %v1027 = vmul.f32 %v1006, %v1023
    %v1028 = vmul.f32 %v1008, %v1024
    %v1030 = vsel %vm384, %v1025, 0
    %v1033 = vsel %vm384, %v1026, 0
    %v1036 = vsel %vm384, %v1027, 0
    %v1039 = vsel %vm384, %v1028, 0
    %1041 = vmatpush.msra.mxu0 0.0
    %1042 = vmatpush.msra.mxu0 0.0
    %1043 = vmatpush.msra.mxu0 0.0
    %1044 = vmatpush.msra.mxu0 0.0
    %1045 = vmatpush.msra.mxu0 0.0
    %1046 = vmatpush.msra.mxu0 0.0
    %1047 = vmatpush.msra.mxu0 0.0
    %1048 = vmatpush.msra.mxu0 0.0
    %1049 = vmatpush.msra.mxu0 0.0
    %1050 = vmatpush.msra.mxu0 0.0
    %1051 = vmatpush.msra.mxu0 0.0
    %1052 = vmatpush.msra.mxu0 0.0
    %1053 = vmatpush.msra.mxu0 %v930
    %1054 = vmatpush.msra.mxu0 %v927
    %1055 = vmatpush.msra.mxu0 %v924
    %1056 = vmatpush.msra.mxu0 %v921
    %1057 = vmatmul.f32.gmra.mxu0 %v1030
    %v1058 = vpop.f32.mrf.mxu0
    %v1059 = vadd.f32 0.0, %v1058
    %1060 = vmatmul.f32.gmra.mxu0 %v1033
    %v1061 = vpop.f32.mrf.mxu0
    %v1062 = vadd.f32 0.0, %v1061
    %1063 = vmatmul.f32.gmra.mxu0 %v1036
    %v1064 = vpop.f32.mrf.mxu0
    %v1065 = vadd.f32 0.0, %v1064
    %1066 = vmatmul.f32.gmra.mxu0 %v1039
    %v1067 = vpop.f32.mrf.mxu0
    %v1068 = vadd.f32 0.0, %v1067
    %1069 = vdwg.mxu0
    %s1070 = scalar_lea.vmem %s31, 8
    %v1071 = vld [vmem:[%s1070] sm:$0xff]
    %v1073 = vsel %vm675, %v1059, 0
    %v1076 = vsel %vm675, %v1062, 0
    %v1079 = vsel %vm675, %v1065, 0
    %v1082 = vsel %vm675, %v1068, 0
    %1084 = vmatpush.msra.mxu0 0.0
    %1085 = vmatpush.msra.mxu0 0.0
    %1086 = vmatpush.msra.mxu0 0.0
    %1087 = vmatpush.msra.mxu0 0.0
    %1088 = vmatpush.msra.mxu0 0.0
    %1089 = vmatpush.msra.mxu0 0.0
    %1090 = vmatpush.msra.mxu0 0.0
    %1091 = vmatpush.msra.mxu0 0.0
    %1092 = vmatpush.msra.mxu0 0.0
    %1093 = vmatpush.msra.mxu0 0.0
    %1094 = vmatpush.msra.mxu0 0.0
    %1095 = vmatpush.msra.mxu0 0.0
    %1096 = vmatpush.msra.mxu0 0.0
    %1097 = vmatpush.msra.mxu0 0.0
    %1098 = vmatpush.msra.mxu0 0.0
    %1099 = vmatpush.msra.mxu0 %v1071
    %1100 = vmatmul.f32.gmra.mxu0 %v1073
    %v1101 = vpop.f32.mrf.mxu0
    %v1102 = vadd.f32 0.0, %v1101
    %1103 = vmatmul.f32.gmra.mxu0 %v1076
    %v1104 = vpop.f32.mrf.mxu0
    %v1105 = vadd.f32 0.0, %v1104
    %1106 = vmatmul.f32.gmra.mxu0 %v1079
    %v1107 = vpop.f32.mrf.mxu0
    %v1108 = vadd.f32 0.0, %v1107
    %1109 = vmatmul.f32.gmra.mxu0 %v1082
    %v1110 = vpop.f32.mrf.mxu0
    %v1111 = vadd.f32 0.0, %v1110
    %1112 = vdwg.mxu0
    %v1114 = vsel %vm675, %v803, 0
    %v1117 = vsel %vm675, %v806, 0
    %v1120 = vsel %vm675, %v809, 0
    %v1123 = vsel %vm675, %v812, 0
    %1125 = vmatpush.msra.mxu0 0.0
    %1126 = vmatpush.msra.mxu0 0.0
    %1127 = vmatpush.msra.mxu0 0.0
    %1128 = vmatpush.msra.mxu0 0.0
    %1129 = vmatpush.msra.mxu0 0.0
    %1130 = vmatpush.msra.mxu0 0.0
    %1131 = vmatpush.msra.mxu0 0.0
    %1132 = vmatpush.msra.mxu0 0.0
    %1133 = vmatpush.msra.mxu0 0.0
    %1134 = vmatpush.msra.mxu0 0.0
    %1135 = vmatpush.msra.mxu0 0.0
    %1136 = vmatpush.msra.mxu0 0.0
    %1137 = vmatpush.msra.mxu0 0.0
    %1138 = vmatpush.msra.mxu0 0.0
    %1139 = vmatpush.msra.mxu0 0.0
    %1140 = vmatpush.msra.mxu0 %v814
    %1141 = vmatmul.f32.gmra.mxu0 %v1114
    %v1142 = vpop.f32.mrf.mxu0
    %v1143 = vadd.f32 %v1102, %v1142
    %1144 = vmatmul.f32.gmra.mxu0 %v1117
    %v1145 = vpop.f32.mrf.mxu0
    %v1146 = vadd.f32 %v1105, %v1145
    %1147 = vmatmul.f32.gmra.mxu0 %v1120
    %v1148 = vpop.f32.mrf.mxu0
    %v1149 = vadd.f32 %v1108, %v1148
    %1150 = vmatmul.f32.gmra.mxu0 %v1123
    %v1151 = vpop.f32.mrf.mxu0
    %v1152 = vadd.f32 %v1111, %v1151
    %1153 = vdwg.mxu0
    %s1154 = scalar_lea.vmem %s19, 64
    %v1155 = vld [vmem:[%s1154] sm:$0xff]
    %v1156 = vld [vmem:[%s1154 + $0x8] sm:$0xff]
    %v1157 = vld [vmem:[%s1154 + $0x10] sm:$0xff]
    %v1158 = vld [vmem:[%s1154 + $0x18] sm:$0xff]
    %s1159 = scalar_lea.vmem %s21, 2
    %v1160 = vld [vmem:[%s1159] sm:$0x1]
    %v1162 = vperm.slane %v1160, 0
    %1164 = vmatpush.msra.mxu0 0.0
    %1165 = vmatpush.msra.mxu0 0.0
    %1166 = vmatpush.msra.mxu0 0.0
    %1167 = vmatpush.msra.mxu0 0.0
    %1168 = vmatpush.msra.mxu0 0.0
    %1169 = vmatpush.msra.mxu0 0.0
    %1170 = vmatpush.msra.mxu0 0.0
    %1171 = vmatpush.msra.mxu0 0.0
    %1172 = vmatpush.msra.mxu0 0.0
    %1173 = vmatpush.msra.mxu0 0.0
    %1174 = vmatpush.msra.mxu0 0.0
    %1175 = vmatpush.msra.mxu0 0.0
    %1176 = vmatpush.msra.mxu0 %v1158
    %1177 = vmatpush.msra.mxu0 %v1157
    %1178 = vmatpush.msra.mxu0 %v1156
    %1179 = vmatpush.msra.mxu0 %v1155
    %1180 = vmatmul.f32.gmra.mxu0 %v561
    %v1181 = vpop.f32.mrf.mxu0
    %v1182 = vadd.f32 %v1162, %v1181
    %1183 = vmatmul.f32.gmra.mxu0 %v564
    %v1184 = vpop.f32.mrf.mxu0
    %v1185 = vadd.f32 %v1162, %v1184
    %1186 = vmatmul.f32.gmra.mxu0 %v567
    %v1187 = vpop.f32.mrf.mxu0
    %v1188 = vadd.f32 %v1162, %v1187
    %1189 = vmatmul.f32.gmra.mxu0 %v570
    %v1190 = vpop.f32.mrf.mxu0
    %v1191 = vadd.f32 %v1162, %v1190
    %1192 = vdwg.mxu0
    %s1193 = scalar_lea.vmem %s23, 64
    %v1194 = vld [vmem:[%s1193] sm:$0xff]
    %v1195 = vld [vmem:[%s1193 + $0x8] sm:$0xff]
    %v1196 = vld [vmem:[%s1193 + $0x10] sm:$0xff]
    %v1197 = vld [vmem:[%s1193 + $0x18] sm:$0xff]
    %s1198 = scalar_lea.vmem %s25, 2
    %v1199 = vld [vmem:[%s1198] sm:$0x1]
    %v1201 = vperm.slane %v1199, 0
    %1203 = vmatpush.msra.mxu0 0.0
    %1204 = vmatpush.msra.mxu0 0.0
    %1205 = vmatpush.msra.mxu0 0.0
    %1206 = vmatpush.msra.mxu0 0.0
    %1207 = vmatpush.msra.mxu0 0.0
    %1208 = vmatpush.msra.mxu0 0.0
    %1209 = vmatpush.msra.mxu0 0.0
    %1210 = vmatpush.msra.mxu0 0.0
    %1211 = vmatpush.msra.mxu0 0.0
    %1212 = vmatpush.msra.mxu0 0.0
    %1213 = vmatpush.msra.mxu0 0.0
    %1214 = vmatpush.msra.mxu0 0.0
    %1215 = vmatpush.msra.mxu0 %v1197
    %1216 = vmatpush.msra.mxu0 %v1196
    %1217 = vmatpush.msra.mxu0 %v1195
    %1218 = vmatpush.msra.mxu0 %v1194
    %1219 = vmatmul.f32.gmra.mxu0 %v561
    %v1220 = vpop.f32.mrf.mxu0
    %v1221 = vadd.f32 %v1201, %v1220
    %1222 = vmatmul.f32.gmra.mxu0 %v564
    %v1223 = vpop.f32.mrf.mxu0
    %v1224 = vadd.f32 %v1201, %v1223
    %1225 = vmatmul.f32.gmra.mxu0 %v567
    %v1226 = vpop.f32.mrf.mxu0
    %v1227 = vadd.f32 %v1201, %v1226
    %1228 = vmatmul.f32.gmra.mxu0 %v570
    %v1229 = vpop.f32.mrf.mxu0
    %v1230 = vadd.f32 %v1201, %v1229
    %1231 = vdwg.mxu0
    %s1232 = scalar_lea.vmem %s27, 64
    %v1233 = vld [vmem:[%s1232] sm:$0xff]
    %v1234 = vld [vmem:[%s1232 + $0x8] sm:$0xff]
    %v1235 = vld [vmem:[%s1232 + $0x10] sm:$0xff]
    %v1236 = vld [vmem:[%s1232 + $0x18] sm:$0xff]
    %s1237 = scalar_lea.vmem %s29, 2
    %v1238 = vld [vmem:[%s1237] sm:$0x1]
    %v1240 = vperm.slane %v1238, 0
    %1242 = vmatpush.msra.mxu0 0.0
    %1243 = vmatpush.msra.mxu0 0.0
    %1244 = vmatpush.msra.mxu0 0.0
    %1245 = vmatpush.msra.mxu0 0.0
    %1246 = vmatpush.msra.mxu0 0.0
    %1247 = vmatpush.msra.mxu0 0.0
    %1248 = vmatpush.msra.mxu0 0.0
    %1249 = vmatpush.msra.mxu0 0.0
    %1250 = vmatpush.msra.mxu0 0.0
    %1251 = vmatpush.msra.mxu0 0.0
    %1252 = vmatpush.msra.mxu0 0.0
    %1253 = vmatpush.msra.mxu0 0.0
    %1254 = vmatpush.msra.mxu0 %v1236
    %1255 = vmatpush.msra.mxu0 %v1235
    %1256 = vmatpush.msra.mxu0 %v1234
    %1257 = vmatpush.msra.mxu0 %v1233
    %1258 = vmatmul.f32.gmra.mxu0 %v561
    %v1259 = vpop.f32.mrf.mxu0
    %v1260 = vadd.f32 %v1240, %v1259
    %1261 = vmatmul.f32.gmra.mxu0 %v564
    %v1262 = vpop.f32.mrf.mxu0
    %v1263 = vadd.f32 %v1240, %v1262
    %1264 = vmatmul.f32.gmra.mxu0 %v567
    %v1265 = vpop.f32.mrf.mxu0
    %v1266 = vadd.f32 %v1240, %v1265
    %1267 = vmatmul.f32.gmra.mxu0 %v570
    %v1268 = vpop.f32.mrf.mxu0
    %v1269 = vadd.f32 %v1240, %v1268
    %1270 = vdwg.mxu0
    %v1272 = vsel %vm675, %v1182, 0
    %v1275 = vsel %vm675, %v1185, 0
    %v1278 = vsel %vm675, %v1188, 0
    %v1281 = vsel %vm675, %v1191, 0
    %v1284 = vsel %vm675, %v1221, 0
    %v1287 = vsel %vm675, %v1224, 0
    %v1290 = vsel %vm675, %v1227, 0
    %v1293 = vsel %vm675, %v1230, 0
    %1295 = vmatpush.xpose.msra.mxu0 0.0
    %1296 = vmatpush.xpose.msra.mxu0 0.0
    %1297 = vmatpush.xpose.msra.mxu0 0.0
    %1298 = vmatpush.xpose.msra.mxu0 0.0
    %1299 = vmatpush.xpose.msra.mxu0 0.0
    %1300 = vmatpush.xpose.msra.mxu0 0.0
    %1301 = vmatpush.xpose.msra.mxu0 0.0
    %1302 = vmatpush.xpose.msra.mxu0 0.0
    %1303 = vmatpush.xpose.msra.mxu0 0.0
    %1304 = vmatpush.xpose.msra.mxu0 0.0
    %1305 = vmatpush.xpose.msra.mxu0 0.0
    %1306 = vmatpush.xpose.msra.mxu0 0.0
    %1307 = vmatpush.xpose.msra.mxu0 %v1293
    %1308 = vmatpush.xpose.msra.mxu0 %v1290
    %1309 = vmatpush.xpose.msra.mxu0 %v1287
    %1310 = vmatpush.xpose.msra.mxu0 %v1284
    %1311 = vmatmul.f32.gmra.mxu0 %v1272
    %v1312 = vpop.f32.mrf.mxu0
    %v1313 = vadd.f32 0.0, %v1312
    %1314 = vmatmul.f32.gmra.mxu0 %v1275
    %v1315 = vpop.f32.mrf.mxu0
    %v1316 = vadd.f32 0.0, %v1315
    %1317 = vmatmul.f32.gmra.mxu0 %v1278
    %v1318 = vpop.f32.mrf.mxu0
    %v1319 = vadd.f32 0.0, %v1318
    %1320 = vmatmul.f32.gmra.mxu0 %v1281
    %v1321 = vpop.f32.mrf.mxu0
    %v1322 = vadd.f32 0.0, %v1321
    %1323 = vdwg.mxu0
    %v1324 = vsel %vm384, %v1313, -inf
    %1325 = vmax.xlane.f32.xlu0 %v1324
    %v1326 = vpop.xlane.xlu0 %1325
    %v1327 = vsel %vm384, %v1316, -inf
    %1328 = vmax.xlane.f32.xlu0 %v1327
    %v1329 = vpop.xlane.xlu0 %1328
    %v1330 = vsel %vm384, %v1319, -inf
    %1331 = vmax.xlane.f32.xlu0 %v1330
    %v1332 = vpop.xlane.xlu0 %1331
    %v1333 = vsel %vm384, %v1322, -inf
    %1334 = vmax.xlane.f32.xlu0 %v1333
    %v1335 = vpop.xlane.xlu0 %1334
    %v1336 = vsub.f32 %v1313, %v1326
    %v1337 = vsub.f32 %v1316, %v1329
    %v1338 = vsub.f32 %v1319, %v1332
    %v1339 = vsub.f32 %v1322, %v1335
    %v1340 = vmul.f32 %v1336, 1.442695
    %v1341 = vpow.pop %v1340
    %v1342 = vmul.f32 %v1337, 1.442695
    %v1343 = vpow.pop %v1342
    %v1344 = vmul.f32 %v1338, 1.442695
    %v1345 = vpow.pop %v1344
    %v1346 = vmul.f32 %v1339, 1.442695
    %v1347 = vpow.pop %v1346
    %v1348 = vsel %vm384, %v1341, 0.0
    %1349 = vadd.xlane.f32.xlu0 %v1348
    %v1350 = vpop.xlane.xlu0 %1349
    %v1351 = vsel %vm384, %v1343, 0.0
    %1352 = vadd.xlane.f32.xlu0 %v1351
    %v1353 = vpop.xlane.xlu0 %1352
    %v1354 = vsel %vm384, %v1345, 0.0
    %1355 = vadd.xlane.f32.xlu0 %v1354
    %v1356 = vpop.xlane.xlu0 %1355
    %v1357 = vsel %vm384, %v1347, 0.0
    %1358 = vadd.xlane.f32.xlu0 %v1357
    %v1359 = vpop.xlane.xlu0 %1358
    %v1360 = vrcp.pop %v1350
    %v1361 = vrcp.pop %v1353
    %v1362 = vrcp.pop %v1356
    %v1363 = vrcp.pop %v1359
    %v1364 = vmul.f32 %v1341, %v1360
    %v1365 = vmul.f32 %v1343, %v1361
    %v1366 = vmul.f32 %v1345, %v1362
    %v1367 = vmul.f32 %v1347, %v1363
    %v1369 = vsel %vm384, %v1364, 0
    %v1372 = vsel %vm384, %v1365, 0
    %v1375 = vsel %vm384, %v1366, 0
    %v1378 = vsel %vm384, %v1367, 0
    %1380 = vmatpush.msra.mxu0 0.0
    %1381 = vmatpush.msra.mxu0 0.0
    %1382 = vmatpush.msra.mxu0 0.0
    %1383 = vmatpush.msra.mxu0 0.0
    %1384 = vmatpush.msra.mxu0 0.0
    %1385 = vmatpush.msra.mxu0 0.0
    %1386 = vmatpush.msra.mxu0 0.0
    %1387 = vmatpush.msra.mxu0 0.0
    %1388 = vmatpush.msra.mxu0 0.0
    %1389 = vmatpush.msra.mxu0 0.0
    %1390 = vmatpush.msra.mxu0 0.0
    %1391 = vmatpush.msra.mxu0 0.0
    %1392 = vmatpush.msra.mxu0 %v1269
    %1393 = vmatpush.msra.mxu0 %v1266
    %1394 = vmatpush.msra.mxu0 %v1263
    %1395 = vmatpush.msra.mxu0 %v1260
    %1396 = vmatmul.f32.gmra.mxu0 %v1369
    %v1397 = vpop.f32.mrf.mxu0
    %v1398 = vadd.f32 0.0, %v1397
    %1399 = vmatmul.f32.gmra.mxu0 %v1372
    %v1400 = vpop.f32.mrf.mxu0
    %v1401 = vadd.f32 0.0, %v1400
    %1402 = vmatmul.f32.gmra.mxu0 %v1375
    %v1403 = vpop.f32.mrf.mxu0
    %v1404 = vadd.f32 0.0, %v1403
    %1405 = vmatmul.f32.gmra.mxu0 %v1378
    %v1406 = vpop.f32.mrf.mxu0
    %v1407 = vadd.f32 0.0, %v1406
    %1408 = vdwg.mxu0
    %s1409 = scalar_lea.vmem %s31, 16
    %v1410 = vld [vmem:[%s1409] sm:$0xff]
    %v1412 = vsel %vm675, %v1398, 0
    %v1415 = vsel %vm675, %v1401, 0
    %v1418 = vsel %vm675, %v1404, 0
    %v1421 = vsel %vm675, %v1407, 0
    %1423 = vmatpush.msra.mxu0 0.0
    %1424 = vmatpush.msra.mxu0 0.0
    %1425 = vmatpush.msra.mxu0 0.0
    %1426 = vmatpush.msra.mxu0 0.0
    %1427 = vmatpush.msra.mxu0 0.0
    %1428 = vmatpush.msra.mxu0 0.0
    %1429 = vmatpush.msra.mxu0 0.0
    %1430 = vmatpush.msra.mxu0 0.0
    %1431 = vmatpush.msra.mxu0 0.0
    %1432 = vmatpush.msra.mxu0 0.0
    %1433 = vmatpush.msra.mxu0 0.0
    %1434 = vmatpush.msra.mxu0 0.0
    %1435 = vmatpush.msra.mxu0 0.0
    %1436 = vmatpush.msra.mxu0 0.0
    %1437 = vmatpush.msra.mxu0 0.0
    %1438 = vmatpush.msra.mxu0 %v1410
    %1439 = vmatmul.f32.gmra.mxu0 %v1412
    %v1440 = vpop.f32.mrf.mxu0
    %v1441 = vadd.f32 0.0, %v1440
    %1442 = vmatmul.f32.gmra.mxu0 %v1415
    %v1443 = vpop.f32.mrf.mxu0
    %v1444 = vadd.f32 0.0, %v1443
    %1445 = vmatmul.f32.gmra.mxu0 %v1418
    %v1446 = vpop.f32.mrf.mxu0
    %v1447 = vadd.f32 0.0, %v1446
    %1448 = vmatmul.f32.gmra.mxu0 %v1421
    %v1449 = vpop.f32.mrf.mxu0
    %v1450 = vadd.f32 0.0, %v1449
    %1451 = vdwg.mxu0
    %v1452 = vadd.f32 %v1143, %v1441
    %v1453 = vadd.f32 %v1146, %v1444
    %v1454 = vadd.f32 %v1149, %v1447
    %v1455 = vadd.f32 %v1152, %v1450
    %s1456 = scalar_lea.vmem %s19, 96
    %v1457 = vld [vmem:[%s1456] sm:$0xff]
    %v1458 = vld [vmem:[%s1456 + $0x8] sm:$0xff]
    %v1459 = vld [vmem:[%s1456 + $0x10] sm:$0xff]
    %v1460 = vld [vmem:[%s1456 + $0x18] sm:$0xff]
    %s1461 = scalar_lea.vmem %s21, 3
    %v1462 = vld [vmem:[%s1461] sm:$0x1]
    %v1464 = vperm.slane %v1462, 0
    %1466 = vmatpush.msra.mxu0 0.0
    %1467 = vmatpush.msra.mxu0 0.0
    %1468 = vmatpush.msra.mxu0 0.0
    %1469 = vmatpush.msra.mxu0 0.0
    %1470 = vmatpush.msra.mxu0 0.0
    %1471 = vmatpush.msra.mxu0 0.0
    %1472 = vmatpush.msra.mxu0 0.0
    %1473 = vmatpush.msra.mxu0 0.0
    %1474 = vmatpush.msra.mxu0 0.0
    %1475 = vmatpush.msra.mxu0 0.0
    %1476 = vmatpush.msra.mxu0 0.0
    %1477 = vmatpush.msra.mxu0 0.0
    %1478 = vmatpush.msra.mxu0 %v1460
    %1479 = vmatpush.msra.mxu0 %v1459
    %1480 = vmatpush.msra.mxu0 %v1458
    %1481 = vmatpush.msra.mxu0 %v1457
    %1482 = vmatmul.f32.gmra.mxu0 %v561
    %v1483 = vpop.f32.mrf.mxu0
    %v1484 = vadd.f32 %v1464, %v1483
    %1485 = vmatmul.f32.gmra.mxu0 %v564
    %v1486 = vpop.f32.mrf.mxu0
    %v1487 = vadd.f32 %v1464, %v1486
    %1488 = vmatmul.f32.gmra.mxu0 %v567
    %v1489 = vpop.f32.mrf.mxu0
    %v1490 = vadd.f32 %v1464, %v1489
    %1491 = vmatmul.f32.gmra.mxu0 %v570
    %v1492 = vpop.f32.mrf.mxu0
    %v1493 = vadd.f32 %v1464, %v1492
    %1494 = vdwg.mxu0
    %s1495 = scalar_lea.vmem %s23, 96
    %v1496 = vld [vmem:[%s1495] sm:$0xff]
    %v1497 = vld [vmem:[%s1495 + $0x8] sm:$0xff]
    %v1498 = vld [vmem:[%s1495 + $0x10] sm:$0xff]
    %v1499 = vld [vmem:[%s1495 + $0x18] sm:$0xff]
    %s1500 = scalar_lea.vmem %s25, 3
    %v1501 = vld [vmem:[%s1500] sm:$0x1]
    %v1503 = vperm.slane %v1501, 0
    %1505 = vmatpush.msra.mxu0 0.0
    %1506 = vmatpush.msra.mxu0 0.0
    %1507 = vmatpush.msra.mxu0 0.0
    %1508 = vmatpush.msra.mxu0 0.0
    %1509 = vmatpush.msra.mxu0 0.0
    %1510 = vmatpush.msra.mxu0 0.0
    %1511 = vmatpush.msra.mxu0 0.0
    %1512 = vmatpush.msra.mxu0 0.0
    %1513 = vmatpush.msra.mxu0 0.0
    %1514 = vmatpush.msra.mxu0 0.0
    %1515 = vmatpush.msra.mxu0 0.0
    %1516 = vmatpush.msra.mxu0 0.0
    %1517 = vmatpush.msra.mxu0 %v1499
    %1518 = vmatpush.msra.mxu0 %v1498
    %1519 = vmatpush.msra.mxu0 %v1497
    %1520 = vmatpush.msra.mxu0 %v1496
    %1521 = vmatmul.f32.gmra.mxu0 %v561
    %v1522 = vpop.f32.mrf.mxu0
    %v1523 = vadd.f32 %v1503, %v1522
    %1524 = vmatmul.f32.gmra.mxu0 %v564
    %v1525 = vpop.f32.mrf.mxu0
    %v1526 = vadd.f32 %v1503, %v1525
    %1527 = vmatmul.f32.gmra.mxu0 %v567
    %v1528 = vpop.f32.mrf.mxu0
    %v1529 = vadd.f32 %v1503, %v1528
    %1530 = vmatmul.f32.gmra.mxu0 %v570
    %v1531 = vpop.f32.mrf.mxu0
    %v1532 = vadd.f32 %v1503, %v1531
    %1533 = vdwg.mxu0
    %s1534 = scalar_lea.vmem %s27, 96
    %v1535 = vld [vmem:[%s1534] sm:$0xff]
    %v1536 = vld [vmem:[%s1534 + $0x8] sm:$0xff]
    %v1537 = vld [vmem:[%s1534 + $0x10] sm:$0xff]
    %v1538 = vld [vmem:[%s1534 + $0x18] sm:$0xff]
    %s1539 = scalar_lea.vmem %s29, 3
    %v1540 = vld [vmem:[%s1539] sm:$0x1]
    %v1542 = vperm.slane %v1540, 0
    %1544 = vmatpush.msra.mxu0 0.0
    %1545 = vmatpush.msra.mxu0 0.0
    %1546 = vmatpush.msra.mxu0 0.0
    %1547 = vmatpush.msra.mxu0 0.0
    %1548 = vmatpush.msra.mxu0 0.0
    %1549 = vmatpush.msra.mxu0 0.0
    %1550 = vmatpush.msra.mxu0 0.0
    %1551 = vmatpush.msra.mxu0 0.0
    %1552 = vmatpush.msra.mxu0 0.0
    %1553 = vmatpush.msra.mxu0 0.0
    %1554 = vmatpush.msra.mxu0 0.0
    %1555 = vmatpush.msra.mxu0 0.0
    %1556 = vmatpush.msra.mxu0 %v1538
    %1557 = vmatpush.msra.mxu0 %v1537
    %1558 = vmatpush.msra.mxu0 %v1536
    %1559 = vmatpush.msra.mxu0 %v1535
    %1560 = vmatmul.f32.gmra.mxu0 %v561
    %v1561 = vpop.f32.mrf.mxu0
    %v1562 = vadd.f32 %v1542, %v1561
    %1563 = vmatmul.f32.gmra.mxu0 %v564
    %v1564 = vpop.f32.mrf.mxu0
    %v1565 = vadd.f32 %v1542, %v1564
    %1566 = vmatmul.f32.gmra.mxu0 %v567
    %v1567 = vpop.f32.mrf.mxu0
    %v1568 = vadd.f32 %v1542, %v1567
    %1569 = vmatmul.f32.gmra.mxu0 %v570
    %v1570 = vpop.f32.mrf.mxu0
    %v1571 = vadd.f32 %v1542, %v1570
    %1572 = vdwg.mxu0
    %v1574 = vsel %vm675, %v1484, 0
    %v1577 = vsel %vm675, %v1487, 0
    %v1580 = vsel %vm675, %v1490, 0
    %v1583 = vsel %vm675, %v1493, 0
    %v1586 = vsel %vm675, %v1523, 0
    %v1589 = vsel %vm675, %v1526, 0
    %v1592 = vsel %vm675, %v1529, 0
    %v1595 = vsel %vm675, %v1532, 0
    %1597 = vmatpush.xpose.msra.mxu0 0.0
    %1598 = vmatpush.xpose.msra.mxu0 0.0
    %1599 = vmatpush.xpose.msra.mxu0 0.0
    %1600 = vmatpush.xpose.msra.mxu0 0.0
    %1601 = vmatpush.xpose.msra.mxu0 0.0
    %1602 = vmatpush.xpose.msra.mxu0 0.0
    %1603 = vmatpush.xpose.msra.mxu0 0.0
    %1604 = vmatpush.xpose.msra.mxu0 0.0
    %1605 = vmatpush.xpose.msra.mxu0 0.0
    %1606 = vmatpush.xpose.msra.mxu0 0.0
    %1607 = vmatpush.xpose.msra.mxu0 0.0
    %1608 = vmatpush.xpose.msra.mxu0 0.0
    %1609 = vmatpush.xpose.msra.mxu0 %v1595
    %1610 = vmatpush.xpose.msra.mxu0 %v1592
    %1611 = vmatpush.xpose.msra.mxu0 %v1589
    %1612 = vmatpush.xpose.msra.mxu0 %v1586
    %1613 = vmatmul.f32.gmra.mxu0 %v1574
    %v1614 = vpop.f32.mrf.mxu0
    %v1615 = vadd.f32 0.0, %v1614
    %1616 = vmatmul.f32.gmra.mxu0 %v1577
    %v1617 = vpop.f32.mrf.mxu0
    %v1618 = vadd.f32 0.0, %v1617
    %1619 = vmatmul.f32.gmra.mxu0 %v1580
    %v1620 = vpop.f32.mrf.mxu0
    %v1621 = vadd.f32 0.0, %v1620
    %1622 = vmatmul.f32.gmra.mxu0 %v1583
    %v1623 = vpop.f32.mrf.mxu0
    %v1624 = vadd.f32 0.0, %v1623
    %1625 = vdwg.mxu0
    %v1626 = vsel %vm384, %v1615, -inf
    %1627 = vmax.xlane.f32.xlu0 %v1626
    %v1628 = vpop.xlane.xlu0 %1627
    %v1629 = vsel %vm384, %v1618, -inf
    %1630 = vmax.xlane.f32.xlu0 %v1629
    %v1631 = vpop.xlane.xlu0 %1630
    %v1632 = vsel %vm384, %v1621, -inf
    %1633 = vmax.xlane.f32.xlu0 %v1632
    %v1634 = vpop.xlane.xlu0 %1633
    %v1635 = vsel %vm384, %v1624, -inf
    %1636 = vmax.xlane.f32.xlu0 %v1635
    %v1637 = vpop.xlane.xlu0 %1636
    %v1638 = vsub.f32 %v1615, %v1628
    %v1639 = vsub.f32 %v1618, %v1631
    %v1640 = vsub.f32 %v1621, %v1634
    %v1641 = vsub.f32 %v1624, %v1637
    %v1642 = vmul.f32 %v1638, 1.442695
    %v1643 = vpow.pop %v1642
    %v1644 = vmul.f32 %v1639, 1.442695
    %v1645 = vpow.pop %v1644
    %v1646 = vmul.f32 %v1640, 1.442695
    %v1647 = vpow.pop %v1646
    %v1648 = vmul.f32 %v1641, 1.442695
    %v1649 = vpow.pop %v1648
    %v1650 = vsel %vm384, %v1643, 0.0
    %1651 = vadd.xlane.f32.xlu0 %v1650
    %v1652 = vpop.xlane.xlu0 %1651
    %v1653 = vsel %vm384, %v1645, 0.0
    %1654 = vadd.xlane.f32.xlu0 %v1653
    %v1655 = vpop.xlane.xlu0 %1654
    %v1656 = vsel %vm384, %v1647, 0.0
    %1657 = vadd.xlane.f32.xlu0 %v1656
    %v1658 = vpop.xlane.xlu0 %1657
    %v1659 = vsel %vm384, %v1649, 0.0
    %1660 = vadd.xlane.f32.xlu0 %v1659
    %v1661 = vpop.xlane.xlu0 %1660
    %v1662 = vrcp.pop %v1652
    %v1663 = vrcp.pop %v1655
    %v1664 = vrcp.pop %v1658
    %v1665 = vrcp.pop %v1661
    %v1666 = vmul.f32 %v1643, %v1662
    %v1667 = vmul.f32 %v1645, %v1663
    %v1668 = vmul.f32 %v1647, %v1664
    %v1669 = vmul.f32 %v1649, %v1665
    %v1671 = vsel %vm384, %v1666, 0
    %v1674 = vsel %vm384, %v1667, 0
    %v1677 = vsel %vm384, %v1668, 0
    %v1680 = vsel %vm384, %v1669, 0
    %1682 = vmatpush.msra.mxu0 0.0
    %1683 = vmatpush.msra.mxu0 0.0
    %1684 = vmatpush.msra.mxu0 0.0
    %1685 = vmatpush.msra.mxu0 0.0
    %1686 = vmatpush.msra.mxu0 0.0
    %1687 = vmatpush.msra.mxu0 0.0
    %1688 = vmatpush.msra.mxu0 0.0
    %1689 = vmatpush.msra.mxu0 0.0
    %1690 = vmatpush.msra.mxu0 0.0
    %1691 = vmatpush.msra.mxu0 0.0
    %1692 = vmatpush.msra.mxu0 0.0
    %1693 = vmatpush.msra.mxu0 0.0
    %1694 = vmatpush.msra.mxu0 %v1571
    %1695 = vmatpush.msra.mxu0 %v1568
    %1696 = vmatpush.msra.mxu0 %v1565
    %1697 = vmatpush.msra.mxu0 %v1562
    %1698 = vmatmul.f32.gmra.mxu0 %v1671
    %v1699 = vpop.f32.mrf.mxu0
    %v1700 = vadd.f32 0.0, %v1699
    %1701 = vmatmul.f32.gmra.mxu0 %v1674
    %v1702 = vpop.f32.mrf.mxu0
    %v1703 = vadd.f32 0.0, %v1702
    %1704 = vmatmul.f32.gmra.mxu0 %v1677
    %v1705 = vpop.f32.mrf.mxu0
    %v1706 = vadd.f32 0.0, %v1705
    %1707 = vmatmul.f32.gmra.mxu0 %v1680
    %v1708 = vpop.f32.mrf.mxu0
    %v1709 = vadd.f32 0.0, %v1708
    %1710 = vdwg.mxu0
    %s1711 = scalar_lea.vmem %s31, 24
    %v1712 = vld [vmem:[%s1711] sm:$0xff]
    %v1714 = vsel %vm675, %v1700, 0
    %v1717 = vsel %vm675, %v1703, 0
    %v1720 = vsel %vm675, %v1706, 0
    %v1723 = vsel %vm675, %v1709, 0
    %1725 = vmatpush.msra.mxu0 0.0
    %1726 = vmatpush.msra.mxu0 0.0
    %1727 = vmatpush.msra.mxu0 0.0
    %1728 = vmatpush.msra.mxu0 0.0
    %1729 = vmatpush.msra.mxu0 0.0
    %1730 = vmatpush.msra.mxu0 0.0
    %1731 = vmatpush.msra.mxu0 0.0
    %1732 = vmatpush.msra.mxu0 0.0
    %1733 = vmatpush.msra.mxu0 0.0
    %1734 = vmatpush.msra.mxu0 0.0
    %1735 = vmatpush.msra.mxu0 0.0
    %1736 = vmatpush.msra.mxu0 0.0
    %1737 = vmatpush.msra.mxu0 0.0
    %1738 = vmatpush.msra.mxu0 0.0
    %1739 = vmatpush.msra.mxu0 0.0
    %1740 = vmatpush.msra.mxu0 %v1712
    %1741 = vmatmul.f32.gmra.mxu0 %v1714
    %v1742 = vpop.f32.mrf.mxu0
    %v1743 = vadd.f32 0.0, %v1742
    %1744 = vmatmul.f32.gmra.mxu0 %v1717
    %v1745 = vpop.f32.mrf.mxu0
    %v1746 = vadd.f32 0.0, %v1745
    %1747 = vmatmul.f32.gmra.mxu0 %v1720
    %v1748 = vpop.f32.mrf.mxu0
    %v1749 = vadd.f32 0.0, %v1748
    %1750 = vmatmul.f32.gmra.mxu0 %v1723
    %v1751 = vpop.f32.mrf.mxu0
    %v1752 = vadd.f32 0.0, %v1751
    %1753 = vdwg.mxu0
    %v1754 = vadd.f32 %v1452, %v1743
    %v1755 = vadd.f32 %v1453, %v1746
    %v1756 = vadd.f32 %v1454, %v1749
    %v1757 = vadd.f32 %v1455, %v1752
    %v1758 = vld [vmem:[%s33] sm:$0x1]
    %v1760 = vperm.slane %v1758, 0
    %v1762 = vadd.f32 %v1754, %v1760
    %v1763 = vadd.f32 %v1755, %v1760
    %v1764 = vadd.f32 %v1756, %v1760
    %v1765 = vadd.f32 %v1757, %v1760
    %v1766 = vadd.f32 %v1762, %v373
    %v1767 = vadd.f32 %v1763, %v376
    %v1768 = vadd.f32 %v1764, %v379
    %v1769 = vadd.f32 %v1765, %v382
    %v1770 = vld [vmem:[%s47] sm:$0x1]
    %v1772 = vperm.slane %v1770, 0
    %v1774 = vmul.f32 %v1766, %v1772
    %v1775 = vmul.f32 %v1767, %v1772
    %v1776 = vmul.f32 %v1768, %v1772
    %v1777 = vmul.f32 %v1769, %v1772
    %v1778 = vld [vmem:[%s49] sm:$0x1]
    %v1780 = vperm.slane %v1778, 0
    %v1782 = vadd.f32 %v1774, %v1780
    %v1783 = vadd.f32 %v1775, %v1780
    %v1784 = vadd.f32 %v1776, %v1780
    %v1785 = vadd.f32 %v1777, %v1780
    %v1786 = vadd.f32 %v548, %v1782
    %v1787 = vadd.f32 %v549, %v1783
    %v1788 = vadd.f32 %v550, %v1784
    %v1789 = vadd.f32 %v551, %v1785
    %v1790 = vld [vmem:[%s35] sm:$0xff]
    %v1791 = vld [vmem:[%s35 + $0x8] sm:$0xff]
    %v1792 = vld [vmem:[%s35 + $0x10] sm:$0xff]
    %v1793 = vld [vmem:[%s35 + $0x18] sm:$0xff]
    %v1794 = vld [vmem:[%s37] sm:$0x1]
    %v1796 = vperm.slane %v1794, 0
    %v1799 = vsel %vm384, %v1786, 0
    %v1802 = vsel %vm384, %v1787, 0
    %v1805 = vsel %vm384, %v1788, 0
    %v1808 = vsel %vm384, %v1789, 0
    %1810 = vmatpush.msra.mxu0 0.0
    %1811 = vmatpush.msra.mxu0 0.0
    %1812 = vmatpush.msra.mxu0 0.0
    %1813 = vmatpush.msra.mxu0 0.0
    %1814 = vmatpush.msra.mxu0 0.0
    %1815 = vmatpush.msra.mxu0 0.0
    %1816 = vmatpush.msra.mxu0 0.0
    %1817 = vmatpush.msra.mxu0 0.0
    %1818 = vmatpush.msra.mxu0 0.0
    %1819 = vmatpush.msra.mxu0 0.0
    %1820 = vmatpush.msra.mxu0 0.0
    %1821 = vmatpush.msra.mxu0 0.0
    %1822 = vmatpush.msra.mxu0 %v1793
    %1823 = vmatpush.msra.mxu0 %v1792
    %1824 = vmatpush.msra.mxu0 %v1791
    %1825 = vmatpush.msra.mxu0 %v1790
    %1826 = vmatmul.f32.gmra.mxu0 %v1799
    %v1827 = vpop.f32.mrf.mxu0
    %v1828 = vadd.f32 %v1796, %v1827
    %1829 = vmatmul.f32.gmra.mxu0 %v1802
    %v1830 = vpop.f32.mrf.mxu0
    %v1831 = vadd.f32 %v1796, %v1830
    %1832 = vmatmul.f32.gmra.mxu0 %v1805
    %v1833 = vpop.f32.mrf.mxu0
    %v1834 = vadd.f32 %v1796, %v1833
    %1835 = vmatmul.f32.gmra.mxu0 %v1808
    %v1836 = vpop.f32.mrf.mxu0
    %v1837 = vadd.f32 %v1796, %v1836
    %1838 = vdwg.mxu0
    %v1839 = vmax.f32 %v1828, 0.0
    %v1840 = vmax.f32 %v1831, 0.0
    %v1841 = vmax.f32 %v1834, 0.0
    %v1842 = vmax.f32 %v1837, 0.0
    %v1843 = vld [vmem:[%s39] sm:$0xff]
    %v1844 = vld [vmem:[%s39 + $0x8] sm:$0xff]
    %v1845 = vld [vmem:[%s39 + $0x10] sm:$0xff]
    %v1846 = vld [vmem:[%s39 + $0x18] sm:$0xff]
    %v1847 = vld [vmem:[%s39 + $0x20] sm:$0xff]
    %v1848 = vld [vmem:[%s39 + $0x28] sm:$0xff]
    %v1849 = vld [vmem:[%s39 + $0x30] sm:$0xff]
    %v1850 = vld [vmem:[%s39 + $0x38] sm:$0xff]
    %v1851 = vld [vmem:[%s41] sm:$0x1]
    %v1853 = vperm.slane %v1851, 0
    %vm1855 = vcmask 523264
    %v1857 = vsel %vm1855, %v1839, 0
    %v1860 = vsel %vm1855, %v1840, 0
    %v1863 = vsel %vm1855, %v1841, 0
    %v1866 = vsel %vm1855, %v1842, 0
    %1868 = vmatpush.msra.mxu0 0.0
    %1869 = vmatpush.msra.mxu0 0.0
    %1870 = vmatpush.msra.mxu0 0.0
    %1871 = vmatpush.msra.mxu0 0.0
    %1872 = vmatpush.msra.mxu0 0.0
    %1873 = vmatpush.msra.mxu0 0.0
    %1874 = vmatpush.msra.mxu0 0.0
    %1875 = vmatpush.msra.mxu0 0.0
    %1876 = vmatpush.msra.mxu0 %v1850
    %1877 = vmatpush.msra.mxu0 %v1849
    %1878 = vmatpush.msra.mxu0 %v1848
    %1879 = vmatpush.msra.mxu0 %v1847
    %1880 = vmatpush.msra.mxu0 %v1846
    %1881 = vmatpush.msra.mxu0 %v1845
    %1882 = vmatpush.msra.mxu0 %v1844
    %1883 = vmatpush.msra.mxu0 %v1843
    %1884 = vmatmul.f32.gmra.mxu0 %v1857
    %v1885 = vpop.f32.mrf.mxu0
    %v1886 = vadd.f32 %v1853, %v1885
    %1887 = vmatmul.f32.gmra.mxu0 %v1860
    %v1888 = vpop.f32.mrf.mxu0
    %v1889 = vadd.f32 %v1853, %v1888
    %1890 = vmatmul.f32.gmra.mxu0 %v1863
    %v1891 = vpop.f32.mrf.mxu0
    %v1892 = vadd.f32 %v1853, %v1891
    %1893 = vmatmul.f32.gmra.mxu0 %v1866
    %v1894 = vpop.f32.mrf.mxu0
    %v1895 = vadd.f32 %v1853, %v1894
    %1896 = vdwg.mxu0
    %v1897 = vadd.f32 %v1786, %v1886
    %v1898 = vadd.f32 %v1787, %v1889
    %v1899 = vadd.f32 %v1788, %v1892
    %v1900 = vadd.f32 %v1789, %v1895
    %v1901 = vld [vmem:[%s51] sm:$0x1]
    %v1903 = vperm.slane %v1901, 0
    %v1905 = vmul.f32 %v1897, %v1903
    %v1906 = vmul.f32 %v1898, %v1903
    %v1907 = vmul.f32 %v1899, %v1903
    %v1908 = vmul.f32 %v1900, %v1903
    %v1909 = vld [vmem:[%s53] sm:$0x1]
    %v1911 = vperm.slane %v1909, 0
    %v1913 = vadd.f32 %v1905, %v1911
    %v1914 = vadd.f32 %v1906, %v1911
    %v1915 = vadd.f32 %v1907, %v1911
    %v1916 = vadd.f32 %v1908, %v1911
    %v1917 = vmax.f32 %v1913, 0.0
    %v1918 = vmax.f32 %v1914, 0.0
    %v1919 = vmax.f32 %v1915, 0.0
    %v1920 = vmax.f32 %v1916, 0.0
    %1921 = vmatpush.msra.mxu0 0.0
    %1922 = vmatpush.msra.mxu0 0.0
    %1923 = vmatpush.msra.mxu0 0.0
    %1924 = vmatpush.msra.mxu0 0.0
    %1925 = vmatpush.msra.mxu0 0.0
    %1926 = vmatpush.msra.mxu0 0.0
    %1927 = vmatpush.msra.mxu0 0.0
    %1928 = vmatpush.msra.mxu0 0.0
    %1929 = vmatpush.msra.mxu0 0.0
    %1930 = vmatpush.msra.mxu0 0.0
    %1931 = vmatpush.msra.mxu0 0.0
    %1932 = vmatpush.msra.mxu0 0.0
    %1933 = vmatpush.msra.mxu0 %v1920
    %1934 = vmatpush.msra.mxu0 %v1919
    %1935 = vmatpush.msra.mxu0 %v1918
    %1936 = vmatpush.msra.mxu0 %v1917
    %1937 = vmatmul.f32.gmra.mxu0 %v386
    %v1938 = vpop.f32.mrf.mxu0
    %v1939 = vadd.f32 0.0, %v1938
    %1940 = vmatmul.f32.gmra.mxu0 %v389
    %v1941 = vpop.f32.mrf.mxu0
    %v1942 = vadd.f32 0.0, %v1941
    %1943 = vmatmul.f32.gmra.mxu0 %v392
    %v1944 = vpop.f32.mrf.mxu0
    %v1945 = vadd.f32 0.0, %v1944
    %1946 = vmatmul.f32.gmra.mxu0 %v395
    %v1947 = vpop.f32.mrf.mxu0
    %v1948 = vadd.f32 0.0, %v1947
    %1949 = vdwg.mxu0
    %v1950 = vadd.f32 %v1917, %v1939
    %v1951 = vadd.f32 %v1918, %v1942
    %v1952 = vadd.f32 %v1919, %v1945
    %v1953 = vadd.f32 %v1920, %v1948
    %v1954 = vld [vmem:[%s55] sm:$0xff]
    %v1955 = vld [vmem:[%s55 + $0x8] sm:$0xff]
    %v1956 = vld [vmem:[%s55 + $0x10] sm:$0xff]
    %v1957 = vld [vmem:[%s55 + $0x18] sm:$0xff]
    %v1958 = vld [vmem:[%s57] sm:$0x1]
    %v1960 = vperm.slane %v1958, 0
    %v1963 = vsel %vm384, %v1950, 0
    %v1966 = vsel %vm384, %v1951, 0
    %v1969 = vsel %vm384, %v1952, 0
    %v1972 = vsel %vm384, %v1953, 0
    %1974 = vmatpush.msra.mxu0 0.0
    %1975 = vmatpush.msra.mxu0 0.0
    %1976 = vmatpush.msra.mxu0 0.0
    %1977 = vmatpush.msra.mxu0 0.0
    %1978 = vmatpush.msra.mxu0 0.0
    %1979 = vmatpush.msra.mxu0 0.0
    %1980 = vmatpush.msra.mxu0 0.0
    %1981 = vmatpush.msra.mxu0 0.0
    %1982 = vmatpush.msra.mxu0 0.0
    %1983 = vmatpush.msra.mxu0 0.0
    %1984 = vmatpush.msra.mxu0 0.0
    %1985 = vmatpush.msra.mxu0 0.0
    %1986 = vmatpush.msra.mxu0 %v1957
    %1987 = vmatpush.msra.mxu0 %v1956
    %1988 = vmatpush.msra.mxu0 %v1955
    %1989 = vmatpush.msra.mxu0 %v1954
    %1990 = vmatmul.f32.gmra.mxu0 %v1963
    %v1991 = vpop.f32.mrf.mxu0
    %v1992 = vadd.f32 %v1960, %v1991
    %1993 = vmatmul.f32.gmra.mxu0 %v1966
    %v1994 = vpop.f32.mrf.mxu0
    %v1995 = vadd.f32 %v1960, %v1994
    %1996 = vmatmul.f32.gmra.mxu0 %v1969
    %v1997 = vpop.f32.mrf.mxu0
    %v1998 = vadd.f32 %v1960, %v1997
    %1999 = vmatmul.f32.gmra.mxu0 %v1972
    %v2000 = vpop.f32.mrf.mxu0
    %v2001 = vadd.f32 %v1960, %v2000
    %2002 = vdwg.mxu0
    %v2003 = vmax.f32 %v1992, 0.0
    %v2004 = vmax.f32 %v1995, 0.0
    %v2005 = vmax.f32 %v1998, 0.0
    %v2006 = vmax.f32 %v2001, 0.0
    %v2007 = vld [vmem:[%s59] sm:$0xff]
    %v2008 = vld [vmem:[%s59 + $0x8] sm:$0xff]
    %v2009 = vld [vmem:[%s59 + $0x10] sm:$0xff]
    %v2010 = vld [vmem:[%s59 + $0x18] sm:$0xff]
    %v2011 = vld [vmem:[%s61] sm:$0x1]
    %v2013 = vperm.slane %v2011, 0
    %v2016 = vsel %vm384, %v2003, 0
    %v2019 = vsel %vm384, %v2004, 0
    %v2022 = vsel %vm384, %v2005, 0
    %v2025 = vsel %vm384, %v2006, 0
    %2027 = vmatpush.msra.mxu0 0.0
    %2028 = vmatpush.msra.mxu0 0.0
    %2029 = vmatpush.msra.mxu0 0.0
    %2030 = vmatpush.msra.mxu0 0.0
    %2031 = vmatpush.msra.mxu0 0.0
    %2032 = vmatpush.msra.mxu0 0.0
    %2033 = vmatpush.msra.mxu0 0.0
    %2034 = vmatpush.msra.mxu0 0.0
    %2035 = vmatpush.msra.mxu0 0.0
    %2036 = vmatpush.msra.mxu0 0.0
    %2037 = vmatpush.msra.mxu0 0.0
    %2038 = vmatpush.msra.mxu0 0.0
    %2039 = vmatpush.msra.mxu0 %v2010
    %2040 = vmatpush.msra.mxu0 %v2009
    %2041 = vmatpush.msra.mxu0 %v2008
    %2042 = vmatpush.msra.mxu0 %v2007
    %2043 = vmatmul.f32.gmra.mxu0 %v2016
    %v2044 = vpop.f32.mrf.mxu0
    %v2045 = vadd.f32 %v2013, %v2044
    %2046 = vmatmul.f32.gmra.mxu0 %v2019
    %v2047 = vpop.f32.mrf.mxu0
    %v2048 = vadd.f32 %v2013, %v2047
    %2049 = vmatmul.f32.gmra.mxu0 %v2022
    %v2050 = vpop.f32.mrf.mxu0
    %v2051 = vadd.f32 %v2013, %v2050
    %2052 = vmatmul.f32.gmra.mxu0 %v2025
    %v2053 = vpop.f32.mrf.mxu0
    %v2054 = vadd.f32 %v2013, %v2053
    %2055 = vdwg.mxu0
    %v2056 = vadd.f32 %v2045, %v1917
    %v2057 = vadd.f32 %v2048, %v1918
    %v2058 = vadd.f32 %v2051, %v1919
    %v2059 = vadd.f32 %v2054, %v1920
    %v2060 = vld [vmem:[%s87] sm:$0x1]
    %v2062 = vperm.slane %v2060, 0
    %v2064 = vmul.f32 %v2056, %v2062
    %v2065 = vmul.f32 %v2057, %v2062
    %v2066 = vmul.f32 %v2058, %v2062
    %v2067 = vmul.f32 %v2059, %v2062
    %v2068 = vld [vmem:[%s89] sm:$0x1]
    %v2070 = vperm.slane %v2068, 0
    %v2072 = vadd.f32 %v2064, %v2070
    %v2073 = vadd.f32 %v2065, %v2070
    %v2074 = vadd.f32 %v2066, %v2070
    %v2075 = vadd.f32 %v2067, %v2070
    %v2076 = vld [vmem:[%s63] sm:$0xff]
    %v2077 = vld [vmem:[%s63 + $0x8] sm:$0xff]
    %v2078 = vld [vmem:[%s63 + $0x10] sm:$0xff]
    %v2079 = vld [vmem:[%s63 + $0x18] sm:$0xff]
    %v2080 = vld [vmem:[%s65] sm:$0x1]
    %v2082 = vperm.slane %v2080, 0
    %v2085 = vsel %vm384, %v1917, 0
    %v2088 = vsel %vm384, %v1918, 0
    %v2091 = vsel %vm384, %v1919, 0
    %v2094 = vsel %vm384, %v1920, 0
    %2096 = vmatpush.msra.mxu0 0.0
    %2097 = vmatpush.msra.mxu0 0.0
    %2098 = vmatpush.msra.mxu0 0.0
    %2099 = vmatpush.msra.mxu0 0.0
    %2100 = vmatpush.msra.mxu0 0.0
    %2101 = vmatpush.msra.mxu0 0.0
    %2102 = vmatpush.msra.mxu0 0.0
    %2103 = vmatpush.msra.mxu0 0.0
    %2104 = vmatpush.msra.mxu0 0.0
    %2105 = vmatpush.msra.mxu0 0.0
    %2106 = vmatpush.msra.mxu0 0.0
    %2107 = vmatpush.msra.mxu0 0.0
    %2108 = vmatpush.msra.mxu0 %v2079
    %2109 = vmatpush.msra.mxu0 %v2078
    %2110 = vmatpush.msra.mxu0 %v2077
    %2111 = vmatpush.msra.mxu0 %v2076
    %2112 = vmatmul.f32.gmra.mxu0 %v2085
    %v2113 = vpop.f32.mrf.mxu0
    %v2114 = vadd.f32 %v2082, %v2113
    %2115 = vmatmul.f32.gmra.mxu0 %v2088
    %v2116 = vpop.f32.mrf.mxu0
    %v2117 = vadd.f32 %v2082, %v2116
    %2118 = vmatmul.f32.gmra.mxu0 %v2091
    %v2119 = vpop.f32.mrf.mxu0
    %v2120 = vadd.f32 %v2082, %v2119
    %2121 = vmatmul.f32.gmra.mxu0 %v2094
    %v2122 = vpop.f32.mrf.mxu0
    %v2123 = vadd.f32 %v2082, %v2122
    %2124 = vdwg.mxu0
    %v2125 = vld [vmem:[%s67] sm:$0xff]
    %v2126 = vld [vmem:[%s67 + $0x8] sm:$0xff]
    %v2127 = vld [vmem:[%s67 + $0x10] sm:$0xff]
    %v2128 = vld [vmem:[%s67 + $0x18] sm:$0xff]
    %v2129 = vld [vmem:[%s69] sm:$0x1]
    %v2131 = vperm.slane %v2129, 0
    %2133 = vmatpush.msra.mxu0 0.0
    %2134 = vmatpush.msra.mxu0 0.0
    %2135 = vmatpush.msra.mxu0 0.0
    %2136 = vmatpush.msra.mxu0 0.0
    %2137 = vmatpush.msra.mxu0 0.0
    %2138 = vmatpush.msra.mxu0 0.0
    %2139 = vmatpush.msra.mxu0 0.0
    %2140 = vmatpush.msra.mxu0 0.0
    %2141 = vmatpush.msra.mxu0 0.0
    %2142 = vmatpush.msra.mxu0 0.0
    %2143 = vmatpush.msra.mxu0 0.0
    %2144 = vmatpush.msra.mxu0 0.0
    %2145 = vmatpush.msra.mxu0 %v2128
    %2146 = vmatpush.msra.mxu0 %v2127
    %2147 = vmatpush.msra.mxu0 %v2126
    %2148 = vmatpush.msra.mxu0 %v2125
    %2149 = vmatmul.f32.gmra.mxu0 %v2085
    %v2150 = vpop.f32.mrf.mxu0
    %v2151 = vadd.f32 %v2131, %v2150
    %2152 = vmatmul.f32.gmra.mxu0 %v2088
    %v2153 = vpop.f32.mrf.mxu0
    %v2154 = vadd.f32 %v2131, %v2153
    %2155 = vmatmul.f32.gmra.mxu0 %v2091
    %v2156 = vpop.f32.mrf.mxu0
    %v2157 = vadd.f32 %v2131, %v2156
    %2158 = vmatmul.f32.gmra.mxu0 %v2094
    %v2159 = vpop.f32.mrf.mxu0
    %v2160 = vadd.f32 %v2131, %v2159
    %2161 = vdwg.mxu0
    %v2162 = vld [vmem:[%s71] sm:$0xff]
    %v2163 = vld [vmem:[%s71 + $0x8] sm:$0xff]
    %v2164 = vld [vmem:[%s71 + $0x10] sm:$0xff]
    %v2165 = vld [vmem:[%s71 + $0x18] sm:$0xff]
    %v2166 = vld [vmem:[%s73] sm:$0x1]
    %v2168 = vperm.slane %v2166, 0
    %2170 = vmatpush.msra.mxu0 0.0
    %2171 = vmatpush.msra.mxu0 0.0
    %2172 = vmatpush.msra.mxu0 0.0
    %2173 = vmatpush.msra.mxu0 0.0
    %2174 = vmatpush.msra.mxu0 0.0
    %2175 = vmatpush.msra.mxu0 0.0
    %2176 = vmatpush.msra.mxu0 0.0
    %2177 = vmatpush.msra.mxu0 0.0
    %2178 = vmatpush.msra.mxu0 0.0
    %2179 = vmatpush.msra.mxu0 0.0
    %2180 = vmatpush.msra.mxu0 0.0
    %2181 = vmatpush.msra.mxu0 0.0
    %2182 = vmatpush.msra.mxu0 %v2165
    %2183 = vmatpush.msra.mxu0 %v2164
    %2184 = vmatpush.msra.mxu0 %v2163
    %2185 = vmatpush.msra.mxu0 %v2162
    %2186 = vmatmul.f32.gmra.mxu0 %v2085
    %v2187 = vpop.f32.mrf.mxu0
    %v2188 = vadd.f32 %v2168, %v2187
    %2189 = vmatmul.f32.gmra.mxu0 %v2088
    %v2190 = vpop.f32.mrf.mxu0
    %v2191 = vadd.f32 %v2168, %v2190
    %2192 = vmatmul.f32.gmra.mxu0 %v2091
    %v2193 = vpop.f32.mrf.mxu0
    %v2194 = vadd.f32 %v2168, %v2193
    %2195 = vmatmul.f32.gmra.mxu0 %v2094
    %v2196 = vpop.f32.mrf.mxu0
    %v2197 = vadd.f32 %v2168, %v2196
    %2198 = vdwg.mxu0
    %v2200 = vsel %vm675, %v2114, 0
    %v2203 = vsel %vm675, %v2117, 0
    %v2206 = vsel %vm675, %v2120, 0
    %v2209 = vsel %vm675, %v2123, 0
    %v2212 = vsel %vm675, %v2151, 0
    %v2215 = vsel %vm675, %v2154, 0
    %v2218 = vsel %vm675, %v2157, 0
    %v2221 = vsel %vm675, %v2160, 0
    %2223 = vmatpush.xpose.msra.mxu0 0.0
    %2224 = vmatpush.xpose.msra.mxu0 0.0
    %2225 = vmatpush.xpose.msra.mxu0 0.0
    %2226 = vmatpush.xpose.msra.mxu0 0.0
    %2227 = vmatpush.xpose.msra.mxu0 0.0
    %2228 = vmatpush.xpose.msra.mxu0 0.0
    %2229 = vmatpush.xpose.msra.mxu0 0.0
    %2230 = vmatpush.xpose.msra.mxu0 0.0
    %2231 = vmatpush.xpose.msra.mxu0 0.0
    %2232 = vmatpush.xpose.msra.mxu0 0.0
    %2233 = vmatpush.xpose.msra.mxu0 0.0
    %2234 = vmatpush.xpose.msra.mxu0 0.0
    %2235 = vmatpush.xpose.msra.mxu0 %v2221
    %2236 = vmatpush.xpose.msra.mxu0 %v2218
    %2237 = vmatpush.xpose.msra.mxu0 %v2215
    %2238 = vmatpush.xpose.msra.mxu0 %v2212
    %2239 = vmatmul.f32.gmra.mxu0 %v2200
    %v2240 = vpop.f32.mrf.mxu0
    %v2241 = vadd.f32 0.0, %v2240
    %2242 = vmatmul.f32.gmra.mxu0 %v2203
    %v2243 = vpop.f32.mrf.mxu0
    %v2244 = vadd.f32 0.0, %v2243
    %2245 = vmatmul.f32.gmra.mxu0 %v2206
    %v2246 = vpop.f32.mrf.mxu0
    %v2247 = vadd.f32 0.0, %v2246
    %2248 = vmatmul.f32.gmra.mxu0 %v2209
    %v2249 = vpop.f32.mrf.mxu0
    %v2250 = vadd.f32 0.0, %v2249
    %2251 = vdwg.mxu0
    %v2252 = vsel %vm384, %v2241, -inf
    %2253 = vmax.xlane.f32.xlu0 %v2252
    %v2254 = vpop.xlane.xlu0 %2253
    %v2255 = vsel %vm384, %v2244, -inf
    %2256 = vmax.xlane.f32.xlu0 %v2255
    %v2257 = vpop.xlane.xlu0 %2256
    %v2258 = vsel %vm384, %v2247, -inf
    %2259 = vmax.xlane.f32.xlu0 %v2258
    %v2260 = vpop.xlane.xlu0 %2259
    %v2261 = vsel %vm384, %v2250, -inf
    %2262 = vmax.xlane.f32.xlu0 %v2261
    %v2263 = vpop.xlane.xlu0 %2262
    %v2264 = vsub.f32 %v2241, %v2254
    %v2265 = vsub.f32 %v2244, %v2257
    %v2266 = vsub.f32 %v2247, %v2260
    %v2267 = vsub.f32 %v2250, %v2263
    %v2268 = vmul.f32 %v2264, 1.442695
    %v2269 = vpow.pop %v2268
    %v2270 = vmul.f32 %v2265, 1.442695
    %v2271 = vpow.pop %v2270
    %v2272 = vmul.f32 %v2266, 1.442695
    %v2273 = vpow.pop %v2272
    %v2274 = vmul.f32 %v2267, 1.442695
    %v2275 = vpow.pop %v2274
    %v2276 = vsel %vm384, %v2269, 0.0
    %2277 = vadd.xlane.f32.xlu0 %v2276
    %v2278 = vpop.xlane.xlu0 %2277
    %v2279 = vsel %vm384, %v2271, 0.0
    %2280 = vadd.xlane.f32.xlu0 %v2279
    %v2281 = vpop.xlane.xlu0 %2280
    %v2282 = vsel %vm384, %v2273, 0.0
    %2283 = vadd.xlane.f32.xlu0 %v2282
    %v2284 = vpop.xlane.xlu0 %2283
    %v2285 = vsel %vm384, %v2275, 0.0
    %2286 = vadd.xlane.f32.xlu0 %v2285
    %v2287 = vpop.xlane.xlu0 %2286
    %v2288 = vrcp.pop %v2278
    %v2289 = vrcp.pop %v2281
    %v2290 = vrcp.pop %v2284
    %v2291 = vrcp.pop %v2287
    %v2292 = vmul.f32 %v2269, %v2288
    %v2293 = vmul.f32 %v2271, %v2289
    %v2294 = vmul.f32 %v2273, %v2290
    %v2295 = vmul.f32 %v2275, %v2291
    %v2297 = vsel %vm384, %v2292, 0
    %v2300 = vsel %vm384, %v2293, 0
    %v2303 = vsel %vm384, %v2294, 0
    %v2306 = vsel %vm384, %v2295, 0
    %2308 = vmatpush.msra.mxu0 0.0
    %2309 = vmatpush.msra.mxu0 0.0
    %2310 = vmatpush.msra.mxu0 0.0
    %2311 = vmatpush.msra.mxu0 0.0
    %2312 = vmatpush.msra.mxu0 0.0
    %2313 = vmatpush.msra.mxu0 0.0
    %2314 = vmatpush.msra.mxu0 0.0
    %2315 = vmatpush.msra.mxu0 0.0
    %2316 = vmatpush.msra.mxu0 0.0
    %2317 = vmatpush.msra.mxu0 0.0
    %2318 = vmatpush.msra.mxu0 0.0
    %2319 = vmatpush.msra.mxu0 0.0
    %2320 = vmatpush.msra.mxu0 %v2197
    %2321 = vmatpush.msra.mxu0 %v2194
    %2322 = vmatpush.msra.mxu0 %v2191
    %2323 = vmatpush.msra.mxu0 %v2188
    %2324 = vmatmul.f32.gmra.mxu0 %v2297
    %v2325 = vpop.f32.mrf.mxu0
    %v2326 = vadd.f32 0.0, %v2325
    %2327 = vmatmul.f32.gmra.mxu0 %v2300
    %v2328 = vpop.f32.mrf.mxu0
    %v2329 = vadd.f32 0.0, %v2328
    %2330 = vmatmul.f32.gmra.mxu0 %v2303
    %v2331 = vpop.f32.mrf.mxu0
    %v2332 = vadd.f32 0.0, %v2331
    %2333 = vmatmul.f32.gmra.mxu0 %v2306
    %v2334 = vpop.f32.mrf.mxu0
    %v2335 = vadd.f32 0.0, %v2334
    %2336 = vdwg.mxu0
    %v2337 = vld [vmem:[%s75] sm:$0xff]
    %s2338 = scalar_lea.vmem %s63, 32
    %v2339 = vld [vmem:[%s2338] sm:$0xff]
    %v2340 = vld [vmem:[%s2338 + $0x8] sm:$0xff]
    %v2341 = vld [vmem:[%s2338 + $0x10] sm:$0xff]
    %v2342 = vld [vmem:[%s2338 + $0x18] sm:$0xff]
    %s2343 = scalar_lea.vmem %s65, 1
    %v2344 = vld [vmem:[%s2343] sm:$0x1]
    %v2346 = vperm.slane %v2344, 0
    %2348 = vmatpush.msra.mxu0 0.0
    %2349 = vmatpush.msra.mxu0 0.0
    %2350 = vmatpush.msra.mxu0 0.0
    %2351 = vmatpush.msra.mxu0 0.0
    %2352 = vmatpush.msra.mxu0 0.0
    %2353 = vmatpush.msra.mxu0 0.0
    %2354 = vmatpush.msra.mxu0 0.0
    %2355 = vmatpush.msra.mxu0 0.0
    %2356 = vmatpush.msra.mxu0 0.0
    %2357 = vmatpush.msra.mxu0 0.0
    %2358 = vmatpush.msra.mxu0 0.0
    %2359 = vmatpush.msra.mxu0 0.0
    %2360 = vmatpush.msra.mxu0 %v2342
    %2361 = vmatpush.msra.mxu0 %v2341
    %2362 = vmatpush.msra.mxu0 %v2340
    %2363 = vmatpush.msra.mxu0 %v2339
    %2364 = vmatmul.f32.gmra.mxu0 %v2085
    %v2365 = vpop.f32.mrf.mxu0
    %v2366 = vadd.f32 %v2346, %v2365
    %2367 = vmatmul.f32.gmra.mxu0 %v2088
    %v2368 = vpop.f32.mrf.mxu0
    %v2369 = vadd.f32 %v2346, %v2368
    %2370 = vmatmul.f32.gmra.mxu0 %v2091
    %v2371 = vpop.f32.mrf.mxu0
    %v2372 = vadd.f32 %v2346, %v2371
    %2373 = vmatmul.f32.gmra.mxu0 %v2094
    %v2374 = vpop.f32.mrf.mxu0
    %v2375 = vadd.f32 %v2346, %v2374
    %2376 = vdwg.mxu0
    %s2377 = scalar_lea.vmem %s67, 32
    %v2378 = vld [vmem:[%s2377] sm:$0xff]
    %v2379 = vld [vmem:[%s2377 + $0x8] sm:$0xff]
    %v2380 = vld [vmem:[%s2377 + $0x10] sm:$0xff]
    %v2381 = vld [vmem:[%s2377 + $0x18] sm:$0xff]
    %s2382 = scalar_lea.vmem %s69, 1
    %v2383 = vld [vmem:[%s2382] sm:$0x1]
    %v2385 = vperm.slane %v2383, 0
    %2387 = vmatpush.msra.mxu0 0.0
    %2388 = vmatpush.msra.mxu0 0.0
    %2389 = vmatpush.msra.mxu0 0.0
    %2390 = vmatpush.msra.mxu0 0.0
    %2391 = vmatpush.msra.mxu0 0.0
    %2392 = vmatpush.msra.mxu0 0.0
    %2393 = vmatpush.msra.mxu0 0.0
    %2394 = vmatpush.msra.mxu0 0.0
    %2395 = vmatpush.msra.mxu0 0.0
    %2396 = vmatpush.msra.mxu0 0.0
    %2397 = vmatpush.msra.mxu0 0.0
    %2398 = vmatpush.msra.mxu0 0.0
    %2399 = vmatpush.msra.mxu0 %v2381
    %2400 = vmatpush.msra.mxu0 %v2380
    %2401 = vmatpush.msra.mxu0 %v2379
    %2402 = vmatpush.msra.mxu0 %v2378
    %2403 = vmatmul.f32.gmra.mxu0 %v2085
    %v2404 = vpop.f32.mrf.mxu0
    %v2405 = vadd.f32 %v2385, %v2404
    %2406 = vmatmul.f32.gmra.mxu0 %v2088
    %v2407 = vpop.f32.mrf.mxu0
    %v2408 = vadd.f32 %v2385, %v2407
    %2409 = vmatmul.f32.gmra.mxu0 %v2091
    %v2410 = vpop.f32.mrf.mxu0
    %v2411 = vadd.f32 %v2385, %v2410
    %2412 = vmatmul.f32.gmra.mxu0 %v2094
    %v2413 = vpop.f32.mrf.mxu0
    %v2414 = vadd.f32 %v2385, %v2413
    %2415 = vdwg.mxu0
    %s2416 = scalar_lea.vmem %s71, 32
    %v2417 = vld [vmem:[%s2416] sm:$0xff]
    %v2418 = vld [vmem:[%s2416 + $0x8] sm:$0xff]
    %v2419 = vld [vmem:[%s2416 + $0x10] sm:$0xff]
    %v2420 = vld [vmem:[%s2416 + $0x18] sm:$0xff]
    %s2421 = scalar_lea.vmem %s73, 1
    %v2422 = vld [vmem:[%s2421] sm:$0x1]
    %v2424 = vperm.slane %v2422, 0
    %2426 = vmatpush.msra.mxu0 0.0
    %2427 = vmatpush.msra.mxu0 0.0
    %2428 = vmatpush.msra.mxu0 0.0
    %2429 = vmatpush.msra.mxu0 0.0
    %2430 = vmatpush.msra.mxu0 0.0
    %2431 = vmatpush.msra.mxu0 0.0
    %2432 = vmatpush.msra.mxu0 0.0
    %2433 = vmatpush.msra.mxu0 0.0
    %2434 = vmatpush.msra.mxu0 0.0
    %2435 = vmatpush.msra.mxu0 0.0
    %2436 = vmatpush.msra.mxu0 0.0
    %2437 = vmatpush.msra.mxu0 0.0
    %2438 = vmatpush.msra.mxu0 %v2420
    %2439 = vmatpush.msra.mxu0 %v2419
    %2440 = vmatpush.msra.mxu0 %v2418
    %2441 = vmatpush.msra.mxu0 %v2417
    %2442 = vmatmul.f32.gmra.mxu0 %v2085
    %v2443 = vpop.f32.mrf.mxu0
    %v2444 = vadd.f32 %v2424, %v2443
    %2445 = vmatmul.f32.gmra.mxu0 %v2088
    %v2446 = vpop.f32.mrf.mxu0
    %v2447 = vadd.f32 %v2424, %v2446
    %2448 = vmatmul.f32.gmra.mxu0 %v2091
    %v2449 = vpop.f32.mrf.mxu0
    %v2450 = vadd.f32 %v2424, %v2449
    %2451 = vmatmul.f32.gmra.mxu0 %v2094
    %v2452 = vpop.f32.mrf.mxu0
    %v2453 = vadd.f32 %v2424, %v2452
    %2454 = vdwg.mxu0
    %v2456 = vsel %vm675, %v2366, 0
    %v2459 = vsel %vm675, %v2369, 0
    %v2462 = vsel %vm675, %v2372, 0
    %v2465 = vsel %vm675, %v2375, 0
    %v2468 = vsel %vm675, %v2405, 0
    %v2471 = vsel %vm675, %v2408, 0
    %v2474 = vsel %vm675, %v2411, 0
    %v2477 = vsel %vm675, %v2414, 0
    %2479 = vmatpush.xpose.msra.mxu0 0.0
    %2480 = vmatpush.xpose.msra.mxu0 0.0
    %2481 = vmatpush.xpose.msra.mxu0 0.0
    %2482 = vmatpush.xpose.msra.mxu0 0.0
    %2483 = vmatpush.xpose.msra.mxu0 0.0
    %2484 = vmatpush.xpose.msra.mxu0 0.0
    %2485 = vmatpush.xpose.msra.mxu0 0.0
    %2486 = vmatpush.xpose.msra.mxu0 0.0
    %2487 = vmatpush.xpose.msra.mxu0 0.0
    %2488 = vmatpush.xpose.msra.mxu0 0.0
    %2489 = vmatpush.xpose.msra.mxu0 0.0
    %2490 = vmatpush.xpose.msra.mxu0 0.0
    %2491 = vmatpush.xpose.msra.mxu0 %v2477
    %2492 = vmatpush.xpose.msra.mxu0 %v2474
    %2493 = vmatpush.xpose.msra.mxu0 %v2471
    %2494 = vmatpush.xpose.msra.mxu0 %v2468
    %2495 = vmatmul.f32.gmra.mxu0 %v2456
    %v2496 = vpop.f32.mrf.mxu0
    %v2497 = vadd.f32 0.0, %v2496
    %2498 = vmatmul.f32.gmra.mxu0 %v2459
    %v2499 = vpop.f32.mrf.mxu0
    %v2500 = vadd.f32 0.0, %v2499
    %2501 = vmatmul.f32.gmra.mxu0 %v2462
    %v2502 = vpop.f32.mrf.mxu0
    %v2503 = vadd.f32 0.0, %v2502
    %2504 = vmatmul.f32.gmra.mxu0 %v2465
    %v2505 = vpop.f32.mrf.mxu0
    %v2506 = vadd.f32 0.0, %v2505
    %2507 = vdwg.mxu0
    %v2508 = vsel %vm384, %v2497, -inf
    %2509 = vmax.xlane.f32.xlu0 %v2508
    %v2510 = vpop.xlane.xlu0 %2509
    %v2511 = vsel %vm384, %v2500, -inf
    %2512 = vmax.xlane.f32.xlu0 %v2511
    %v2513 = vpop.xlane.xlu0 %2512
    %v2514 = vsel %vm384, %v2503, -inf
    %2515 = vmax.xlane.f32.xlu0 %v2514
    %v2516 = vpop.xlane.xlu0 %2515
    %v2517 = vsel %vm384, %v2506, -inf
    %2518 = vmax.xlane.f32.xlu0 %v2517
    %v2519 = vpop.xlane.xlu0 %2518
    %v2520 = vsub.f32 %v2497, %v2510
    %v2521 = vsub.f32 %v2500, %v2513
    %v2522 = vsub.f32 %v2503, %v2516
    %v2523 = vsub.f32 %v2506, %v2519
    %v2524 = vmul.f32 %v2520, 1.442695
    %v2525 = vpow.pop %v2524
    %v2526 = vmul.f32 %v2521, 1.442695
    %v2527 = vpow.pop %v2526
    %v2528 = vmul.f32 %v2522, 1.442695
    %v2529 = vpow.pop %v2528
    %v2530 = vmul.f32 %v2523, 1.442695
    %v2531 = vpow.pop %v2530
    %v2532 = vsel %vm384, %v2525, 0.0
    %2533 = vadd.xlane.f32.xlu0 %v2532
    %v2534 = vpop.xlane.xlu0 %2533
    %v2535 = vsel %vm384, %v2527, 0.0
    %2536 = vadd.xlane.f32.xlu0 %v2535
    %v2537 = vpop.xlane.xlu0 %2536
    %v2538 = vsel %vm384, %v2529, 0.0
    %2539 = vadd.xlane.f32.xlu0 %v2538
    %v2540 = vpop.xlane.xlu0 %2539
    %v2541 = vsel %vm384, %v2531, 0.0
    %2542 = vadd.xlane.f32.xlu0 %v2541
    %v2543 = vpop.xlane.xlu0 %2542
    %v2544 = vrcp.pop %v2534
    %v2545 = vrcp.pop %v2537
    %v2546 = vrcp.pop %v2540
    %v2547 = vrcp.pop %v2543
    %v2548 = vmul.f32 %v2525, %v2544
    %v2549 = vmul.f32 %v2527, %v2545
    %v2550 = vmul.f32 %v2529, %v2546
    %v2551 = vmul.f32 %v2531, %v2547
    %v2553 = vsel %vm384, %v2548, 0
    %v2556 = vsel %vm384, %v2549, 0
    %v2559 = vsel %vm384, %v2550, 0
    %v2562 = vsel %vm384, %v2551, 0
    %2564 = vmatpush.msra.mxu0 0.0
    %2565 = vmatpush.msra.mxu0 0.0
    %2566 = vmatpush.msra.mxu0 0.0
    %2567 = vmatpush.msra.mxu0 0.0
    %2568 = vmatpush.msra.mxu0 0.0
    %2569 = vmatpush.msra.mxu0 0.0
    %2570 = vmatpush.msra.mxu0 0.0
    %2571 = vmatpush.msra.mxu0 0.0
    %2572 = vmatpush.msra.mxu0 0.0
    %2573 = vmatpush.msra.mxu0 0.0
    %2574 = vmatpush.msra.mxu0 0.0
    %2575 = vmatpush.msra.mxu0 0.0
    %2576 = vmatpush.msra.mxu0 %v2453
    %2577 = vmatpush.msra.mxu0 %v2450
    %2578 = vmatpush.msra.mxu0 %v2447
    %2579 = vmatpush.msra.mxu0 %v2444
    %2580 = vmatmul.f32.gmra.mxu0 %v2553
    %v2581 = vpop.f32.mrf.mxu0
    %v2582 = vadd.f32 0.0, %v2581
    %2583 = vmatmul.f32.gmra.mxu0 %v2556
    %v2584 = vpop.f32.mrf.mxu0
    %v2585 = vadd.f32 0.0, %v2584
    %2586 = vmatmul.f32.gmra.mxu0 %v2559
    %v2587 = vpop.f32.mrf.mxu0
    %v2588 = vadd.f32 0.0, %v2587
    %2589 = vmatmul.f32.gmra.mxu0 %v2562
    %v2590 = vpop.f32.mrf.mxu0
    %v2591 = vadd.f32 0.0, %v2590
    %2592 = vdwg.mxu0
    %s2593 = scalar_lea.vmem %s75, 8
    %v2594 = vld [vmem:[%s2593] sm:$0xff]
    %v2596 = vsel %vm675, %v2582, 0
    %v2599 = vsel %vm675, %v2585, 0
    %v2602 = vsel %vm675, %v2588, 0
    %v2605 = vsel %vm675, %v2591, 0
    %2607 = vmatpush.msra.mxu0 0.0
    %2608 = vmatpush.msra.mxu0 0.0
    %2609 = vmatpush.msra.mxu0 0.0
    %2610 = vmatpush.msra.mxu0 0.0
    %2611 = vmatpush.msra.mxu0 0.0
    %2612 = vmatpush.msra.mxu0 0.0
    %2613 = vmatpush.msra.mxu0 0.0
    %2614 = vmatpush.msra.mxu0 0.0
    %2615 = vmatpush.msra.mxu0 0.0
    %2616 = vmatpush.msra.mxu0 0.0
    %2617 = vmatpush.msra.mxu0 0.0
    %2618 = vmatpush.msra.mxu0 0.0
    %2619 = vmatpush.msra.mxu0 0.0
    %2620 = vmatpush.msra.mxu0 0.0
    %2621 = vmatpush.msra.mxu0 0.0
    %2622 = vmatpush.msra.mxu0 %v2594
    %2623 = vmatmul.f32.gmra.mxu0 %v2596
    %v2624 = vpop.f32.mrf.mxu0
    %v2625 = vadd.f32 0.0, %v2624
    %2626 = vmatmul.f32.gmra.mxu0 %v2599
    %v2627 = vpop.f32.mrf.mxu0
    %v2628 = vadd.f32 0.0, %v2627
    %2629 = vmatmul.f32.gmra.mxu0 %v2602
    %v2630 = vpop.f32.mrf.mxu0
    %v2631 = vadd.f32 0.0, %v2630
    %2632 = vmatmul.f32.gmra.mxu0 %v2605
    %v2633 = vpop.f32.mrf.mxu0
    %v2634 = vadd.f32 0.0, %v2633
    %2635 = vdwg.mxu0
    %v2637 = vsel %vm675, %v2326, 0
    %v2640 = vsel %vm675, %v2329, 0
    %v2643 = vsel %vm675, %v2332, 0
    %v2646 = vsel %vm675, %v2335, 0
    %2648 = vmatpush.msra.mxu0 0.0
    %2649 = vmatpush.msra.mxu0 0.0
    %2650 = vmatpush.msra.mxu0 0.0
    %2651 = vmatpush.msra.mxu0 0.0
    %2652 = vmatpush.msra.mxu0 0.0
    %2653 = vmatpush.msra.mxu0 0.0
    %2654 = vmatpush.msra.mxu0 0.0
    %2655 = vmatpush.msra.mxu0 0.0
    %2656 = vmatpush.msra.mxu0 0.0
    %2657 = vmatpush.msra.mxu0 0.0
    %2658 = vmatpush.msra.mxu0 0.0
    %2659 = vmatpush.msra.mxu0 0.0
    %2660 = vmatpush.msra.mxu0 0.0
    %2661 = vmatpush.msra.mxu0 0.0
    %2662 = vmatpush.msra.mxu0 0.0
    %2663 = vmatpush.msra.mxu0 %v2337
    %2664 = vmatmul.f32.gmra.mxu0 %v2637
    %v2665 = vpop.f32.mrf.mxu0
    %v2666 = vadd.f32 %v2625, %v2665
    %2667 = vmatmul.f32.gmra.mxu0 %v2640
    %v2668 = vpop.f32.mrf.mxu0
    %v2669 = vadd.f32 %v2628, %v2668
    %2670 = vmatmul.f32.gmra.mxu0 %v2643
    %v2671 = vpop.f32.mrf.mxu0
    %v2672 = vadd.f32 %v2631, %v2671
    %2673 = vmatmul.f32.gmra.mxu0 %v2646
    %v2674 = vpop.f32.mrf.mxu0
    %v2675 = vadd.f32 %v2634, %v2674
    %2676 = vdwg.mxu0
    %s2677 = scalar_lea.vmem %s63, 64
    %v2678 = vld [vmem:[%s2677] sm:$0xff]
    %v2679 = vld [vmem:[%s2677 + $0x8] sm:$0xff]
    %v2680 = vld [vmem:[%s2677 + $0x10] sm:$0xff]
    %v2681 = vld [vmem:[%s2677 + $0x18] sm:$0xff]
    %s2682 = scalar_lea.vmem %s65, 2
    %v2683 = vld [vmem:[%s2682] sm:$0x1]
    %v2685 = vperm.slane %v2683, 0
    %2687 = vmatpush.msra.mxu0 0.0
    %2688 = vmatpush.msra.mxu0 0.0
    %2689 = vmatpush.msra.mxu0 0.0
    %2690 = vmatpush.msra.mxu0 0.0
    %2691 = vmatpush.msra.mxu0 0.0
    %2692 = vmatpush.msra.mxu0 0.0
    %2693 = vmatpush.msra.mxu0 0.0
    %2694 = vmatpush.msra.mxu0 0.0
    %2695 = vmatpush.msra.mxu0 0.0
    %2696 = vmatpush.msra.mxu0 0.0
    %2697 = vmatpush.msra.mxu0 0.0
    %2698 = vmatpush.msra.mxu0 0.0
    %2699 = vmatpush.msra.mxu0 %v2681
    %2700 = vmatpush.msra.mxu0 %v2680
    %2701 = vmatpush.msra.mxu0 %v2679
    %2702 = vmatpush.msra.mxu0 %v2678
    %2703 = vmatmul.f32.gmra.mxu0 %v2085
    %v2704 = vpop.f32.mrf.mxu0
    %v2705 = vadd.f32 %v2685, %v2704
    %2706 = vmatmul.f32.gmra.mxu0 %v2088
    %v2707 = vpop.f32.mrf.mxu0
    %v2708 = vadd.f32 %v2685, %v2707
    %2709 = vmatmul.f32.gmra.mxu0 %v2091
    %v2710 = vpop.f32.mrf.mxu0
    %v2711 = vadd.f32 %v2685, %v2710
    %2712 = vmatmul.f32.gmra.mxu0 %v2094
    %v2713 = vpop.f32.mrf.mxu0
    %v2714 = vadd.f32 %v2685, %v2713
    %2715 = vdwg.mxu0
    %s2716 = scalar_lea.vmem %s67, 64
    %v2717 = vld [vmem:[%s2716] sm:$0xff]
    %v2718 = vld [vmem:[%s2716 + $0x8] sm:$0xff]
    %v2719 = vld [vmem:[%s2716 + $0x10] sm:$0xff]
    %v2720 = vld [vmem:[%s2716 + $0x18] sm:$0xff]
    %s2721 = scalar_lea.vmem %s69, 2
    %v2722 = vld [vmem:[%s2721] sm:$0x1]
    %v2724 = vperm.slane %v2722, 0
    %2726 = vmatpush.msra.mxu0 0.0
    %2727 = vmatpush.msra.mxu0 0.0
    %2728 = vmatpush.msra.mxu0 0.0
    %2729 = vmatpush.msra.mxu0 0.0
    %2730 = vmatpush.msra.mxu0 0.0
    %2731 = vmatpush.msra.mxu0 0.0
    %2732 = vmatpush.msra.mxu0 0.0
    %2733 = vmatpush.msra.mxu0 0.0
    %2734 = vmatpush.msra.mxu0 0.0
    %2735 = vmatpush.msra.mxu0 0.0
    %2736 = vmatpush.msra.mxu0 0.0
    %2737 = vmatpush.msra.mxu0 0.0
    %2738 = vmatpush.msra.mxu0 %v2720
    %2739 = vmatpush.msra.mxu0 %v2719
    %2740 = vmatpush.msra.mxu0 %v2718
    %2741 = vmatpush.msra.mxu0 %v2717
    %2742 = vmatmul.f32.gmra.mxu0 %v2085
    %v2743 = vpop.f32.mrf.mxu0
    %v2744 = vadd.f32 %v2724, %v2743
    %2745 = vmatmul.f32.gmra.mxu0 %v2088
    %v2746 = vpop.f32.mrf.mxu0
    %v2747 = vadd.f32 %v2724, %v2746
    %2748 = vmatmul.f32.gmra.mxu0 %v2091
    %v2749 = vpop.f32.mrf.mxu0
    %v2750 = vadd.f32 %v2724, %v2749
    %2751 = vmatmul.f32.gmra.mxu0 %v2094
    %v2752 = vpop.f32.mrf.mxu0
    %v2753 = vadd.f32 %v2724, %v2752
    %2754 = vdwg.mxu0
    %s2755 = scalar_lea.vmem %s71, 64
    %v2756 = vld [vmem:[%s2755] sm:$0xff]
    %v2757 = vld [vmem:[%s2755 + $0x8] sm:$0xff]
    %v2758 = vld [vmem:[%s2755 + $0x10] sm:$0xff]
    %v2759 = vld [vmem:[%s2755 + $0x18] sm:$0xff]
    %s2760 = scalar_lea.vmem %s73, 2
    %v2761 = vld [vmem:[%s2760] sm:$0x1]
    %v2763 = vperm.slane %v2761, 0
    %2765 = vmatpush.msra.mxu0 0.0
    %2766 = vmatpush.msra.mxu0 0.0
    %2767 = vmatpush.msra.mxu0 0.0
    %2768 = vmatpush.msra.mxu0 0.0
    %2769 = vmatpush.msra.mxu0 0.0
    %2770 = vmatpush.msra.mxu0 0.0
    %2771 = vmatpush.msra.mxu0 0.0
    %2772 = vmatpush.msra.mxu0 0.0
    %2773 = vmatpush.msra.mxu0 0.0
    %2774 = vmatpush.msra.mxu0 0.0
    %2775 = vmatpush.msra.mxu0 0.0
    %2776 = vmatpush.msra.mxu0 0.0
    %2777 = vmatpush.msra.mxu0 %v2759
    %2778 = vmatpush.msra.mxu0 %v2758
    %2779 = vmatpush.msra.mxu0 %v2757
    %2780 = vmatpush.msra.mxu0 %v2756
    %2781 = vmatmul.f32.gmra.mxu0 %v2085
    %v2782 = vpop.f32.mrf.mxu0
    %v2783 = vadd.f32 %v2763, %v2782
    %2784 = vmatmul.f32.gmra.mxu0 %v2088
    %v2785 = vpop.f32.mrf.mxu0
    %v2786 = vadd.f32 %v2763, %v2785
    %2787 = vmatmul.f32.gmra.mxu0 %v2091
    %v2788 = vpop.f32.mrf.mxu0
    %v2789 = vadd.f32 %v2763, %v2788
    %2790 = vmatmul.f32.gmra.mxu0 %v2094
    %v2791 = vpop.f32.mrf.mxu0
    %v2792 = vadd.f32 %v2763, %v2791
    %2793 = vdwg.mxu0
    %v2795 = vsel %vm675, %v2705, 0
    %v2798 = vsel %vm675, %v2708, 0
    %v2801 = vsel %vm675, %v2711, 0
    %v2804 = vsel %vm675, %v2714, 0
    %v2807 = vsel %vm675, %v2744, 0
    %v2810 = vsel %vm675, %v2747, 0
    %v2813 = vsel %vm675, %v2750, 0
    %v2816 = vsel %vm675, %v2753, 0
    %2818 = vmatpush.xpose.msra.mxu0 0.0
    %2819 = vmatpush.xpose.msra.mxu0 0.0
    %2820 = vmatpush.xpose.msra.mxu0 0.0
    %2821 = vmatpush.xpose.msra.mxu0 0.0
    %2822 = vmatpush.xpose.msra.mxu0 0.0
    %2823 = vmatpush.xpose.msra.mxu0 0.0
    %2824 = vmatpush.xpose.msra.mxu0 0.0
    %2825 = vmatpush.xpose.msra.mxu0 0.0
    %2826 = vmatpush.xpose.msra.mxu0 0.0
    %2827 = vmatpush.xpose.msra.mxu0 0.0
    %2828 = vmatpush.xpose.msra.mxu0 0.0
    %2829 = vmatpush.xpose.msra.mxu0 0.0
    %2830 = vmatpush.xpose.msra.mxu0 %v2816
    %2831 = vmatpush.xpose.msra.mxu0 %v2813
    %2832 = vmatpush.xpose.msra.mxu0 %v2810
    %2833 = vmatpush.xpose.msra.mxu0 %v2807
    %2834 = vmatmul.f32.gmra.mxu0 %v2795
    %v2835 = vpop.f32.mrf.mxu0
    %v2836 = vadd.f32 0.0, %v2835
    %2837 = vmatmul.f32.gmra.mxu0 %v2798
    %v2838 = vpop.f32.mrf.mxu0
    %v2839 = vadd.f32 0.0, %v2838
    %2840 = vmatmul.f32.gmra.mxu0 %v2801
    %v2841 = vpop.f32.mrf.mxu0
    %v2842 = vadd.f32 0.0, %v2841
    %2843 = vmatmul.f32.gmra.mxu0 %v2804
    %v2844 = vpop.f32.mrf.mxu0
    %v2845 = vadd.f32 0.0, %v2844
    %2846 = vdwg.mxu0
    %v2847 = vsel %vm384, %v2836, -inf
    %2848 = vmax.xlane.f32.xlu0 %v2847
    %v2849 = vpop.xlane.xlu0 %2848
    %v2850 = vsel %vm384, %v2839, -inf
    %2851 = vmax.xlane.f32.xlu0 %v2850
    %v2852 = vpop.xlane.xlu0 %2851
    %v2853 = vsel %vm384, %v2842, -inf
    %2854 = vmax.xlane.f32.xlu0 %v2853
    %v2855 = vpop.xlane.xlu0 %2854
    %v2856 = vsel %vm384, %v2845, -inf
    %2857 = vmax.xlane.f32.xlu0 %v2856
    %v2858 = vpop.xlane.xlu0 %2857
    %v2859 = vsub.f32 %v2836, %v2849
    %v2860 = vsub.f32 %v2839, %v2852
    %v2861 = vsub.f32 %v2842, %v2855
    %v2862 = vsub.f32 %v2845, %v2858
    %v2863 = vmul.f32 %v2859, 1.442695
    %v2864 = vpow.pop %v2863
    %v2865 = vmul.f32 %v2860, 1.442695
    %v2866 = vpow.pop %v2865
    %v2867 = vmul.f32 %v2861, 1.442695
    %v2868 = vpow.pop %v2867
    %v2869 = vmul.f32 %v2862, 1.442695
    %v2870 = vpow.pop %v2869
    %v2871 = vsel %vm384, %v2864, 0.0
    %2872 = vadd.xlane.f32.xlu0 %v2871
    %v2873 = vpop.xlane.xlu0 %2872
    %v2874 = vsel %vm384, %v2866, 0.0
    %2875 = vadd.xlane.f32.xlu0 %v2874
    %v2876 = vpop.xlane.xlu0 %2875
    %v2877 = vsel %vm384, %v2868, 0.0
    %2878 = vadd.xlane.f32.xlu0 %v2877
    %v2879 = vpop.xlane.xlu0 %2878
    %v2880 = vsel %vm384, %v2870, 0.0
    %2881 = vadd.xlane.f32.xlu0 %v2880
    %v2882 = vpop.xlane.xlu0 %2881
    %v2883 = vrcp.pop %v2873
    %v2884 = vrcp.pop %v2876
    %v2885 = vrcp.pop %v2879
    %v2886 = vrcp.pop %v2882
    %v2887 = vmul.f32 %v2864, %v2883
    %v2888 = vmul.f32 %v2866, %v2884
    %v2889 = vmul.f32 %v2868, %v2885
    %v2890 = vmul.f32 %v2870, %v2886
    %v2892 = vsel %vm384, %v2887, 0
    %v2895 = vsel %vm384, %v2888, 0
    %v2898 = vsel %vm384, %v2889, 0
    %v2901 = vsel %vm384, %v2890, 0
    %2903 = vmatpush.msra.mxu0 0.0
    %2904 = vmatpush.msra.mxu0 0.0
    %2905 = vmatpush.msra.mxu0 0.0
    %2906 = vmatpush.msra.mxu0 0.0
    %2907 = vmatpush.msra.mxu0 0.0
    %2908 = vmatpush.msra.mxu0 0.0
    %2909 = vmatpush.msra.mxu0 0.0
    %2910 = vmatpush.msra.mxu0 0.0
    %2911 = vmatpush.msra.mxu0 0.0
    %2912 = vmatpush.msra.mxu0 0.0
    %2913 = vmatpush.msra.mxu0 0.0
    %2914 = vmatpush.msra.mxu0 0.0
    %2915 = vmatpush.msra.mxu0 %v2792
    %2916 = vmatpush.msra.mxu0 %v2789
    %2917 = vmatpush.msra.mxu0 %v2786
    %2918 = vmatpush.msra.mxu0 %v2783
    %2919 = vmatmul.f32.gmra.mxu0 %v2892
    %v2920 = vpop.f32.mrf.mxu0
    %v2921 = vadd.f32 0.0, %v2920
    %2922 = vmatmul.f32.gmra.mxu0 %v2895
    %v2923 = vpop.f32.mrf.mxu0
    %v2924 = vadd.f32 0.0, %v2923
    %2925 = vmatmul.f32.gmra.mxu0 %v2898
    %v2926 = vpop.f32.mrf.mxu0
    %v2927 = vadd.f32 0.0, %v2926
    %2928 = vmatmul.f32.gmra.mxu0 %v2901
    %v2929 = vpop.f32.mrf.mxu0
    %v2930 = vadd.f32 0.0, %v2929
    %2931 = vdwg.mxu0
    %s2932 = scalar_lea.vmem %s75, 16
    %v2933 = vld [vmem:[%s2932] sm:$0xff]
    %v2935 = vsel %vm675, %v2921, 0
    %v2938 = vsel %vm675, %v2924, 0
    %v2941 = vsel %vm675, %v2927, 0
    %v2944 = vsel %vm675, %v2930, 0
    %2946 = vmatpush.msra.mxu0 0.0
    %2947 = vmatpush.msra.mxu0 0.0
    %2948 = vmatpush.msra.mxu0 0.0
    %2949 = vmatpush.msra.mxu0 0.0
    %2950 = vmatpush.msra.mxu0 0.0
    %2951 = vmatpush.msra.mxu0 0.0
    %2952 = vmatpush.msra.mxu0 0.0
    %2953 = vmatpush.msra.mxu0 0.0
    %2954 = vmatpush.msra.mxu0 0.0
    %2955 = vmatpush.msra.mxu0 0.0
    %2956 = vmatpush.msra.mxu0 0.0
    %2957 = vmatpush.msra.mxu0 0.0
    %2958 = vmatpush.msra.mxu0 0.0
    %2959 = vmatpush.msra.mxu0 0.0
    %2960 = vmatpush.msra.mxu0 0.0
    %2961 = vmatpush.msra.mxu0 %v2933
    %2962 = vmatmul.f32.gmra.mxu0 %v2935
    %v2963 = vpop.f32.mrf.mxu0
    %v2964 = vadd.f32 0.0, %v2963
    %2965 = vmatmul.f32.gmra.mxu0 %v2938
    %v2966 = vpop.f32.mrf.mxu0
    %v2967 = vadd.f32 0.0, %v2966
    %2968 = vmatmul.f32.gmra.mxu0 %v2941
    %v2969 = vpop.f32.mrf.mxu0
    %v2970 = vadd.f32 0.0, %v2969
    %2971 = vmatmul.f32.gmra.mxu0 %v2944
    %v2972 = vpop.f32.mrf.mxu0
    %v2973 = vadd.f32 0.0, %v2972
    %2974 = vdwg.mxu0
    %v2975 = vadd.f32 %v2666, %v2964
    %v2976 = vadd.f32 %v2669, %v2967
    %v2977 = vadd.f32 %v2672, %v2970
    %v2978 = vadd.f32 %v2675, %v2973
    %s2979 = scalar_lea.vmem %s63, 96
    %v2980 = vld [vmem:[%s2979] sm:$0xff]
    %v2981 = vld [vmem:[%s2979 + $0x8] sm:$0xff]
    %v2982 = vld [vmem:[%s2979 + $0x10] sm:$0xff]
    %v2983 = vld [vmem:[%s2979 + $0x18] sm:$0xff]
    %s2984 = scalar_lea.vmem %s65, 3
    %v2985 = vld [vmem:[%s2984] sm:$0x1]
    %v2987 = vperm.slane %v2985, 0
    %2989 = vmatpush.msra.mxu0 0.0
    %2990 = vmatpush.msra.mxu0 0.0
    %2991 = vmatpush.msra.mxu0 0.0
    %2992 = vmatpush.msra.mxu0 0.0
    %2993 = vmatpush.msra.mxu0 0.0
    %2994 = vmatpush.msra.mxu0 0.0
    %2995 = vmatpush.msra.mxu0 0.0
    %2996 = vmatpush.msra.mxu0 0.0
    %2997 = vmatpush.msra.mxu0 0.0
    %2998 = vmatpush.msra.mxu0 0.0
    %2999 = vmatpush.msra.mxu0 0.0
    %3000 = vmatpush.msra.mxu0 0.0
    %3001 = vmatpush.msra.mxu0 %v2983
    %3002 = vmatpush.msra.mxu0 %v2982
    %3003 = vmatpush.msra.mxu0 %v2981
    %3004 = vmatpush.msra.mxu0 %v2980
    %3005 = vmatmul.f32.gmra.mxu0 %v2085
    %v3006 = vpop.f32.mrf.mxu0
    %v3007 = vadd.f32 %v2987, %v3006
    %3008 = vmatmul.f32.gmra.mxu0 %v2088
    %v3009 = vpop.f32.mrf.mxu0
    %v3010 = vadd.f32 %v2987, %v3009
    %3011 = vmatmul.f32.gmra.mxu0 %v2091
    %v3012 = vpop.f32.mrf.mxu0
    %v3013 = vadd.f32 %v2987, %v3012
    %3014 = vmatmul.f32.gmra.mxu0 %v2094
    %v3015 = vpop.f32.mrf.mxu0
    %v3016 = vadd.f32 %v2987, %v3015
    %3017 = vdwg.mxu0
    %s3018 = scalar_lea.vmem %s67, 96
    %v3019 = vld [vmem:[%s3018] sm:$0xff]
    %v3020 = vld [vmem:[%s3018 + $0x8] sm:$0xff]
    %v3021 = vld [vmem:[%s3018 + $0x10] sm:$0xff]
    %v3022 = vld [vmem:[%s3018 + $0x18] sm:$0xff]
    %s3023 = scalar_lea.vmem %s69, 3
    %v3024 = vld [vmem:[%s3023] sm:$0x1]
    %v3026 = vperm.slane %v3024, 0
    %3028 = vmatpush.msra.mxu0 0.0
    %3029 = vmatpush.msra.mxu0 0.0
    %3030 = vmatpush.msra.mxu0 0.0
    %3031 = vmatpush.msra.mxu0 0.0
    %3032 = vmatpush.msra.mxu0 0.0
    %3033 = vmatpush.msra.mxu0 0.0
    %3034 = vmatpush.msra.mxu0 0.0
    %3035 = vmatpush.msra.mxu0 0.0
    %3036 = vmatpush.msra.mxu0 0.0
    %3037 = vmatpush.msra.mxu0 0.0
    %3038 = vmatpush.msra.mxu0 0.0
    %3039 = vmatpush.msra.mxu0 0.0
    %3040 = vmatpush.msra.mxu0 %v3022
    %3041 = vmatpush.msra.mxu0 %v3021
    %3042 = vmatpush.msra.mxu0 %v3020
    %3043 = vmatpush.msra.mxu0 %v3019
    %3044 = vmatmul.f32.gmra.mxu0 %v2085
    %v3045 = vpop.f32.mrf.mxu0
    %v3046 = vadd.f32 %v3026, %v3045
    %3047 = vmatmul.f32.gmra.mxu0 %v2088
    %v3048 = vpop.f32.mrf.mxu0
    %v3049 = vadd.f32 %v3026, %v3048
    %3050 = vmatmul.f32.gmra.mxu0 %v2091
    %v3051 = vpop.f32.mrf.mxu0
    %v3052 = vadd.f32 %v3026, %v3051
    %3053 = vmatmul.f32.gmra.mxu0 %v2094
    %v3054 = vpop.f32.mrf.mxu0
    %v3055 = vadd.f32 %v3026, %v3054
    %3056 = vdwg.mxu0
    %s3057 = scalar_lea.vmem %s71, 96
    %v3058 = vld [vmem:[%s3057] sm:$0xff]
    %v3059 = vld [vmem:[%s3057 + $0x8] sm:$0xff]
    %v3060 = vld [vmem:[%s3057 + $0x10] sm:$0xff]
    %v3061 = vld [vmem:[%s3057 + $0x18] sm:$0xff]
    %s3062 = scalar_lea.vmem %s73, 3
    %v3063 = vld [vmem:[%s3062] sm:$0x1]
    %v3065 = vperm.slane %v3063, 0
    %3067 = vmatpush.msra.mxu0 0.0
    %3068 = vmatpush.msra.mxu0 0.0
    %3069 = vmatpush.msra.mxu0 0.0
    %3070 = vmatpush.msra.mxu0 0.0
    %3071 = vmatpush.msra.mxu0 0.0
    %3072 = vmatpush.msra.mxu0 0.0
    %3073 = vmatpush.msra.mxu0 0.0
    %3074 = vmatpush.msra.mxu0 0.0
    %3075 = vmatpush.msra.mxu0 0.0
    %3076 = vmatpush.msra.mxu0 0.0
    %3077 = vmatpush.msra.mxu0 0.0
    %3078 = vmatpush.msra.mxu0 0.0
    %3079 = vmatpush.msra.mxu0 %v3061
    %3080 = vmatpush.msra.mxu0 %v3060
    %3081 = vmatpush.msra.mxu0 %v3059
    %3082 = vmatpush.msra.mxu0 %v3058
    %3083 = vmatmul.f32.gmra.mxu0 %v2085
    %v3084 = vpop.f32.mrf.mxu0
    %v3085 = vadd.f32 %v3065, %v3084
    %3086 = vmatmul.f32.gmra.mxu0 %v2088
    %v3087 = vpop.f32.mrf.mxu0
    %v3088 = vadd.f32 %v3065, %v3087
    %3089 = vmatmul.f32.gmra.mxu0 %v2091
    %v3090 = vpop.f32.mrf.mxu0
    %v3091 = vadd.f32 %v3065, %v3090
    %3092 = vmatmul.f32.gmra.mxu0 %v2094
    %v3093 = vpop.f32.mrf.mxu0
    %v3094 = vadd.f32 %v3065, %v3093
    %3095 = vdwg.mxu0
    %v3097 = vsel %vm675, %v3007, 0
    %v3100 = vsel %vm675, %v3010, 0
    %v3103 = vsel %vm675, %v3013, 0
    %v3106 = vsel %vm675, %v3016, 0
    %v3109 = vsel %vm675, %v3046, 0
    %v3112 = vsel %vm675, %v3049, 0
    %v3115 = vsel %vm675, %v3052, 0
    %v3118 = vsel %vm675, %v3055, 0
    %3120 = vmatpush.xpose.msra.mxu0 0.0
    %3121 = vmatpush.xpose.msra.mxu0 0.0
    %3122 = vmatpush.xpose.msra.mxu0 0.0
    %3123 = vmatpush.xpose.msra.mxu0 0.0
    %3124 = vmatpush.xpose.msra.mxu0 0.0
    %3125 = vmatpush.xpose.msra.mxu0 0.0
    %3126 = vmatpush.xpose.msra.mxu0 0.0
    %3127 = vmatpush.xpose.msra.mxu0 0.0
    %3128 = vmatpush.xpose.msra.mxu0 0.0
    %3129 = vmatpush.xpose.msra.mxu0 0.0
    %3130 = vmatpush.xpose.msra.mxu0 0.0
    %3131 = vmatpush.xpose.msra.mxu0 0.0
    %3132 = vmatpush.xpose.msra.mxu0 %v3118
    %3133 = vmatpush.xpose.msra.mxu0 %v3115
    %3134 = vmatpush.xpose.msra.mxu0 %v3112
    %3135 = vmatpush.xpose.msra.mxu0 %v3109
    %3136 = vmatmul.f32.gmra.mxu0 %v3097
    %v3137 = vpop.f32.mrf.mxu0
    %v3138 = vadd.f32 0.0, %v3137
    %3139 = vmatmul.f32.gmra.mxu0 %v3100
    %v3140 = vpop.f32.mrf.mxu0
    %v3141 = vadd.f32 0.0, %v3140
    %3142 = vmatmul.f32.gmra.mxu0 %v3103
    %v3143 = vpop.f32.mrf.mxu0
    %v3144 = vadd.f32 0.0, %v3143
    %3145 = vmatmul.f32.gmra.mxu0 %v3106
    %v3146 = vpop.f32.mrf.mxu0
    %v3147 = vadd.f32 0.0, %v3146
    %3148 = vdwg.mxu0
    %v3149 = vsel %vm384, %v3138, -inf
    %3150 = vmax.xlane.f32.xlu0 %v3149
    %v3151 = vpop.xlane.xlu0 %3150
    %v3152 = vsel %vm384, %v3141, -inf
    %3153 = vmax.xlane.f32.xlu0 %v3152
    %v3154 = vpop.xlane.xlu0 %3153
    %v3155 = vsel %vm384, %v3144, -inf
    %3156 = vmax.xlane.f32.xlu0 %v3155
    %v3157 = vpop.xlane.xlu0 %3156
    %v3158 = vsel %vm384, %v3147, -inf
    %3159 = vmax.xlane.f32.xlu0 %v3158
    %v3160 = vpop.xlane.xlu0 %3159
    %v3161 = vsub.f32 %v3138, %v3151
    %v3162 = vsub.f32 %v3141, %v3154
    %v3163 = vsub.f32 %v3144, %v3157
    %v3164 = vsub.f32 %v3147, %v3160
    %v3165 = vmul.f32 %v3161, 1.442695
    %v3166 = vpow.pop %v3165
    %v3167 = vmul.f32 %v3162, 1.442695
    %v3168 = vpow.pop %v3167
    %v3169 = vmul.f32 %v3163, 1.442695
    %v3170 = vpow.pop %v3169
    %v3171 = vmul.f32 %v3164, 1.442695
    %v3172 = vpow.pop %v3171
    %v3173 = vsel %vm384, %v3166, 0.0
    %3174 = vadd.xlane.f32.xlu0 %v3173
    %v3175 = vpop.xlane.xlu0 %3174
    %v3176 = vsel %vm384, %v3168, 0.0
    %3177 = vadd.xlane.f32.xlu0 %v3176
    %v3178 = vpop.xlane.xlu0 %3177
    %v3179 = vsel %vm384, %v3170, 0.0
    %3180 = vadd.xlane.f32.xlu0 %v3179
    %v3181 = vpop.xlane.xlu0 %3180
    %v3182 = vsel %vm384, %v3172, 0.0
    %3183 = vadd.xlane.f32.xlu0 %v3182
    %v3184 = vpop.xlane.xlu0 %3183
    %v3185 = vrcp.pop %v3175
    %v3186 = vrcp.pop %v3178
    %v3187 = vrcp.pop %v3181
    %v3188 = vrcp.pop %v3184
    %v3189 = vmul.f32 %v3166, %v3185
    %v3190 = vmul.f32 %v3168, %v3186
    %v3191 = vmul.f32 %v3170, %v3187
    %v3192 = vmul.f32 %v3172, %v3188
    %v3194 = vsel %vm384, %v3189, 0
    %v3197 = vsel %vm384, %v3190, 0
    %v3200 = vsel %vm384, %v3191, 0
    %v3203 = vsel %vm384, %v3192, 0
    %3205 = vmatpush.msra.mxu0 0.0
    %3206 = vmatpush.msra.mxu0 0.0
    %3207 = vmatpush.msra.mxu0 0.0
    %3208 = vmatpush.msra.mxu0 0.0
    %3209 = vmatpush.msra.mxu0 0.0
    %3210 = vmatpush.msra.mxu0 0.0
    %3211 = vmatpush.msra.mxu0 0.0
    %3212 = vmatpush.msra.mxu0 0.0
    %3213 = vmatpush.msra.mxu0 0.0
    %3214 = vmatpush.msra.mxu0 0.0
    %3215 = vmatpush.msra.mxu0 0.0
    %3216 = vmatpush.msra.mxu0 0.0
    %3217 = vmatpush.msra.mxu0 %v3094
    %3218 = vmatpush.msra.mxu0 %v3091
    %3219 = vmatpush.msra.mxu0 %v3088
    %3220 = vmatpush.msra.mxu0 %v3085
    %3221 = vmatmul.f32.gmra.mxu0 %v3194
    %v3222 = vpop.f32.mrf.mxu0
    %v3223 = vadd.f32 0.0, %v3222
    %3224 = vmatmul.f32.gmra.mxu0 %v3197
    %v3225 = vpop.f32.mrf.mxu0
    %v3226 = vadd.f32 0.0, %v3225
    %3227 = vmatmul.f32.gmra.mxu0 %v3200
    %v3228 = vpop.f32.mrf.mxu0
    %v3229 = vadd.f32 0.0, %v3228
    %3230 = vmatmul.f32.gmra.mxu0 %v3203
    %v3231 = vpop.f32.mrf.mxu0
    %v3232 = vadd.f32 0.0, %v3231
    %3233 = vdwg.mxu0
    %s3234 = scalar_lea.vmem %s75, 24
    %v3235 = vld [vmem:[%s3234] sm:$0xff]
    %v3237 = vsel %vm675, %v3223, 0
    %v3240 = vsel %vm675, %v3226, 0
    %v3243 = vsel %vm675, %v3229, 0
    %v3246 = vsel %vm675, %v3232, 0
    %3248 = vmatpush.msra.mxu0 0.0
    %3249 = vmatpush.msra.mxu0 0.0
    %3250 = vmatpush.msra.mxu0 0.0
    %3251 = vmatpush.msra.mxu0 0.0
    %3252 = vmatpush.msra.mxu0 0.0
    %3253 = vmatpush.msra.mxu0 0.0
    %3254 = vmatpush.msra.mxu0 0.0
    %3255 = vmatpush.msra.mxu0 0.0
    %3256 = vmatpush.msra.mxu0 0.0
    %3257 = vmatpush.msra.mxu0 0.0
    %3258 = vmatpush.msra.mxu0 0.0
    %3259 = vmatpush.msra.mxu0 0.0
    %3260 = vmatpush.msra.mxu0 0.0
    %3261 = vmatpush.msra.mxu0 0.0
    %3262 = vmatpush.msra.mxu0 0.0
    %3263 = vmatpush.msra.mxu0 %v3235
    %3264 = vmatmul.f32.gmra.mxu0 %v3237
    %v3265 = vpop.f32.mrf.mxu0
    %v3266 = vadd.f32 0.0, %v3265
    %3267 = vmatmul.f32.gmra.mxu0 %v3240
    %v3268 = vpop.f32.mrf.mxu0
    %v3269 = vadd.f32 0.0, %v3268
    %3270 = vmatmul.f32.gmra.mxu0 %v3243
    %v3271 = vpop.f32.mrf.mxu0
    %v3272 = vadd.f32 0.0, %v3271
    %3273 = vmatmul.f32.gmra.mxu0 %v3246
    %v3274 = vpop.f32.mrf.mxu0
    %v3275 = vadd.f32 0.0, %v3274
    %3276 = vdwg.mxu0
    %v3277 = vadd.f32 %v2975, %v3266
    %v3278 = vadd.f32 %v2976, %v3269
    %v3279 = vadd.f32 %v2977, %v3272
    %v3280 = vadd.f32 %v2978, %v3275
    %v3281 = vld [vmem:[%s77] sm:$0x1]
    %v3283 = vperm.slane %v3281, 0
    %v3285 = vadd.f32 %v3277, %v3283
    %v3286 = vadd.f32 %v3278, %v3283
    %v3287 = vadd.f32 %v3279, %v3283
    %v3288 = vadd.f32 %v3280, %v3283
    %v3289 = vadd.f32 %v3285, %v1917
    %v3290 = vadd.f32 %v3286, %v1918
    %v3291 = vadd.f32 %v3287, %v1919
    %v3292 = vadd.f32 %v3288, %v1920
    %v3293 = vld [vmem:[#allocation2] sm:$0x1]
    %v3295 = vperm.slane %v3293, 0
    %v3297 = vmul.f32 %v3289, %v3295
    %v3298 = vmul.f32 %v3290, %v3295
    %v3299 = vmul.f32 %v3291, %v3295
    %v3300 = vmul.f32 %v3292, %v3295
    %v3301 = vld [vmem:[#allocation5] sm:$0x1]
    %v3303 = vperm.slane %v3301, 0
    %v3305 = vadd.f32 %v3297, %v3303
    %v3306 = vadd.f32 %v3298, %v3303
    %v3307 = vadd.f32 %v3299, %v3303
    %v3308 = vadd.f32 %v3300, %v3303
    %v3309 = vadd.f32 %v2072, %v3305
    %v3310 = vadd.f32 %v2073, %v3306
    %v3311 = vadd.f32 %v2074, %v3307
    %v3312 = vadd.f32 %v2075, %v3308
    %v3313 = vld [vmem:[%s79] sm:$0xff]
    %v3314 = vld [vmem:[%s79 + $0x8] sm:$0xff]
    %v3315 = vld [vmem:[%s79 + $0x10] sm:$0xff]
    %v3316 = vld [vmem:[%s79 + $0x18] sm:$0xff]
    %v3317 = vld [vmem:[%s81] sm:$0x1]
    %v3319 = vperm.slane %v3317, 0
    %v3322 = vsel %vm384, %v3309, 0
    %v3325 = vsel %vm384, %v3310, 0
    %v3328 = vsel %vm384, %v3311, 0
    %v3331 = vsel %vm384, %v3312, 0
    %3333 = vmatpush.msra.mxu0 0.0
    %3334 = vmatpush.msra.mxu0 0.0
    %3335 = vmatpush.msra.mxu0 0.0
    %3336 = vmatpush.msra.mxu0 0.0
    %3337 = vmatpush.msra.mxu0 0.0
    %3338 = vmatpush.msra.mxu0 0.0
    %3339 = vmatpush.msra.mxu0 0.0
    %3340 = vmatpush.msra.mxu0 0.0
    %3341 = vmatpush.msra.mxu0 0.0
    %3342 = vmatpush.msra.mxu0 0.0
    %3343 = vmatpush.msra.mxu0 0.0
    %3344 = vmatpush.msra.mxu0 0.0
    %3345 = vmatpush.msra.mxu0 %v3316
    %3346 = vmatpush.msra.mxu0 %v3315
    %3347 = vmatpush.msra.mxu0 %v3314
    %3348 = vmatpush.msra.mxu0 %v3313
    %3349 = vmatmul.f32.gmra.mxu0 %v3322
    %v3350 = vpop.f32.mrf.mxu0
    %v3351 = vadd.f32 %v3319, %v3350
    %3352 = vmatmul.f32.gmra.mxu0 %v3325
    %v3353 = vpop.f32.mrf.mxu0
    %v3354 = vadd.f32 %v3319, %v3353
    %3355 = vmatmul.f32.gmra.mxu0 %v3328
    %v3356 = vpop.f32.mrf.mxu0
    %v3357 = vadd.f32 %v3319, %v3356
    %3358 = vmatmul.f32.gmra.mxu0 %v3331
    %v3359 = vpop.f32.mrf.mxu0
    %v3360 = vadd.f32 %v3319, %v3359
    %3361 = vdwg.mxu0
    %v3362 = vmax.f32 %v3351, 0.0
    %v3363 = vmax.f32 %v3354, 0.0
    %v3364 = vmax.f32 %v3357, 0.0
    %v3365 = vmax.f32 %v3360, 0.0
    %v3366 = vld [vmem:[%s83] sm:$0xff]
    %v3367 = vld [vmem:[%s83 + $0x8] sm:$0xff]
    %v3368 = vld [vmem:[%s83 + $0x10] sm:$0xff]
    %v3369 = vld [vmem:[%s83 + $0x18] sm:$0xff]
    %v3370 = vld [vmem:[%s83 + $0x20] sm:$0xff]
    %v3371 = vld [vmem:[%s83 + $0x28] sm:$0xff]
    %v3372 = vld [vmem:[%s83 + $0x30] sm:$0xff]
    %v3373 = vld [vmem:[%s83 + $0x38] sm:$0xff]
    %v3374 = vld [vmem:[%s85] sm:$0x1]
    %v3376 = vperm.slane %v3374, 0
    %v3379 = vsel %vm1855, %v3362, 0
    %v3382 = vsel %vm1855, %v3363, 0
    %v3385 = vsel %vm1855, %v3364, 0
    %v3388 = vsel %vm1855, %v3365, 0
    %3390 = vmatpush.msra.mxu0 0.0
    %3391 = vmatpush.msra.mxu0 0.0
    %3392 = vmatpush.msra.mxu0 0.0
    %3393 = vmatpush.msra.mxu0 0.0
    %3394 = vmatpush.msra.mxu0 0.0
    %3395 = vmatpush.msra.mxu0 0.0
    %3396 = vmatpush.msra.mxu0 0.0
    %3397 = vmatpush.msra.mxu0 0.0
    %3398 = vmatpush.msra.mxu0 %v3373
    %3399 = vmatpush.msra.mxu0 %v3372
    %3400 = vmatpush.msra.mxu0 %v3371
    %3401 = vmatpush.msra.mxu0 %v3370
    %3402 = vmatpush.msra.mxu0 %v3369
    %3403 = vmatpush.msra.mxu0 %v3368
    %3404 = vmatpush.msra.mxu0 %v3367
    %3405 = vmatpush.msra.mxu0 %v3366
    %3406 = vmatmul.f32.gmra.mxu0 %v3379
    %v3407 = vpop.f32.mrf.mxu0
    %v3408 = vadd.f32 %v3376, %v3407
    %3409 = vmatmul.f32.gmra.mxu0 %v3382
    %v3410 = vpop.f32.mrf.mxu0
    %v3411 = vadd.f32 %v3376, %v3410
    %3412 = vmatmul.f32.gmra.mxu0 %v3385
    %v3413 = vpop.f32.mrf.mxu0
    %v3414 = vadd.f32 %v3376, %v3413
    %3415 = vmatmul.f32.gmra.mxu0 %v3388
    %v3416 = vpop.f32.mrf.mxu0
    %v3417 = vadd.f32 %v3376, %v3416
    %3418 = vdwg.mxu0
    %v3419 = vadd.f32 %v3309, %v3408
    %v3420 = vadd.f32 %v3310, %v3411
    %v3421 = vadd.f32 %v3311, %v3414
    %v3422 = vadd.f32 %v3312, %v3417
    %v3423 = vld [vmem:[#allocation7] sm:$0x1]
    %v3425 = vperm.slane %v3423, 0
    %v3427 = vmul.f32 %v3419, %v3425
    %v3428 = vmul.f32 %v3420, %v3425
    %v3429 = vmul.f32 %v3421, %v3425
    %v3430 = vmul.f32 %v3422, %v3425
    %v3431 = vld [vmem:[#allocation8] sm:$0x1]
    %v3433 = vperm.slane %v3431, 0
    %v3435 = vadd.f32 %v3427, %v3433
    %v3436 = vadd.f32 %v3428, %v3433
    %v3437 = vadd.f32 %v3429, %v3433
    %v3438 = vadd.f32 %v3430, %v3433
    %v3439 = vmax.f32 %v3435, 0.0
    %v3440 = vmax.f32 %v3436, 0.0
    %v3441 = vmax.f32 %v3437, 0.0
    %v3442 = vmax.f32 %v3438, 0.0
    %v3443 = vld [vmem:[%s5] sm:$0x3]
    %v3445 = vsel %vm384, %v3443, 0
    %3447 = vmatpush.msra.mxu0 0.0
    %3448 = vmatpush.msra.mxu0 0.0
    %3449 = vmatpush.msra.mxu0 0.0
    %3450 = vmatpush.msra.mxu0 0.0
    %3451 = vmatpush.msra.mxu0 0.0
    %3452 = vmatpush.msra.mxu0 0.0
    %3453 = vmatpush.msra.mxu0 0.0
    %3454 = vmatpush.msra.mxu0 0.0
    %3455 = vmatpush.msra.mxu0 0.0
    %3456 = vmatpush.msra.mxu0 0.0
    %3457 = vmatpush.msra.mxu0 0.0
    %3458 = vmatpush.msra.mxu0 0.0
    %3459 = vmatpush.msra.mxu0 %v3442
    %3460 = vmatpush.msra.mxu0 %v3441
    %3461 = vmatpush.msra.mxu0 %v3440
    %3462 = vmatpush.msra.mxu0 %v3439
    %3463 = vmatmul.f32.gmra.mxu0 %v3445
    %v3464 = vpop.f32.mrf.mxu0
    %v3465 = vadd.f32 0.0, %v3464
    %3466 = vdwg.mxu0
    %v3467 = vld [vmem:[%s99] sm:$0xff]
    %v3468 = vld [vmem:[%s99 + $0x8] sm:$0xff]
    %v3469 = vld [vmem:[%s99 + $0x10] sm:$0xff]
    %v3470 = vld [vmem:[%s99 + $0x18] sm:$0xff]
    %v3471 = vld [vmem:[#allocation10] sm:$0x1]
    %v3473 = vperm.slane %v3471, 0
    %v3476 = vsel %vm384, %v3465, 0
    %3478 = vmatpush.msra.mxu0 0.0
    %3479 = vmatpush.msra.mxu0 0.0
    %3480 = vmatpush.msra.mxu0 0.0
    %3481 = vmatpush.msra.mxu0 0.0
    %3482 = vmatpush.msra.mxu0 0.0
    %3483 = vmatpush.msra.mxu0 0.0
    %3484 = vmatpush.msra.mxu0 0.0
    %3485 = vmatpush.msra.mxu0 0.0
    %3486 = vmatpush.msra.mxu0 0.0
    %3487 = vmatpush.msra.mxu0 0.0
    %3488 = vmatpush.msra.mxu0 0.0
    %3489 = vmatpush.msra.mxu0 0.0
    %3490 = vmatpush.msra.mxu0 %v3470
    %3491 = vmatpush.msra.mxu0 %v3469
    %3492 = vmatpush.msra.mxu0 %v3468
    %3493 = vmatpush.msra.mxu0 %v3467
    %3494 = vmatmul.f32.gmra.mxu0 %v3476
    %v3495 = vpop.f32.mrf.mxu0
    %v3496 = vadd.f32 %v3473, %v3495
    %3497 = vdwg.mxu0
    %v3498 = vmax.f32 %v3496, 0.0
    %v3499 = vld [vmem:[%s103] sm:$0xff]
    %v3500 = vld [vmem:[%s103 + $0x8] sm:$0xff]
    %v3501 = vld [vmem:[%s103 + $0x10] sm:$0xff]
    %v3502 = vld [vmem:[%s103 + $0x18] sm:$0xff]
    %v3503 = vld [vmem:[#allocation11] sm:$0x1]
    %v3505 = vperm.slane %v3503, 0
    %v3508 = vsel %vm384, %v3498, 0
    %3510 = vmatpush.msra.mxu0 0.0
    %3511 = vmatpush.msra.mxu0 0.0
    %3512 = vmatpush.msra.mxu0 0.0
    %3513 = vmatpush.msra.mxu0 0.0
    %3514 = vmatpush.msra.mxu0 0.0
    %3515 = vmatpush.msra.mxu0 0.0
    %3516 = vmatpush.msra.mxu0 0.0
    %3517 = vmatpush.msra.mxu0 0.0
    %3518 = vmatpush.msra.mxu0 0.0
    %3519 = vmatpush.msra.mxu0 0.0
    %3520 = vmatpush.msra.mxu0 0.0
    %3521 = vmatpush.msra.mxu0 0.0
    %3522 = vmatpush.msra.mxu0 %v3502
    %3523 = vmatpush.msra.mxu0 %v3501
    %3524 = vmatpush.msra.mxu0 %v3500
    %3525 = vmatpush.msra.mxu0 %v3499
    %3526 = vmatmul.f32.gmra.mxu0 %v3508
    %v3527 = vpop.f32.mrf.mxu0
    %v3528 = vadd.f32 %v3505, %v3527
    %3529 = vdwg.mxu0
    %v3530 = vmax.f32 %v3528, 0.0
    %v3531 = vld [vmem:[%s107] sm:$0xff]
    %v3532 = vld [vmem:[%s107 + $0x8] sm:$0xff]
    %v3533 = vld [vmem:[%s107 + $0x10] sm:$0xff]
    %v3534 = vld [vmem:[%s107 + $0x18] sm:$0xff]
    %v3535 = vld [vmem:[#allocation13] sm:$0x1]
    %v3537 = vperm.slane %v3535, 0
    %v3540 = vsel %vm384, %v3530, 0
    %3542 = vmatpush.msra.mxu0 0.0
    %3543 = vmatpush.msra.mxu0 0.0
    %3544 = vmatpush.msra.mxu0 0.0
    %3545 = vmatpush.msra.mxu0 0.0
    %3546 = vmatpush.msra.mxu0 0.0
    %3547 = vmatpush.msra.mxu0 0.0
    %3548 = vmatpush.msra.mxu0 0.0
    %3549 = vmatpush.msra.mxu0 0.0
    %3550 = vmatpush.msra.mxu0 0.0
    %3551 = vmatpush.msra.mxu0 0.0
    %3552 = vmatpush.msra.mxu0 0.0
    %3553 = vmatpush.msra.mxu0 0.0
    %3554 = vmatpush.msra.mxu0 %v3534
    %3555 = vmatpush.msra.mxu0 %v3533
    %3556 = vmatpush.msra.mxu0 %v3532
    %3557 = vmatpush.msra.mxu0 %v3531
    %3558 = vmatmul.f32.gmra.mxu0 %v3540
    %v3559 = vpop.f32.mrf.mxu0
    %v3560 = vadd.f32 %v3537, %v3559
    %3561 = vdwg.mxu0
    %vm3562 = vcmask 58368
    %3563 = vst.msk [vmem:[#allocation14] sm:$0x3] %vm3562, %v3560
    // Predicated region
    $region250: #{graph_gps_forward.1} parent=1 // pred_check
      _
    $region251: #{graph_gps_forward.1} parent=1 // pred_check_branch
      %3565 = sbr.rel (0) target = $region253
    $region252: #{graph_gps_forward.1} parent=1 // pred_region
      %3567 = vsyncadd [#allocation4], 0
      %s3569 = sshll.u32 [#allocation14], 4
      %s3570 = int_to_ptr.vmem [resolvable:$true] %s3569
      %s3571 = sshll.u32 %s111, 4
      %s3572 = int_to_ptr.hbm [resolvable:$true] %s3571
      %3574 = dma.vmem_to_hbm [thread:$0]  %s3570, 32, %s3572, [#allocation4]
    $region253: #{graph_gps_forward.1} parent=1 // pred_fallthru
      _
    // Predicated region
    $region254: #{graph_gps_forward.1} parent=1 // pred_check
      _
    $region255: #{graph_gps_forward.1} parent=1 // pred_check_branch
      %3576 = sbr.rel (0) target = $region257
    $region256: #{graph_gps_forward.1} parent=1 // pred_region
      %3578 = dma.done [#allocation4], 32
    $region257: #{graph_gps_forward.1} parent=1 // pred_fallthru
      _
    %3579 = vsyncpa [#allocation3], 1
    %3580 = vsyncpa [#allocation6], 1
    %3581 = vsyncpa [#allocation9], 1
    %3582 = vsyncpa [#allocation12], 1
    %3583 = vsyncpa [#allocation4], 1

</llo_original>
